<compile_context>
chip_gen: v7x
topology: tpu7x:2x2x1
jax: 0.10.0
libtpu: 0.0.40
codegen_flags: <defaults>
</compile_context>

<pallas_src>
import functools

import jax
import jax.numpy as jnp
import numpy as np
from jax.experimental import pallas as pl
from jax.experimental.pallas import tpu as pltpu


def _round_up(x, m):
    return ((x + m - 1) // m) * m


def _pad_to(x, shape):
    pads = [(0, t - s) for s, t in zip(x.shape, shape)]
    if all(p == (0, 0) for p in pads):
        return x
    return jnp.pad(x, pads)


def _prep(x, shape, dtype):
    """Pad/cast only when needed — aligned bf16 inputs pay zero extra HBM traffic."""
    x = _pad_to(x, shape)
    return x if x.dtype == dtype else x.astype(dtype)


def _largest_divisor(m, cap):
    cap = max(1, min(m, cap))
    best = 1
    for d in range(1, cap + 1):
        if m % d == 0:
            best = d
    return best


def _choose_tiles(n_nodes, tile_n_max, tile_k_max):
    """Pick (n_pad, tile_n, tile_k).

    The node axis is padded to a multiple of 128 only; a small search over extra
    128-paddings finds an n_pad whose divisors admit large rectangular tiles for
    both adj axes (avoids rounding N up to the tile in both dimensions)."""
    base = pl.cdiv(n_nodes, 128)
    best = None
    for m in range(base, base + 8):
        tn = _largest_divisor(m, tile_n_max // 128)
        tk = _largest_divisor(m, tile_k_max // 128)
        steps = (m // tn) * (m // tk)
        # padded adj work (in 128x128 tiles) + mild penalty for per-step overhead
        cost = m * m + 4 * steps
        if best is None or cost < best[0]:
            best = (cost, m * 128, tn * 128, tk * 128)
    return best[1], best[2], best[3]


def _vmem_limit_bytes():
    """Generation-aware scoped-VMEM limit (v5e/v6e: 128 MiB physical, v7x: 64 MiB);
    leaves ~24 MiB of headroom for Mosaic internals and pipeline buffers."""
    cap = 128 * 1024 * 1024
    try:
        cap = int(getattr(pltpu.get_tpu_info(), "vmem_capacity_bytes", cap))
    except Exception:
        pass
    return max(32 * 1024 * 1024, min(cap - 24 * 1024 * 1024, 100 * 1024 * 1024))


def _vmem_estimate(n_p, tile_n, tile_k, n_in_p, n_h_p, dsize):
    adj_bufs = 3 * tile_n * tile_k * dsize            # pl.Buffered(3)
    seq_bufs = 2 * 2 * tile_k * n_in_p * dsize        # two inputs, double-buffered
    w_bufs = 2 * n_in_p * n_h_p * dsize
    dw_bufs = 2 * n_h_p * n_h_p * dsize
    gb_bufs = 2 * 2 * n_h_p * 4
    out_bufs = 2 * 2 * n_p * 4
    fts = tile_k * 2 * n_h_p * dsize                  # fts scratch for the k-slice
    hacc = n_p * 2 * n_h_p * 4                        # persistent h = [h1 | h2]
    return (adj_bufs + seq_bufs + w_bufs + dw_bufs + gb_bufs + out_bufs
            + fts + hacc + n_h_p * 4)


def gmim_kernel(seq1_ref, seq2_ref, adj_ref, w_ref, gb2_ref, alpha_ref,
                dw_ref, db_ref, out_ref, fts_ref, hacc_ref, sum_ref,
                *, n_h, n_nodes, tile_n):
    """Fused GCN(x2) + AvgReadout + sigmoid + bilinear discriminator.

    Grid = (B, num_k, num_i): k is the adjacency contraction axis, i (innermost) is
    the output node-tile axis.  adj (tile_n, tile_k) blocks stream every step; the
    fused fts slice is (re)computed once per k at i==0; h accumulates in a
    persistent VMEM scratch so adj and seq are read from HBM exactly once per batch
    row.  The discriminator epilogue runs on the very last (k, i) step.
    """
    k = pl.program_id(1)
    i = pl.program_id(2)
    num_k = pl.num_programs(1)
    num_i = pl.num_programs(2)

    # ---- start of a new batch element: reset the readout accumulator --------
    @pl.when(jnp.logical_and(k == 0, i == 0))
    def _():
        sum_ref[...] = jnp.zeros_like(sum_ref)

    # ---- once per k-slice: fts_k = [x1_k @ W | x2_k @ W] (fused branches) ----
    @pl.when(i == 0)
    def _():
        w = w_ref[...]
        f1 = jnp.dot(seq1_ref[0], w, preferred_element_type=jnp.float32)
        f2 = jnp.dot(seq2_ref[0], w, preferred_element_type=jnp.float32)
        fts_ref[:, 0:n_h] = f1.astype(fts_ref.dtype)
        fts_ref[:, n_h:2 * n_h] = f2.astype(fts_ref.dtype)

    # ---- main MXU work: accumulate adj_tile @ fts_k into persistent h -------
    row0 = pl.multiple_of(i * tile_n, tile_n)
    contrib = jnp.dot(adj_ref[0], fts_ref[...],
                      preferred_element_type=jnp.float32)        # (tile_n, 2*n_h)

    @pl.when(k == 0)
    def _():
        hacc_ref[pl.ds(row0, tile_n), :] = contrib

    @pl.when(k > 0)
    def _():
        hacc_ref[pl.ds(row0, tile_n), :] += contrib

    # ---- last k-slice: GCN bias + PReLU, accumulate masked readout sum ------
    @pl.when(k == num_k - 1)
    def _():
        alpha = alpha_ref[0]
        h = hacc_ref[pl.ds(row0, tile_n), :] + gb2_ref[...]
        h = jnp.where(h > 0, h, alpha * h)          # PReLU (single shared slope)
        hacc_ref[pl.ds(row0, tile_n), :] = h
        rows = row0 + jax.lax.broadcasted_iota(jnp.int32, (tile_n, 1), 0)
        h1 = jnp.where(rows < n_nodes, h[:, 0:n_h], 0.0)   # drop padded rows
        sum_ref[...] += jnp.sum(h1, axis=0, keepdims=True)

    # ---- very last tile: readout -> sigmoid -> bilinear discriminator -------
    @pl.when(jnp.logical_and(k == num_k - 1, i == num_i - 1))
    def _():
        c = jax.nn.sigmoid(sum_ref[...] * (1.0 / float(n_nodes)))        # (1, n_h)
        dw = dw_ref[...].astype(jnp.float32)
        # u[h] = sum_g Wd[h, g] * c[g], produced along sublanes directly so no
        # transpose of hacc is ever needed:  (n_h, n_h) x (1, n_h)^T -> (n_h, 1)
        u_col = jax.lax.dot_general(dw, c, (((1,), (1,)), ((), ())),
                                    preferred_element_type=jnp.float32)  # (n_h, 1)
        u2 = jnp.concatenate([u_col, u_col], axis=0)                      # (2n_h, 1)
        # Selector matrix: column 0 picks the h1 half of u, column 1 the h2 half.
        row_id = jax.lax.broadcasted_iota(jnp.int32, (2 * n_h, 128), 0)
        col_id = jax.lax.broadcasted_iota(jnp.int32, (2 * n_h, 128), 1)
        sel = col_id == jnp.where(row_id < n_h, 0, 1)
        u_mat = jnp.where(sel, jnp.broadcast_to(u2, (2 * n_h, 128)), 0.0)
        # Single MXU-friendly matmul: (N_pad, 2*n_h) @ (2*n_h, 128); cols 0/1 are
        # sc1/sc2.  Then a 128-wide relayout feeds the lane-dense (2, N_pad) store.
        r = jnp.dot(hacc_ref[...], u_mat, preferred_element_type=jnp.float32)
        rt = jnp.transpose(r)                                             # (128, N_p)
        out_ref[0, :, :] = rt[0:2, :] + db_ref[0]


def gmim_forward(seq1, seq2, adj, w, gcn_bias, prelu_alpha, disc_w, disc_b,
                 *, tile_n_max=512, tile_k_max=2048, matmul_dtype=jnp.bfloat16):
    """GMIM forward (sparse=False, msk/samp_bias=None).  Returns (B, 2N) logits."""
    B, N, n_in = seq1.shape
    n_h = w.shape[1]
    n_in_p = _round_up(n_in, 128)
    n_h_p = _round_up(n_h, 128)
    dsize = jnp.dtype(matmul_dtype).itemsize

    vmem_limit = _vmem_limit_bytes()
    tn_max = max(128, int(tile_n_max))
    tk_max = max(128, int(tile_k_max))
    for _ in range(8):
        n_p, tile_n, tile_k = _choose_tiles(N, tn_max, tk_max)
        est = _vmem_estimate(n_p, tile_n, tile_k, n_in_p, n_h_p, dsize)
        if est <= int(0.85 * vmem_limit) or (tn_max == 128 and tk_max == 128):
            break
        if tk_max > 256:
            tk_max //= 2
        elif tn_max > 128:
            tn_max //= 2
        else:
            tk_max = 128
    if est > vmem_limit:
        # TODO(synk): 2-kernel (node-parallel GCN + tiny epilogue) split for very
        # large N*n_h / small-B v7x; the persistent h scratch no longer fits here.
        raise ValueError(
            f"GMIM kernel needs ~{est >> 20} MiB VMEM > limit {vmem_limit >> 20} MiB; "
            "reduce N/n_h or use the 2-kernel split (see TODO).")

    num_k = n_p // tile_k
    num_i = n_p // tile_n

    f32 = jnp.float32
    # Pads are zero-filled (required: padded W / bias / disc_w regions must be 0).
    seq1p = _prep(seq1, (B, n_p, n_in_p), matmul_dtype)
    seq2p = _prep(seq2, (B, n_p, n_in_p), matmul_dtype)
    adjp = _prep(adj, (B, n_p, n_p), matmul_dtype)
    wp = _prep(w, (n_in_p, n_h_p), matmul_dtype)
    gbp = _pad_to(jnp.asarray(gcn_bias, f32).reshape(1, n_h), (1, n_h_p))
    gb2 = jnp.concatenate([gbp, gbp], axis=1)                     # (1, 2*n_h_p)
    dwp = _prep(disc_w, (n_h_p, n_h_p), matmul_dtype)
    alpha = jnp.asarray(prelu_alpha, f32).reshape(-1)[:1]
    db = jnp.asarray(disc_b, f32).reshape(-1)[:1]

    kernel = functools.partial(gmim_kernel, n_h=n_h_p, n_nodes=N, tile_n=tile_n)

    cost = pl.CostEstimate(
        flops=int(B * (4 * n_p * n_in_p * n_h_p          # seq @ W (both branches)
                       + 4 * n_p * n_p * n_h_p           # adj @ [fts1 | fts2]
                       + 4 * n_p * n_h_p + 2 * n_h_p * n_h_p)),
        transcendentals=int(B * n_h_p),
        bytes_accessed=int(B * (n_p * n_p + 2 * n_p * n_in_p) * dsize
                           + (n_in_p * n_h_p + n_h_p * n_h_p) * dsize
                           + B * 2 * n_p * 4))

    # Triple-buffer the adj stream (the only block whose index changes every step)
    # when there is actually something to smooth over.
    adj_kwargs = {}
    if num_k * num_i >= 3:
        adj_kwargs["pipeline_mode"] = pl.Buffered(3)
    adj_spec = pl.BlockSpec((1, tile_n, tile_k), lambda b, k, i: (b, i, k),
                            **adj_kwargs)

    out = pl.pallas_call(
        kernel,
        out_shape=jax.ShapeDtypeStruct((B, 2, n_p), jnp.float32),
        grid=(B, num_k, num_i),
        in_specs=[
            pl.BlockSpec((1, tile_k, n_in_p), lambda b, k, i: (b, k, 0)),   # seq1
            pl.BlockSpec((1, tile_k, n_in_p), lambda b, k, i: (b, k, 0)),   # seq2
            adj_spec,                                                       # adj
            pl.BlockSpec((n_in_p, n_h_p), lambda b, k, i: (0, 0)),          # GCN W
            pl.BlockSpec((1, 2 * n_h_p), lambda b, k, i: (0, 0)),           # bias x2
            pl.BlockSpec(memory_space=pltpu.MemorySpace.SMEM),              # alpha
            pl.BlockSpec((n_h_p, n_h_p), lambda b, k, i: (0, 0)),           # bilinear W
            pl.BlockSpec(memory_space=pltpu.MemorySpace.SMEM),              # bilinear b
        ],
        out_specs=pl.BlockSpec((1, 2, n_p), lambda b, k, i: (b, 0, 0)),
        scratch_shapes=[
            pltpu.VMEM((tile_k, 2 * n_h_p), matmul_dtype),   # fts cache for k-slice
            pltpu.VMEM((n_p, 2 * n_h_p), jnp.float32),       # persistent h = [h1|h2]
            pltpu.VMEM((1, n_h_p), jnp.float32),             # readout sum of h1
        ],
        compiler_params=pltpu.CompilerParams(
            # b carries independent work; k/i carry accumulator state across steps,
            # so they must stay "arbitrary".  (v7x small-B split: see TODO above.)
            dimension_semantics=("parallel", "arbitrary", "arbitrary"),
            vmem_limit_bytes=int(vmem_limit)),
        cost_estimate=cost,
    )(seq1p, seq2p, adjp, wp, gb2, alpha, dwp, db)

    # (B, 2, N_pad) -> drop node padding -> (B, 2N) = [sc1 | sc2] (torch.cat dim=1)
    return out[:, :, :N].reshape(B, 2 * N)


def gmim_reference(seq1, seq2, adj, w, gcn_bias, prelu_alpha, disc_w, disc_b):
    """Pure-JAX reference (dense path, msk=None), mirroring the kernel's precision
    policy: operands as given (bf16 in the test), f32 math, fts staged at input dtype."""
    f32 = jnp.float32
    hi = jax.lax.Precision.HIGHEST
    x1, x2, a = seq1.astype(f32), seq2.astype(f32), adj.astype(f32)
    w32, dw32 = w.astype(f32), disc_w.astype(f32)
    stage_dt = seq1.dtype

    def gcn(x):
        fts = jnp.einsum('bnf,fh->bnh', x, w32, precision=hi)
        fts = fts.astype(stage_dt).astype(f32)       # matches the kernel's fts staging
        out = jnp.einsum('bnm,bmh->bnh', a, fts, precision=hi) + gcn_bias.astype(f32)
        return jnp.where(out > 0, out, prelu_alpha[0] * out)

    h1 = gcn(x1)
    h2 = gcn(x2)
    c = jax.nn.sigmoid(jnp.mean(h1, axis=1))                        # (B, n_h)
    u = jnp.einsum('bg,hg->bh', c, dw32, precision=hi)              # (B, n_h)
    sc1 = jnp.einsum('bnh,bh->bn', h1, u, precision=hi) + disc_b[0]
    sc2 = jnp.einsum('bnh,bh->bn', h2, u, precision=hi) + disc_b[0]
    return jnp.concatenate([sc1, sc2], axis=1)


if __name__ == "__main__":
    # Small but padding-exercising shapes (N 300 -> 384, n_in 72 -> 128, n_h 96 -> 128).
    B, N, n_in, n_h = 2, 300, 72, 96
    key = jax.random.PRNGKey(0)
    keys = jax.random.split(key, 7)

    seq1 = jax.random.normal(keys[0], (B, N, n_in), dtype=jnp.float32)
    perm = jax.random.permutation(keys[1], N)           # shuffled negatives
    seq2 = seq1[:, perm, :]
    a = jax.random.uniform(keys[2], (B, N, N), dtype=jnp.float32)
    adj = (a + jnp.swapaxes(a, 1, 2)) * 0.5 + jnp.eye(N)[None]
    adj = adj / jnp.sum(adj, axis=-1, keepdims=True)    # row-normalized, dense

    w = jax.random.normal(keys[3], (n_in, n_h), dtype=jnp.float32) / np.sqrt(n_in)
    gcn_bias = jax.random.normal(keys[4], (1, n_h), dtype=jnp.float32) * 0.1
    prelu_alpha = jnp.array([0.25], dtype=jnp.float32)  # nn.PReLU() default
    disc_w = jax.random.normal(keys[5], (n_h, n_h), dtype=jnp.float32) / np.sqrt(n_h)
    disc_b = jax.random.normal(keys[6], (1,), dtype=jnp.float32) * 0.1

    # Round matmul operands to bf16 once so kernel and reference see identical inputs
    # (the kernel uses bf16 MXU operands with f32 accumulation).
    bf = jnp.bfloat16
    seq1b, seq2b, adjb = seq1.astype(bf), seq2.astype(bf), adj.astype(bf)
    wb, dwb = w.astype(bf), disc_w.astype(bf)

    ref = gmim_reference(seq1b, seq2b, adjb, wb, gcn_bias, prelu_alpha, dwb, disc_b)

    # Default (large rectangular tiles -> single step per batch at this size).
    out = gmim_forward(seq1b, seq2b, adjb, wb, gcn_bias, prelu_alpha, dwb, disc_b)
    out = jax.block_until_ready(out)
    assert out.shape == (B, 2 * N)
    np.testing.assert_allclose(np.asarray(out), np.asarray(ref), rtol=2e-3, atol=2e-3)

    # Force small tiles to exercise the multi-tile k/i accumulation and the
    # Buffered(3) adj streaming path as well.
    out2 = gmim_forward(seq1b, seq2b, adjb, wb, gcn_bias, prelu_alpha, dwb, disc_b,
                        tile_n_max=128, tile_k_max=128)
    out2 = jax.block_until_ready(out2)
    np.testing.assert_allclose(np.asarray(out2), np.asarray(ref), rtol=2e-3, atol=2e-3)

    print("KERNEL_OK")
</pallas_src>

<mosaic_0001>
module attributes {stable_mosaic.version = 11 : i64} {
  func.func @gmim_kernel(%arg0: i32, %arg1: i32, %arg2: i32, %arg3: memref<1x384x128xbf16, #tpu.memory_space<vmem>>, %arg4: memref<1x384x128xbf16, #tpu.memory_space<vmem>>, %arg5: memref<1x384x384xbf16, #tpu.memory_space<vmem>>, %arg6: memref<128x128xbf16, #tpu.memory_space<vmem>>, %arg7: memref<1x256xf32, #tpu.memory_space<vmem>>, %arg8: memref<1xf32, #tpu.memory_space<smem>>, %arg9: memref<128x128xbf16, #tpu.memory_space<vmem>>, %arg10: memref<1xf32, #tpu.memory_space<smem>>, %arg11: memref<1x2x384xf32, #tpu.memory_space<vmem>>, %arg12: memref<384x256xbf16, #tpu.memory_space<vmem>>, %arg13: memref<384x256xf32, #tpu.memory_space<vmem>>, %arg14: memref<1x128xf32, #tpu.memory_space<vmem>>) attributes {dimension_semantics = [#tpu.dimension_semantics<parallel>, #tpu.dimension_semantics<arbitrary>, #tpu.dimension_semantics<arbitrary>], iteration_bounds = array<i64: 2, 1, 1>, scalar_prefetch = 0 : i64, scratch_operands = 3 : i64, tpu.core_type = #tpu.core_type<tc>, window_params = [{transform_indices = @transform_0, window_bounds = array<i64: 1, 384, 128>}, {transform_indices = @transform_1, window_bounds = array<i64: 1, 384, 128>}, {transform_indices = @transform_2, window_bounds = array<i64: 1, 384, 384>}, {pipeline_mode = #tpu.pipeline_mode<synchronous>, transform_indices = @transform_3, window_bounds = array<i64: 128, 128>}, {pipeline_mode = #tpu.pipeline_mode<synchronous>, transform_indices = @transform_4, window_bounds = array<i64: 1, 256>}, {transform_indices = @transform_5, window_bounds = array<i64: 1>}, {pipeline_mode = #tpu.pipeline_mode<synchronous>, transform_indices = @transform_6, window_bounds = array<i64: 128, 128>}, {transform_indices = @transform_7, window_bounds = array<i64: 1>}, {transform_indices = @transform_8, window_bounds = array<i64: 1, 2, 384>}]} {
    %c0_i32 = arith.constant 0 : i32
    %0 = arith.cmpi eq, %arg1, %c0_i32 : i32
    %c0_i32_0 = arith.constant 0 : i32
    %1 = arith.cmpi eq, %arg2, %c0_i32_0 : i32
    %2 = arith.andi %0, %1 : i1
    %3 = arith.extui %2 : i1 to i32
    %c0_i32_1 = arith.constant 0 : i32
    %4 = arith.cmpi ne, %3, %c0_i32_1 : i32
    scf.if %4 {
      %cst_17 = arith.constant 0.000000e+00 : f32
      %28 = vector.broadcast %cst_17 : f32 to vector<1x128xf32>
      %c0_18 = arith.constant 0 : index
      %c0_19 = arith.constant 0 : index
      %29 = vector.load %arg14[%c0_18, %c0_19] : memref<1x128xf32, #tpu.memory_space<vmem>>, vector<1x128xf32>
      tpu.vector_store %arg14[%c0_18, %c0_19], %28 {strides = array<i32>} : memref<1x128xf32, #tpu.memory_space<vmem>>, vector<1x128xf32>,
    } else {
    }
    %c0_i32_2 = arith.constant 0 : i32
    %5 = arith.cmpi eq, %arg2, %c0_i32_2 : i32
    %6 = arith.extui %5 : i1 to i32
    %c0_i32_3 = arith.constant 0 : i32
    %7 = arith.cmpi ne, %6, %c0_i32_3 : i32
    scf.if %7 {
      %c0_17 = arith.constant 0 : index
      %c0_18 = arith.constant 0 : index
      %28 = vector.load %arg6[%c0_17, %c0_18] : memref<128x128xbf16, #tpu.memory_space<vmem>>, vector<128x128xbf16>
      %c0_19 = arith.constant 0 : index
      %c0_20 = arith.constant 0 : index
      %c0_21 = arith.constant 0 : index
      %29 = vector.load %arg3[%c0_19, %c0_20, %c0_21] : memref<1x384x128xbf16, #tpu.memory_space<vmem>>, vector<1x384x128xbf16>
      %30 = vector.shape_cast %29 : vector<1x384x128xbf16> to vector<384x128xbf16>
      %cst_22 = arith.constant dense<0.000000e+00> : vector<384x128xf32>
      %31 = tpu.matmul %30, %28, %cst_22 {dimension_numbers = #tpu.dot_dimension_numbers<[1], [0], [0], [1], [0, 0, 1, 1], [], []>} : vector<384x128xbf16>, vector<128x128xbf16>, vector<384x128xf32> -> vector<384x128xf32>
      %c0_23 = arith.constant 0 : index
      %c0_24 = arith.constant 0 : index
      %c0_25 = arith.constant 0 : index
      %32 = vector.load %arg4[%c0_23, %c0_24, %c0_25] : memref<1x384x128xbf16, #tpu.memory_space<vmem>>, vector<1x384x128xbf16>
      %33 = vector.shape_cast %32 : vector<1x384x128xbf16> to vector<384x128xbf16>
      %cst_26 = arith.constant dense<0.000000e+00> : vector<384x128xf32>
      %34 = tpu.matmul %33, %28, %cst_26 {dimension_numbers = #tpu.dot_dimension_numbers<[1], [0], [0], [1], [0, 0, 1, 1], [], []>} : vector<384x128xbf16>, vector<128x128xbf16>, vector<384x128xf32> -> vector<384x128xf32>
      %35 = arith.truncf %31 : vector<384x128xf32> to vector<384x128xbf16>
      %c0_27 = arith.constant 0 : index
      %c0_28 = arith.constant 0 : index
      %36 = vector.load %arg12[%c0_27, %c0_28] : memref<384x256xbf16, #tpu.memory_space<vmem>>, vector<384x128xbf16>
      tpu.vector_store %arg12[%c0_27, %c0_28], %35 {strides = array<i32>} : memref<384x256xbf16, #tpu.memory_space<vmem>>, vector<384x128xbf16>,
      %37 = arith.truncf %34 : vector<384x128xf32> to vector<384x128xbf16>
      %c0_29 = arith.constant 0 : index
      %c128 = arith.constant 128 : index
      %38 = vector.load %arg12[%c0_29, %c128] : memref<384x256xbf16, #tpu.memory_space<vmem>>, vector<384x128xbf16>
      tpu.vector_store %arg12[%c0_29, %c128], %37 {strides = array<i32>} : memref<384x256xbf16, #tpu.memory_space<vmem>>, vector<384x128xbf16>,
    } else {
    }
    %c384_i32 = arith.constant 384 : i32
    %8 = arith.muli %arg2, %c384_i32 : i32
    %9 = tpu.assume_multiple %8, 384 : i32
    %c0 = arith.constant 0 : index
    %c0_4 = arith.constant 0 : index
    %c0_5 = arith.constant 0 : index
    %10 = vector.load %arg5[%c0, %c0_4, %c0_5] : memref<1x384x384xbf16, #tpu.memory_space<vmem>>, vector<1x384x384xbf16>
    %11 = vector.shape_cast %10 : vector<1x384x384xbf16> to vector<384x384xbf16>
    %c0_6 = arith.constant 0 : index
    %c0_7 = arith.constant 0 : index
    %12 = vector.load %arg12[%c0_6, %c0_7] : memref<384x256xbf16, #tpu.memory_space<vmem>>, vector<384x256xbf16>
    %cst = arith.constant dense<0.000000e+00> : vector<384x256xf32>
    %13 = tpu.matmul %11, %12, %cst {dimension_numbers = #tpu.dot_dimension_numbers<[1], [0], [0], [1], [0, 0, 1, 1], [], []>} : vector<384x384xbf16>, vector<384x256xbf16>, vector<384x256xf32> -> vector<384x256xf32>
    %c0_i32_8 = arith.constant 0 : i32
    %14 = arith.cmpi eq, %arg1, %c0_i32_8 : i32
    %15 = arith.extui %14 : i1 to i32
    %c0_i32_9 = arith.constant 0 : i32
    %16 = arith.cmpi ne, %15, %c0_i32_9 : i32
    scf.if %16 {
      %28 = arith.index_cast %9 : i32 to index
      %c0_17 = arith.constant 0 : index
      %29 = vector.load %arg13[%28, %c0_17] : memref<384x256xf32, #tpu.memory_space<vmem>>, vector<384x256xf32>
      tpu.vector_store %arg13[%28, %c0_17], %13 {strides = array<i32>} : memref<384x256xf32, #tpu.memory_space<vmem>>, vector<384x256xf32>,
    } else {
    }
    %c0_i32_10 = arith.constant 0 : i32
    %17 = arith.cmpi sgt, %arg1, %c0_i32_10 : i32
    %18 = arith.extui %17 : i1 to i32
    %c0_i32_11 = arith.constant 0 : i32
    %19 = arith.cmpi ne, %18, %c0_i32_11 : i32
    scf.if %19 {
      %28 = arith.index_cast %9 : i32 to index
      %c0_17 = arith.constant 0 : index
      %29 = vector.load %arg13[%28, %c0_17] : memref<384x256xf32, #tpu.memory_space<vmem>>, vector<384x256xf32>
      %30 = arith.addf %29, %13 : vector<384x256xf32>
      %31 = arith.index_cast %9 : i32 to index
      %c0_18 = arith.constant 0 : index
      %32 = vector.load %arg13[%31, %c0_18] : memref<384x256xf32, #tpu.memory_space<vmem>>, vector<384x256xf32>
      tpu.vector_store %arg13[%31, %c0_18], %30 {strides = array<i32>} : memref<384x256xf32, #tpu.memory_space<vmem>>, vector<384x256xf32>,
    } else {
    }
    %c0_i32_12 = arith.constant 0 : i32
    %20 = arith.cmpi eq, %arg1, %c0_i32_12 : i32
    %21 = arith.extui %20 : i1 to i32
    %c0_i32_13 = arith.constant 0 : i32
    %22 = arith.cmpi ne, %21, %c0_i32_13 : i32
    scf.if %22 {
      %c0_17 = arith.constant 0 : index
      %28 = memref.load %arg8[%c0_17] : memref<1xf32, #tpu.memory_space<smem>>
      %29 = arith.index_cast %9 : i32 to index
      %c0_18 = arith.constant 0 : index
      %30 = vector.load %arg13[%29, %c0_18] : memref<384x256xf32, #tpu.memory_space<vmem>>, vector<384x256xf32>
      %c0_19 = arith.constant 0 : index
      %c0_20 = arith.constant 0 : index
      %31 = vector.load %arg7[%c0_19, %c0_20] : memref<1x256xf32, #tpu.memory_space<vmem>>, vector<1x256xf32>
      %32 = vector.broadcast %31 : vector<1x256xf32> to vector<384x256xf32>
      %33 = arith.addf %30, %32 : vector<384x256xf32>
      %cst_21 = arith.constant 0.000000e+00 : f32
      %34 = vector.broadcast %cst_21 : f32 to vector<384x256xf32>
      %35 = arith.cmpf ogt, %33, %34 : vector<384x256xf32>
      %36 = vector.broadcast %28 : f32 to vector<384x256xf32>
      %37 = arith.mulf %36, %33 : vector<384x256xf32>
      %38 = arith.select %35, %33, %37 : vector<384x256xi1>, vector<384x256xf32>
      %39 = arith.index_cast %9 : i32 to index
      %c0_22 = arith.constant 0 : index
      %40 = vector.load %arg13[%39, %c0_22] : memref<384x256xf32, #tpu.memory_space<vmem>>, vector<384x256xf32>
      tpu.vector_store %arg13[%39, %c0_22], %38 {strides = array<i32>} : memref<384x256xf32, #tpu.memory_space<vmem>>, vector<384x256xf32>,
      %41 = tpu.iota {dimensions = array<i32: 0>} : vector<384x1xi32>
      %42 = vector.broadcast %9 : i32 to vector<384x1xi32>
      %43 = arith.addi %42, %41 : vector<384x1xi32>
      %c300_i32 = arith.constant 300 : i32
      %44 = vector.broadcast %c300_i32 : i32 to vector<384x1xi32>
      %45 = arith.cmpi slt, %43, %44 : vector<384x1xi32>
      %46 = vector.extract_strided_slice %38 {offsets = [0, 0], sizes = [384, 128], strides = [1, 1]} : vector<384x256xf32> to vector<384x128xf32>
      %cst_23 = arith.constant 0.000000e+00 : f32
      %47 = vector.shape_cast %45 : vector<384x1xi1> to vector<384x1xi1>
      %48 = vector.broadcast %47 : vector<384x1xi1> to vector<384x128xi1>
      %49 = vector.broadcast %cst_23 : f32 to vector<384x128xf32>
      %50 = arith.select %48, %46, %49 : vector<384x128xi1>, vector<384x128xf32>
      %c0_24 = arith.constant 0 : index
      %c0_25 = arith.constant 0 : index
      %51 = vector.load %arg14[%c0_24, %c0_25] : memref<1x128xf32, #tpu.memory_space<vmem>>, vector<1x128xf32>
      %cst_26 = arith.constant dense<0.000000e+00> : vector<128xf32>
      %52 = vector.multi_reduction <add>, %50, %cst_26 [0] : vector<384x128xf32> to vector<128xf32>
      %53 = vector.shape_cast %52 : vector<128xf32> to vector<1x128xf32>
      %54 = arith.addf %51, %53 : vector<1x128xf32>
      %c0_27 = arith.constant 0 : index
      %c0_28 = arith.constant 0 : index
      %55 = vector.load %arg14[%c0_27, %c0_28] : memref<1x128xf32, #tpu.memory_space<vmem>>, vector<1x128xf32>
      tpu.vector_store %arg14[%c0_27, %c0_28], %54 {strides = array<i32>} : memref<1x128xf32, #tpu.memory_space<vmem>>, vector<1x128xf32>,
    } else {
    }
    %c0_i32_14 = arith.constant 0 : i32
    %23 = arith.cmpi eq, %arg1, %c0_i32_14 : i32
    %c0_i32_15 = arith.constant 0 : i32
    %24 = arith.cmpi eq, %arg2, %c0_i32_15 : i32
    %25 = arith.andi %23, %24 : i1
    %26 = arith.extui %25 : i1 to i32
    %c0_i32_16 = arith.constant 0 : i32
    %27 = arith.cmpi ne, %26, %c0_i32_16 : i32
    scf.if %27 {
      %c0_17 = arith.constant 0 : index
      %c0_18 = arith.constant 0 : index
      %28 = vector.load %arg14[%c0_17, %c0_18] : memref<1x128xf32, #tpu.memory_space<vmem>>, vector<1x128xf32>
      %cst_19 = arith.constant 0.00333333341 : f32
      %29 = vector.broadcast %cst_19 : f32 to vector<1x128xf32>
      %30 = arith.mulf %28, %29 : vector<1x128xf32>
      %31 = arith.negf %30 : vector<1x128xf32>
      %32 = math.exp %31 : vector<1x128xf32>
      %cst_20 = arith.constant 1.000000e+00 : f32
      %33 = vector.broadcast %cst_20 : f32 to vector<1x128xf32>
      %34 = arith.addf %33, %32 : vector<1x128xf32>
      %35 = arith.divf %33, %34 : vector<1x128xf32>
      %c0_21 = arith.constant 0 : index
      %c0_22 = arith.constant 0 : index
      %36 = vector.load %arg9[%c0_21, %c0_22] : memref<128x128xbf16, #tpu.memory_space<vmem>>, vector<128x128xbf16>
      %37 = arith.extf %36 : vector<128x128xbf16> to vector<128x128xf32>
      %cst_23 = arith.constant dense<0.000000e+00> : vector<128x1xf32>
      %38 = tpu.matmul %37, %35, %cst_23 {dimension_numbers = #tpu.dot_dimension_numbers<[1], [1], [0], [0], [0, 0, 1, 0], [], []>} : vector<128x128xf32>, vector<1x128xf32>, vector<128x1xf32> -> vector<128x1xf32>
      %39 = tpu.concatenate %38, %38 in 0 : vector<128x1xf32>, vector<128x1xf32> -> vector<256x1xf32>
      %40 = tpu.iota {dimensions = array<i32: 0>} : vector<256x128xi32>
      %41 = tpu.iota {dimensions = array<i32: 1>} : vector<256x128xi32>
      %c128_i32 = arith.constant 128 : i32
      %42 = vector.broadcast %c128_i32 : i32 to vector<256x128xi32>
      %43 = arith.cmpi slt, %40, %42 : vector<256x128xi32>
      %c0_i32_24 = arith.constant 0 : i32
      %c1_i32 = arith.constant 1 : i32
      %44 = vector.broadcast %c0_i32_24 : i32 to vector<256x128xi32>
      %45 = vector.broadcast %c1_i32 : i32 to vector<256x128xi32>
      %46 = arith.select %43, %44, %45 : vector<256x128xi1>, vector<256x128xi32>
      %47 = arith.cmpi eq, %41, %46 : vector<256x128xi32>
      %48 = vector.shape_cast %39 : vector<256x1xf32> to vector<256x1xf32>
      %49 = vector.broadcast %48 : vector<256x1xf32> to vector<256x128xf32>
      %cst_25 = arith.constant 0.000000e+00 : f32
      %50 = vector.broadcast %cst_25 : f32 to vector<256x128xf32>
      %51 = arith.select %47, %49, %50 : vector<256x128xi1>, vector<256x128xf32>
      %c0_26 = arith.constant 0 : index
      %c0_27 = arith.constant 0 : index
      %52 = vector.load %arg13[%c0_26, %c0_27] : memref<384x256xf32, #tpu.memory_space<vmem>>, vector<384x256xf32>
      %cst_28 = arith.constant dense<0.000000e+00> : vector<384x128xf32>
      %53 = tpu.matmul %52, %51, %cst_28 {dimension_numbers = #tpu.dot_dimension_numbers<[1], [0], [0], [1], [0, 0, 1, 1], [], []>} : vector<384x256xf32>, vector<256x128xf32>, vector<384x128xf32> -> vector<384x128xf32>
      %54 = tpu.transpose %53, [1, 0] : vector<384x128xf32> -> vector<128x384xf32>
      %55 = vector.extract_strided_slice %54 {offsets = [0, 0], sizes = [2, 384], strides = [1, 1]} : vector<128x384xf32> to vector<2x384xf32>
      %c0_29 = arith.constant 0 : index
      %56 = memref.load %arg10[%c0_29] : memref<1xf32, #tpu.memory_space<smem>>
      %57 = vector.broadcast %56 : f32 to vector<2x384xf32>
      %58 = arith.addf %55, %57 : vector<2x384xf32>
      %c0_30 = arith.constant 0 : index
      %c0_31 = arith.constant 0 : index
      %c0_32 = arith.constant 0 : index
      %59 = vector.load %arg11[%c0_30, %c0_31, %c0_32] : memref<1x2x384xf32, #tpu.memory_space<vmem>>, vector<1x2x384xf32>
      %60 = vector.shape_cast %59 : vector<1x2x384xf32> to vector<2x384xf32>
      %61 = vector.shape_cast %58 : vector<2x384xf32> to vector<1x2x384xf32>
      tpu.vector_store %arg11[%c0_30, %c0_31, %c0_32], %61 {strides = array<i32>} : memref<1x2x384xf32, #tpu.memory_space<vmem>>, vector<1x2x384xf32>,
    } else {
    }
    return
  }
  func.func @transform_0(%arg0: i32, %arg1: i32, %arg2: i32) -> (i32, i32, i32) {
    %c0_i32 = arith.constant 0 : i32
    %c0_i32_0 = arith.constant 0 : i32
    return %arg0, %arg1, %c0_i32 : i32, i32, i32
  }
  func.func @transform_1(%arg0: i32, %arg1: i32, %arg2: i32) -> (i32, i32, i32) {
    %c0_i32 = arith.constant 0 : i32
    %c0_i32_0 = arith.constant 0 : i32
    return %arg0, %arg1, %c0_i32 : i32, i32, i32
  }
  func.func @transform_2(%arg0: i32, %arg1: i32, %arg2: i32) -> (i32, i32, i32) {
    %c0_i32 = arith.constant 0 : i32
    return %arg0, %arg2, %arg1 : i32, i32, i32
  }
  func.func @transform_3(%arg0: i32, %arg1: i32, %arg2: i32) -> (i32, i32) {
    %c0_i32 = arith.constant 0 : i32
    %c0_i32_0 = arith.constant 0 : i32
    %c0_i32_1 = arith.constant 0 : i32
    return %c0_i32, %c0_i32_0 : i32, i32
  }
  func.func @transform_4(%arg0: i32, %arg1: i32, %arg2: i32) -> (i32, i32) {
    %c0_i32 = arith.constant 0 : i32
    %c0_i32_0 = arith.constant 0 : i32
    %c0_i32_1 = arith.constant 0 : i32
    return %c0_i32, %c0_i32_0 : i32, i32
  }
  func.func @transform_5(%arg0: i32, %arg1: i32, %arg2: i32) -> i32 {
    %c0_i32 = arith.constant 0 : i32
    %c0_i32_0 = arith.constant 0 : i32
    return %c0_i32 : i32
  }
  func.func @transform_6(%arg0: i32, %arg1: i32, %arg2: i32) -> (i32, i32) {
    %c0_i32 = arith.constant 0 : i32
    %c0_i32_0 = arith.constant 0 : i32
    %c0_i32_1 = arith.constant 0 : i32
    return %c0_i32, %c0_i32_0 : i32, i32
  }
  func.func @transform_7(%arg0: i32, %arg1: i32, %arg2: i32) -> i32 {
    %c0_i32 = arith.constant 0 : i32
    %c0_i32_0 = arith.constant 0 : i32
    return %c0_i32 : i32
  }
  func.func @transform_8(%arg0: i32, %arg1: i32, %arg2: i32) -> (i32, i32, i32) {
    %c0_i32 = arith.constant 0 : i32
    %c0_i32_0 = arith.constant 0 : i32
    %c0_i32_1 = arith.constant 0 : i32
    return %arg0, %c0_i32, %c0_i32_0 : i32, i32, i32
  }
}

</mosaic_0001>

<llo_original>
// kernel: tpu_custom_call.1
$region0: #{tpu_custom_call.1}
  #allocation0 [shape = 'u32[]', space=smem, size = 0x4, offset = 0x4, fixed_abs, tag = 'smem constant byte address 0x4 - core index']
  #allocation1 [shape = 'u32[144,128]{1,0:T(1,128)}', space=vmem, size = 0x12000, scoped, tag = 'internal scratch']
  #allocation2 [shape = 'bf16[384,256]{1,0:T(16,128)(2,1)}', space=vmem, size = 0x30000, scoped, tag = 'scratch operand']
  #allocation3 [shape = 'f32[384,256]{1,0:T(8,128)}', space=vmem, size = 0x60000, scoped, tag = 'scratch operand']
  #allocation4 [shape = 'f32[1,128]{1,0:T(1,128)}', space=vmem, size = 0x200, scoped, tag = 'scratch operand']
  #allocation5 [shape = 'f32[1]{0:T(128)S(6)}', space=smem, size = 0x200, scoped, tag = 'scoped memory for tpu_custom_call.1']
  #allocation6 [shape = 'f32[1]{0:T(128)S(6)}', space=smem, size = 0x200, scoped, tag = 'scoped memory for tpu_custom_call.1']
  %s0 = inlined_call_operand.hbm [shape: bf16[2,384,128], index: 0, kind: input, shape index: {}]
  %s1 = inlined_call_operand.hbm [shape: bf16[2,384,128], index: 1, kind: input, shape index: {}]
  %s2 = inlined_call_operand.hbm [shape: bf16[2,384,384], index: 2, kind: input, shape index: {}]
  %s3 = inlined_call_operand.hbm [shape: bf16[128,128], index: 3, kind: input, shape index: {}]
  %s4 = inlined_call_operand.hbm [shape: f32[1,256], index: 4, kind: input, shape index: {}]
  %s5 = inlined_call_operand.<no memory space> [shape: f32[1], index: 5, kind: input, shape index: {}]
  %s6 = inlined_call_operand.hbm [shape: bf16[128,128], index: 6, kind: input, shape index: {}]
  %s7 = inlined_call_operand.<no memory space> [shape: f32[1], index: 7, kind: input, shape index: {}]
  %s8 = inlined_call_operand.hbm [shape: f32[2,2,384], index: 8, kind: output, shape index: {}]
  %s9 = sld [smem:[#allocation0]]
  $region113: #{tpu_custom_call.1} parent=0
    _
  %s11 = ssub.s32 1, %s9
  %s12 = scalar_select 0, %s11, %s9
  %13 = sst [smem:[#allocation5]] %s5
  %14 = sst [smem:[#allocation6]] %s7
  $region1: #{tpu_custom_call.1} parent=0
    #allocation7 [shape = 'u8[196608]{0}', space=vmem, size = 0x30000, scoped, tag = 'input window, operand 0']
    #allocation8 [shape = 's32[2]{0}', space=sflag, size = 0x8, scoped, tag = 'scoped memory for tpu_custom_call.1']
    #allocation9 [shape = 's32[2]{0}', space=sflag, size = 0x8, scoped, tag = 'scoped memory for tpu_custom_call.1']
    #allocation10 [shape = 'u8[196608]{0}', space=vmem, size = 0x30000, scoped, tag = 'input window, operand 1']
    #allocation11 [shape = 's32[2]{0}', space=sflag, size = 0x8, scoped, tag = 'scoped memory for tpu_custom_call.1']
    #allocation12 [shape = 'u8[589824]{0}', space=vmem, size = 0x90000, scoped, tag = 'input window, operand 2']
    #allocation13 [shape = 'u8[32768]{0}', space=vmem, size = 0x8000, scoped, tag = 'input window, operand 3, single buffered']
    #allocation14 [shape = 's32[1]{0}', space=sflag, size = 0x4, scoped, tag = 'scoped memory for tpu_custom_call.1']
    #allocation15 [shape = 'u8[1024]{0}', space=vmem, size = 0x400, scoped, tag = 'input window, operand 4, single buffered']
    #allocation16 [shape = 'u8[32768]{0}', space=vmem, size = 0x8000, scoped, tag = 'input window, operand 6, single buffered']
    #allocation17 [shape = 's32[1]{0}', space=sflag, size = 0x4, scoped, tag = 'scoped memory for tpu_custom_call.1']
    #allocation18 [shape = 'u8[6144]{0}', space=vmem, size = 0x1800, scoped, tag = 'output window, operand 0']
    %15 = vsyncpa [#allocation8], 0
    %s16 = scalar_lea.sflag [#allocation8], 1
    %17 = vsyncpa %s16, 0
    %18 = vsyncpa [#allocation11], 0
    %s19 = scalar_lea.sflag [#allocation11], 1
    %20 = vsyncpa %s19, 0
    %21 = vsyncpa [#allocation14], 0
    %22 = vsyncpa [#allocation17], 0
    %23 = vsyncpa [#allocation9], 0
    %s24 = scalar_lea.sflag [#allocation9], 1
    %25 = vsyncpa %s24, 0
    loop: start=0, step=1, limit=4
    $region2: #{tpu_custom_call.1} parent=1 // loop_pre_header
      _
    $region3: #{tpu_custom_call.1} parent=1 // loop_header
      %s27 = sphi 0, %s31
      %p28 = scmp.ge.s32.totalorder %s27, 4
      %s34 = sphi 0, %s53
      %s35 = sphi 0, %s49
      %s36 = sphi 0, %s45
      %s37 = sphi 0, %s34
      %s38 = sphi 0, %s35
      %s39 = sphi 0, %s36
      %s40 = sphi 0, %s37
      %s41 = sphi 0, %s38
      %s42 = sphi 0, %s39
      %s58 = sphi 0, %s60
      %s61 = sphi 0, %s58
      %s62 = sphi 0, %s61
      %s78 = sphi 0, %s62
      %s86 = sphi 0, %s88
      %s89 = sphi 0, %s86
      %s90 = sphi 0, %s89
      %s106 = sphi 0, %s90
      %s116 = sphi 0, %s118
      %s119 = sphi 0, %s116
      %s120 = sphi 0, %s119
      %s136 = sphi 0, %s120
      %s140 = sphi 0, %s140
      %s142 = sphi 0, %s140
      %s143 = sphi 0, %s142
      %s157 = sphi 0, %s143
      %s161 = sphi 0, %s161
      %s163 = sphi 0, %s161
      %s164 = sphi 0, %s163
      %s178 = sphi 0, %s164
      %s182 = sphi 0, %s182
      %s184 = sphi 0, %s182
      %s185 = sphi 0, %s184
      %s199 = sphi 0, %s185
      %s203 = sphi 0, %s203
      %s205 = sphi 0, %s203
      %s206 = sphi 0, %s205
      %s220 = sphi 0, %s206
      %s224 = sphi 0, %s224
      %s226 = sphi 0, %s224
      %s227 = sphi 0, %s226
      %s241 = sphi 0, %s227
      %s247 = sphi 0, %s249
      %s250 = sphi 0, %s247
      %s251 = sphi 0, %s250
      %s267 = sphi 0, %s251
    $region4: #{tpu_custom_call.1} parent=1 // loop_header_branch
      %30 = sbr.rel (%p28) target = $region8
    $region5: #{tpu_custom_call.1} parent=1 // loop_body
      %s32 = ssub.s32 %s27, 1
      %s33 = ssub.s32 %s27, 2
      %s43 = sadd.s32 1, %s36
      %p44 = scmp.ge.s32.totalorder %s43, 1
      %s45 = scalar_select %p44, 0, %s43
      %s46 = sadd.s32 1, %s35
      %s47 = scalar_select %p44, %s46, %s35
      %p48 = scmp.ge.s32.totalorder %s47, 1
      %s49 = scalar_select %p48, 0, %s47
      %s50 = sadd.s32 1, %s34
      %s51 = scalar_select %p48, %s50, %s34
      %p52 = scmp.ge.s32.totalorder %s51, 2
      %s53 = scalar_select %p52, 0, %s51
      %s54 = ssub.s32 %s34, %s53
      %s55 = ssub.s32 %s35, %s49
      %s56 = sor.u32 %s54, %s55
      %p57 = scmp.eq.s32.totalorder %s56, 0
      %s59 = sadd.s32 %s58, 1
      %s60 = scalar_select %p57, %s58, %s59
      %p63 = pneg %p57
      %p64 = scmp.eq.s32.totalorder %s27, 1
      %p65 = por %p63, %p64
      %p66 = scmp.ne.s32.totalorder %s58, %s61
      %p67 = scmp.eq.s32.totalorder %s27, 0
      %p68 = por %p66, %p67
      %p69 = scmp.ne.s32.totalorder %s58, %s61
      %p70 = scmp.eq.s32.totalorder %s32, 1
      %p71 = por %p69, %p70
      %p72 = scmp.ne.s32.totalorder %s61, %s62
      %p73 = scmp.eq.s32.totalorder %s32, 0
      %p74 = por %p72, %p73
      %p75 = scmp.ne.s32.totalorder %s61, %s62
      %p76 = scmp.eq.s32.totalorder %s33, 1
      %p77 = por %p75, %p76
      %p79 = scmp.ne.s32.totalorder %s62, %s78
      %p80 = scmp.eq.s32.totalorder %s33, 0
      %p81 = por %p79, %p80
      %s82 = ssub.s32 %s34, %s53
      %s83 = ssub.s32 %s35, %s49
      %s84 = sor.u32 %s82, %s83
      %p85 = scmp.eq.s32.totalorder %s84, 0
      %s87 = sadd.s32 %s86, 1
      %s88 = scalar_select %p85, %s86, %s87
      %p91 = pneg %p85
      %p92 = scmp.eq.s32.totalorder %s27, 1
      %p93 = por %p91, %p92
      %p94 = scmp.ne.s32.totalorder %s86, %s89
      %p95 = scmp.eq.s32.totalorder %s27, 0
      %p96 = por %p94, %p95
      %p97 = scmp.ne.s32.totalorder %s86, %s89
      %p98 = scmp.eq.s32.totalorder %s32, 1
      %p99 = por %p97, %p98
      %p100 = scmp.ne.s32.totalorder %s89, %s90
      %p101 = scmp.eq.s32.totalorder %s32, 0
      %p102 = por %p100, %p101
      %p103 = scmp.ne.s32.totalorder %s89, %s90
      %p104 = scmp.eq.s32.totalorder %s33, 1
      %p105 = por %p103, %p104
      %p107 = scmp.ne.s32.totalorder %s90, %s106
      %p108 = scmp.eq.s32.totalorder %s33, 0
      %p109 = por %p107, %p108
      %s110 = ssub.s32 %s34, %s53
      %s111 = ssub.s32 %s36, %s45
      %s112 = sor.u32 %s110, %s111
      %s113 = ssub.s32 %s35, %s49
      %s114 = sor.u32 %s112, %s113
      %p115 = scmp.eq.s32.totalorder %s114, 0
      %s117 = sadd.s32 %s116, 1
      %s118 = scalar_select %p115, %s116, %s117
      %p121 = pneg %p115
      %p122 = scmp.eq.s32.totalorder %s27, 1
      %p123 = por %p121, %p122
      %p124 = scmp.ne.s32.totalorder %s116, %s119
      %p125 = scmp.eq.s32.totalorder %s27, 0
      %p126 = por %p124, %p125
      %p127 = scmp.ne.s32.totalorder %s116, %s119
      %p128 = scmp.eq.s32.totalorder %s32, 1
      %p129 = por %p127, %p128
      %p130 = scmp.ne.s32.totalorder %s119, %s120
      %p131 = scmp.eq.s32.totalorder %s32, 0
      %p132 = por %p130, %p131
      %p133 = scmp.ne.s32.totalorder %s119, %s120
      %p134 = scmp.eq.s32.totalorder %s33, 1
      %p135 = por %p133, %p134
      %p137 = scmp.ne.s32.totalorder %s120, %s136
      %p138 = scmp.eq.s32.totalorder %s33, 0
      %p139 = por %p137, %p138
      %s141 = sadd.s32 %s140, 1
      %p144 = scmp.eq.s32.totalorder %s27, 1
      %p145 = scmp.ne.s32.totalorder %s140, %s142
      %p146 = scmp.eq.s32.totalorder %s27, 0
      %p147 = por %p145, %p146
      %p148 = scmp.ne.s32.totalorder %s140, %s142
      %p149 = scmp.eq.s32.totalorder %s32, 1
      %p150 = por %p148, %p149
      %p151 = scmp.ne.s32.totalorder %s142, %s143
      %p152 = scmp.eq.s32.totalorder %s32, 0
      %p153 = por %p151, %p152
      %p154 = scmp.ne.s32.totalorder %s142, %s143
      %p155 = scmp.eq.s32.totalorder %s33, 1
      %p156 = por %p154, %p155
      %p158 = scmp.ne.s32.totalorder %s143, %s157
      %p159 = scmp.eq.s32.totalorder %s33, 0
      %p160 = por %p158, %p159
      %s162 = sadd.s32 %s161, 1
      %p165 = scmp.eq.s32.totalorder %s27, 1
      %p166 = scmp.ne.s32.totalorder %s161, %s163
      %p167 = scmp.eq.s32.totalorder %s27, 0
      %p168 = por %p166, %p167
      %p169 = scmp.ne.s32.totalorder %s161, %s163
      %p170 = scmp.eq.s32.totalorder %s32, 1
      %p171 = por %p169, %p170
      %p172 = scmp.ne.s32.totalorder %s163, %s164
      %p173 = scmp.eq.s32.totalorder %s32, 0
      %p174 = por %p172, %p173
      %p175 = scmp.ne.s32.totalorder %s163, %s164
      %p176 = scmp.eq.s32.totalorder %s33, 1
      %p177 = por %p175, %p176
      %p179 = scmp.ne.s32.totalorder %s164, %s178
      %p180 = scmp.eq.s32.totalorder %s33, 0
      %p181 = por %p179, %p180
      %s183 = sadd.s32 %s182, 1
      %p186 = scmp.eq.s32.totalorder %s27, 1
      %p187 = scmp.ne.s32.totalorder %s182, %s184
      %p188 = scmp.eq.s32.totalorder %s27, 0
      %p189 = por %p187, %p188
      %p190 = scmp.ne.s32.totalorder %s182, %s184
      %p191 = scmp.eq.s32.totalorder %s32, 1
      %p192 = por %p190, %p191
      %p193 = scmp.ne.s32.totalorder %s184, %s185
      %p194 = scmp.eq.s32.totalorder %s32, 0
      %p195 = por %p193, %p194
      %p196 = scmp.ne.s32.totalorder %s184, %s185
      %p197 = scmp.eq.s32.totalorder %s33, 1
      %p198 = por %p196, %p197
      %p200 = scmp.ne.s32.totalorder %s185, %s199
      %p201 = scmp.eq.s32.totalorder %s33, 0
      %p202 = por %p200, %p201
      %s204 = sadd.s32 %s203, 1
      %p207 = scmp.eq.s32.totalorder %s27, 1
      %p208 = scmp.ne.s32.totalorder %s203, %s205
      %p209 = scmp.eq.s32.totalorder %s27, 0
      %p210 = por %p208, %p209
      %p211 = scmp.ne.s32.totalorder %s203, %s205
      %p212 = scmp.eq.s32.totalorder %s32, 1
      %p213 = por %p211, %p212
      %p214 = scmp.ne.s32.totalorder %s205, %s206
      %p215 = scmp.eq.s32.totalorder %s32, 0
      %p216 = por %p214, %p215
      %p217 = scmp.ne.s32.totalorder %s205, %s206
      %p218 = scmp.eq.s32.totalorder %s33, 1
      %p219 = por %p217, %p218
      %p221 = scmp.ne.s32.totalorder %s206, %s220
      %p222 = scmp.eq.s32.totalorder %s33, 0
      %p223 = por %p221, %p222
      %s225 = sadd.s32 %s224, 1
      %p228 = scmp.eq.s32.totalorder %s27, 1
      %p229 = scmp.ne.s32.totalorder %s224, %s226
      %p230 = scmp.eq.s32.totalorder %s27, 0
      %p231 = por %p229, %p230
      %p232 = scmp.ne.s32.totalorder %s224, %s226
      %p233 = scmp.eq.s32.totalorder %s32, 1
      %p234 = por %p232, %p233
      %p235 = scmp.ne.s32.totalorder %s226, %s227
      %p236 = scmp.eq.s32.totalorder %s32, 0
      %p237 = por %p235, %p236
      %p238 = scmp.ne.s32.totalorder %s226, %s227
      %p239 = scmp.eq.s32.totalorder %s33, 1
      %p240 = por %p238, %p239
      %p242 = scmp.ne.s32.totalorder %s227, %s241
      %p243 = scmp.eq.s32.totalorder %s33, 0
      %p244 = por %p242, %p243
      %s245 = ssub.s32 %s34, %s53
      %p246 = scmp.eq.s32.totalorder %s245, 0
      %s248 = sadd.s32 %s247, 1
      %s249 = scalar_select %p246, %s247, %s248
      %p252 = pneg %p246
      %p253 = scmp.eq.s32.totalorder %s27, 1
      %p254 = por %p252, %p253
      %p255 = scmp.ne.s32.totalorder %s247, %s250
      %p256 = scmp.eq.s32.totalorder %s27, 0
      %p257 = por %p255, %p256
      %p258 = scmp.ne.s32.totalorder %s247, %s250
      %p259 = scmp.eq.s32.totalorder %s32, 1
      %p260 = por %p258, %p259
      %p261 = scmp.ne.s32.totalorder %s250, %s251
      %p262 = scmp.eq.s32.totalorder %s32, 0
      %p263 = por %p261, %p262
      %p264 = scmp.ne.s32.totalorder %s250, %s251
      %p265 = scmp.eq.s32.totalorder %s33, 1
      %p266 = por %p264, %p265
      %p268 = scmp.ne.s32.totalorder %s251, %s267
      %p269 = scmp.eq.s32.totalorder %s33, 0
      %p270 = por %p268, %p269
      %p271 = scmp.le.s32.totalorder 1, %s27
      %p272 = scmp.lt.s32.totalorder %s27, 3
      %p273 = pnand %p271, %p272
      %p274 = pneg %p273
      // Predicated region
      $region9: #{tpu_custom_call.1} parent=5 // pred_check
        _
      $region10: #{tpu_custom_call.1} parent=5 // pred_check_branch
        %276 = sbr.rel (%p273) target = $region12
      $region11: #{tpu_custom_call.1} parent=5 // pred_region
        %s277 = ssub.s32 %s27, 1
        // Predicated region
        $region13: #{tpu_custom_call.1} parent=11 // pred_check
          %p278 = pneg %p153
        $region14: #{tpu_custom_call.1} parent=11 // pred_check_branch
          %280 = sbr.rel (%p278) target = $region16
        $region15: #{tpu_custom_call.1} parent=11 // pred_region
          %s282 = ssub.s32 1024, 1024
          %283 = vsyncadd [#allocation14], %s282
          %s284 = sshll.u32 [#allocation13], 4
          %s285 = int_to_ptr.vmem [resolvable:$true] %s284
          %290 = dma.hbm_to_vmem [thread:$0]  %s3, 1024, %s285, [#allocation14], 64, 64, 4
        $region16: #{tpu_custom_call.1} parent=11 // pred_fallthru
          _
        // Predicated region
        $region17: #{tpu_custom_call.1} parent=11 // pred_check
          %p291 = pneg %p174
        $region18: #{tpu_custom_call.1} parent=11 // pred_check_branch
          %293 = sbr.rel (%p291) target = $region20
        $region19: #{tpu_custom_call.1} parent=11 // pred_region
          %s295 = ssub.s32 32, 32
          %296 = vsyncadd [#allocation14], %s295
          %s298 = sshll.u32 [#allocation15], 4
          %s299 = int_to_ptr.vmem [resolvable:$true] %s298
          %301 = dma.hbm_to_vmem [thread:$0]  %s4, 32, %s299, [#allocation14]
        $region20: #{tpu_custom_call.1} parent=11 // pred_fallthru
          _
        // Predicated region
        $region21: #{tpu_custom_call.1} parent=11 // pred_check
          %p302 = pneg %p195
        $region22: #{tpu_custom_call.1} parent=11 // pred_check_branch
          %304 = sbr.rel (%p302) target = $region24
        $region23: #{tpu_custom_call.1} parent=11 // pred_region
          _
        $region24: #{tpu_custom_call.1} parent=11 // pred_fallthru
          _
        // Predicated region
        $region25: #{tpu_custom_call.1} parent=11 // pred_check
          %p305 = pneg %p216
        $region26: #{tpu_custom_call.1} parent=11 // pred_check_branch
          %307 = sbr.rel (%p305) target = $region28
        $region27: #{tpu_custom_call.1} parent=11 // pred_region
          %s309 = ssub.s32 1024, 1024
          %310 = vsyncadd [#allocation17], %s309
          %s311 = sshll.u32 [#allocation16], 4
          %s312 = int_to_ptr.vmem [resolvable:$true] %s311
          %317 = dma.hbm_to_vmem [thread:$0]  %s6, 1024, %s312, [#allocation17], 64, 64, 4
        $region28: #{tpu_custom_call.1} parent=11 // pred_fallthru
          _
        // Predicated region
        $region29: #{tpu_custom_call.1} parent=11 // pred_check
          %p318 = pneg %p237
        $region30: #{tpu_custom_call.1} parent=11 // pred_check_branch
          %320 = sbr.rel (%p318) target = $region32
        $region31: #{tpu_custom_call.1} parent=11 // pred_region
          _
        $region32: #{tpu_custom_call.1} parent=11 // pred_fallthru
          _
      $region12: #{tpu_custom_call.1} parent=5 // pred_fallthru
        _
      %p321 = scmp.lt.s32.totalorder %s27, 2
      // Predicated region
      $region33: #{tpu_custom_call.1} parent=5 // pred_check
        %p322 = pneg %p321
      $region34: #{tpu_custom_call.1} parent=5 // pred_check_branch
        %324 = sbr.rel (%p322) target = $region36
      $region35: #{tpu_custom_call.1} parent=5 // pred_region
        // Predicated region
        $region37: #{tpu_custom_call.1} parent=35 // pred_check
          %p325 = pneg %p68
        $region38: #{tpu_custom_call.1} parent=35 // pred_check_branch
          %327 = sbr.rel (%p325) target = $region40
        $region39: #{tpu_custom_call.1} parent=35 // pred_region
          %s328 = sand.u32 %s58, 1
          %s329 = scalar_lea.sflag [#allocation8], %s328
          %s330 = sand.u32 %s58, 1
          %s331 = smul.addr %s330, 192
          %s332 = scalar_lea.vmem [#allocation7], %s331
          %s333 = smul.u32 48, %s35
          %s335 = ssub.s32 3072, 3072
          %336 = vsyncadd %s329, %s335
          %s337 = smul.addr %s34, 48
          %s338 = sadd.s32 %s333, %s337
          %s339 = smul.addr %s338, 64
          %s340 = scalar_lea.hbm %s0, %s339
          %s341 = sshll.u32 %s332, 4
          %s342 = int_to_ptr.vmem [resolvable:$true] %s341
          %347 = dma.hbm_to_vmem [thread:$0]  %s340, 3072, %s342, %s329, 64, 64, 4
        $region40: #{tpu_custom_call.1} parent=35 // pred_fallthru
          _
        // Predicated region
        $region41: #{tpu_custom_call.1} parent=35 // pred_check
          %p348 = pneg %p96
        $region42: #{tpu_custom_call.1} parent=35 // pred_check_branch
          %350 = sbr.rel (%p348) target = $region44
        $region43: #{tpu_custom_call.1} parent=35 // pred_region
          %s351 = sand.u32 %s27, 1
          %s352 = scalar_lea.sflag [#allocation11], %s351
          %s353 = sand.u32 %s86, 1
          %s354 = smul.addr %s353, 192
          %s355 = scalar_lea.vmem [#allocation10], %s354
          %s356 = smul.u32 48, %s35
          %s358 = ssub.s32 3072, 3072
          %359 = vsyncadd %s352, %s358
          %s360 = smul.addr %s34, 48
          %s361 = sadd.s32 %s356, %s360
          %s362 = smul.addr %s361, 64
          %s363 = scalar_lea.hbm %s1, %s362
          %s364 = sshll.u32 %s355, 4
          %s365 = int_to_ptr.vmem [resolvable:$true] %s364
          %370 = dma.hbm_to_vmem [thread:$0]  %s363, 3072, %s365, %s352, 64, 64, 4
        $region44: #{tpu_custom_call.1} parent=35 // pred_fallthru
          _
        // Predicated region
        $region45: #{tpu_custom_call.1} parent=35 // pred_check
          %p371 = pneg %p126
        $region46: #{tpu_custom_call.1} parent=35 // pred_check_branch
          %373 = sbr.rel (%p371) target = $region48
        $region47: #{tpu_custom_call.1} parent=35 // pred_region
          %s374 = sand.u32 %s27, 1
          %s375 = scalar_lea.sflag [#allocation11], %s374
          %s376 = sand.u32 %s116, 1
          %s377 = smul.addr %s376, 576
          %s378 = scalar_lea.vmem [#allocation12], %s377
          %s379 = smul.u32 48, %s36
          %s380 = smul.u32 3, %s35
          %s382 = ssub.s32 9216, 9216
          %383 = vsyncadd %s375, %s382
          %s384 = smul.addr %s379, 3
          %s385 = sadd.s32 %s380, %s384
          %s386 = smul.addr %s34, 144
          %s387 = sadd.s32 %s385, %s386
          %s388 = smul.addr %s387, 64
          %s389 = scalar_lea.hbm %s2, %s388
          %s390 = sshll.u32 %s378, 4
          %s391 = int_to_ptr.vmem [resolvable:$true] %s390
          %396 = dma.hbm_to_vmem [thread:$0]  %s389, 9216, %s391, %s375, 192, 192, 12
        $region48: #{tpu_custom_call.1} parent=35 // pred_fallthru
          _
      $region36: #{tpu_custom_call.1} parent=5 // pred_fallthru
        _
      %p397 = scmp.le.s32.totalorder 1, %s27
      %p398 = scmp.lt.s32.totalorder %s27, 3
      %p399 = pnand %p397, %p398
      %p400 = pneg %p399
      // Predicated region
      $region49: #{tpu_custom_call.1} parent=5 // pred_check
        _
      $region50: #{tpu_custom_call.1} parent=5 // pred_check_branch
        %402 = sbr.rel (%p399) target = $region52
      $region51: #{tpu_custom_call.1} parent=5 // pred_region
        %s403 = ssub.s32 %s27, 1
        %s404 = sand.u32 %s61, 1
        %s405 = scalar_lea.sflag [#allocation8], %s404
        %s406 = sand.u32 %s61, 1
        %s407 = smul.addr %s406, 192
        %s408 = scalar_lea.vmem [#allocation7], %s407
        // Predicated region
        $region53: #{tpu_custom_call.1} parent=51 // pred_check
          %p409 = pneg %p74
        $region54: #{tpu_custom_call.1} parent=51 // pred_check_branch
          %411 = sbr.rel (%p409) target = $region56
        $region55: #{tpu_custom_call.1} parent=51 // pred_region
          %412 = dma.done %s405, 3072
        $region56: #{tpu_custom_call.1} parent=51 // pred_fallthru
          _
        %s413 = sand.u32 %s32, 1
        %s414 = scalar_lea.sflag [#allocation11], %s413
        %s415 = sand.u32 %s89, 1
        %s416 = smul.addr %s415, 192
        %s417 = scalar_lea.vmem [#allocation10], %s416
        // Predicated region
        $region57: #{tpu_custom_call.1} parent=51 // pred_check
          %p418 = pneg %p102
        $region58: #{tpu_custom_call.1} parent=51 // pred_check_branch
          %420 = sbr.rel (%p418) target = $region60
        $region59: #{tpu_custom_call.1} parent=51 // pred_region
          %421 = dma.done %s414, 3072
        $region60: #{tpu_custom_call.1} parent=51 // pred_fallthru
          _
        %s422 = sand.u32 %s32, 1
        %s423 = scalar_lea.sflag [#allocation11], %s422
        %s424 = sand.u32 %s119, 1
        %s425 = smul.addr %s424, 576
        %s426 = scalar_lea.vmem [#allocation12], %s425
        // Predicated region
        $region61: #{tpu_custom_call.1} parent=51 // pred_check
          %p427 = pneg %p132
        $region62: #{tpu_custom_call.1} parent=51 // pred_check_branch
          %429 = sbr.rel (%p427) target = $region64
        $region63: #{tpu_custom_call.1} parent=51 // pred_region
          %430 = dma.done %s423, 9216
        $region64: #{tpu_custom_call.1} parent=51 // pred_fallthru
          _
        // Predicated region
        $region65: #{tpu_custom_call.1} parent=51 // pred_check
          %p431 = pneg %p153
        $region66: #{tpu_custom_call.1} parent=51 // pred_check_branch
          %433 = sbr.rel (%p431) target = $region68
        $region67: #{tpu_custom_call.1} parent=51 // pred_region
          %434 = dma.done [#allocation14], 1024
        $region68: #{tpu_custom_call.1} parent=51 // pred_fallthru
          _
        // Predicated region
        $region69: #{tpu_custom_call.1} parent=51 // pred_check
          %p435 = pneg %p174
        $region70: #{tpu_custom_call.1} parent=51 // pred_check_branch
          %437 = sbr.rel (%p435) target = $region72
        $region71: #{tpu_custom_call.1} parent=51 // pred_region
          %438 = dma.done [#allocation14], 32
        $region72: #{tpu_custom_call.1} parent=51 // pred_fallthru
          _
        // Predicated region
        $region73: #{tpu_custom_call.1} parent=51 // pred_check
          %p439 = pneg %p216
        $region74: #{tpu_custom_call.1} parent=51 // pred_check_branch
          %441 = sbr.rel (%p439) target = $region76
        $region75: #{tpu_custom_call.1} parent=51 // pred_region
          %442 = dma.done [#allocation17], 1024
        $region76: #{tpu_custom_call.1} parent=51 // pred_fallthru
          _
        %s443 = sand.u32 %s61, 1
        %s444 = scalar_lea.sflag [#allocation8], %s443
        %s445 = sand.u32 %s61, 1
        %s446 = smul.addr %s445, 192
        %s447 = scalar_lea.vmem [#allocation7], %s446
        %p448 = pneg %p74
        %p449 = pneg %p71
        %s450 = sand.u32 %s32, 1
        %s451 = scalar_lea.sflag [#allocation11], %s450
        %s452 = sand.u32 %s89, 1
        %s453 = smul.addr %s452, 192
        %s454 = scalar_lea.vmem [#allocation10], %s453
        %p455 = pneg %p102
        %p456 = pneg %p99
        %s457 = sand.u32 %s32, 1
        %s458 = scalar_lea.sflag [#allocation11], %s457
        %s459 = sand.u32 %s119, 1
        %s460 = smul.addr %s459, 576
        %s461 = scalar_lea.vmem [#allocation12], %s460
        %p462 = pneg %p132
        %p463 = pneg %p129
        %p464 = pneg %p153
        %p465 = pneg %p150
        %p466 = pneg %p174
        %p467 = pneg %p171
        %p468 = pneg %p195
        %p469 = pneg %p192
        %p470 = pneg %p216
        %p471 = pneg %p213
        %p472 = pneg %p237
        %p473 = pneg %p234
        %p474 = pneg %p263
        %p475 = pneg %p260
        %s476 = sand.u32 %s250, 1
        %s477 = scalar_lea.sflag [#allocation9], %s476
        %s478 = sand.u32 %s250, 1
        %s479 = smul.addr %s478, 6
        %s480 = scalar_lea.vmem [#allocation18], %s479
        %s481 = smul.u32 48, %s38
        %s482 = smul.u32 48, %s38
        %s483 = smul.u32 48, %s39
        %s484 = smul.u32 3, %s38
        %p486 = scmp.eq.s32.totalorder %s38, 0
        %p487 = scmp.eq.s32.totalorder %s39, 0
        %p488 = pnand %p486, %p487
        %p489 = pneg %p488
        // Predicated region
        $region77: #{tpu_custom_call.1} parent=51 // pred_check
          _
        $region78: #{tpu_custom_call.1} parent=51 // pred_check_branch
          %491 = sbr.rel (%p488) target = $region80
        $region79: #{tpu_custom_call.1} parent=51 // pred_region
          %492 = vst [vmem:[#allocation4] sm:$0x1] 0.0
        $region80: #{tpu_custom_call.1} parent=51 // pred_fallthru
          _
        // Predicated region
        $region81: #{tpu_custom_call.1} parent=51 // pred_check
          %p493 = pneg %p487
        $region82: #{tpu_custom_call.1} parent=51 // pred_check_branch
          %495 = sbr.rel (%p493) target = $region84
        $region83: #{tpu_custom_call.1} parent=51 // pred_region
          %v496 = vld [vmem:[#allocation13] sm:$0xf]
          %v497 = vld [vmem:[#allocation13 + $0x4] sm:$0xf]
          %v498 = vld [vmem:[#allocation13 + $0x8] sm:$0xf]
          %v499 = vld [vmem:[#allocation13 + $0xc] sm:$0xf]
          %v500 = vld [vmem:[#allocation13 + $0x10] sm:$0xf]
          %v501 = vld [vmem:[#allocation13 + $0x14] sm:$0xf]
          %v502 = vld [vmem:[#allocation13 + $0x18] sm:$0xf]
          %v503 = vld [vmem:[#allocation13 + $0x1c] sm:$0xf]
          %v504 = vld [vmem:[#allocation13 + $0x20] sm:$0xf]
          %v505 = vld [vmem:[#allocation13 + $0x24] sm:$0xf]
          %v506 = vld [vmem:[#allocation13 + $0x28] sm:$0xf]
          %v507 = vld [vmem:[#allocation13 + $0x2c] sm:$0xf]
          %v508 = vld [vmem:[#allocation13 + $0x30] sm:$0xf]
          %v509 = vld [vmem:[#allocation13 + $0x34] sm:$0xf]
          %v510 = vld [vmem:[#allocation13 + $0x38] sm:$0xf]
          %v511 = vld [vmem:[#allocation13 + $0x3c] sm:$0xf]
          %v512 = vld [vmem:[%s408] sm:$0xf]
          %v513 = vld [vmem:[%s408 + $0x4] sm:$0xf]
          %v514 = vld [vmem:[%s408 + $0x8] sm:$0xf]
          %v515 = vld [vmem:[%s408 + $0xc] sm:$0xf]
          %v516 = vld [vmem:[%s408 + $0x10] sm:$0xf]
          %v517 = vld [vmem:[%s408 + $0x14] sm:$0xf]
          %v518 = vld [vmem:[%s408 + $0x18] sm:$0xf]
          %v519 = vld [vmem:[%s408 + $0x1c] sm:$0xf]
          %v520 = vld [vmem:[%s408 + $0x20] sm:$0xf]
          %v521 = vld [vmem:[%s408 + $0x24] sm:$0xf]
          %v522 = vld [vmem:[%s408 + $0x28] sm:$0xf]
          %v523 = vld [vmem:[%s408 + $0x2c] sm:$0xf]
          %v524 = vld [vmem:[%s408 + $0x30] sm:$0xf]
          %v525 = vld [vmem:[%s408 + $0x34] sm:$0xf]
          %v526 = vld [vmem:[%s408 + $0x38] sm:$0xf]
          %v527 = vld [vmem:[%s408 + $0x3c] sm:$0xf]
          %v528 = vld [vmem:[%s408 + $0x40] sm:$0xf]
          %v529 = vld [vmem:[%s408 + $0x44] sm:$0xf]
          %v530 = vld [vmem:[%s408 + $0x48] sm:$0xf]
          %v531 = vld [vmem:[%s408 + $0x4c] sm:$0xf]
          %v532 = vld [vmem:[%s408 + $0x50] sm:$0xf]
          %v533 = vld [vmem:[%s408 + $0x54] sm:$0xf]
          %v534 = vld [vmem:[%s408 + $0x58] sm:$0xf]
          %v535 = vld [vmem:[%s408 + $0x5c] sm:$0xf]
          %v536 = vld [vmem:[%s408 + $0x60] sm:$0xf]
          %v537 = vld [vmem:[%s408 + $0x64] sm:$0xf]
          %v538 = vld [vmem:[%s408 + $0x68] sm:$0xf]
          %v539 = vld [vmem:[%s408 + $0x6c] sm:$0xf]
          %v540 = vld [vmem:[%s408 + $0x70] sm:$0xf]
          %v541 = vld [vmem:[%s408 + $0x74] sm:$0xf]
          %v542 = vld [vmem:[%s408 + $0x78] sm:$0xf]
          %v543 = vld [vmem:[%s408 + $0x7c] sm:$0xf]
          %v544 = vld [vmem:[%s408 + $0x80] sm:$0xf]
          %v545 = vld [vmem:[%s408 + $0x84] sm:$0xf]
          %v546 = vld [vmem:[%s408 + $0x88] sm:$0xf]
          %v547 = vld [vmem:[%s408 + $0x8c] sm:$0xf]
          %v548 = vld [vmem:[%s408 + $0x90] sm:$0xf]
          %v549 = vld [vmem:[%s408 + $0x94] sm:$0xf]
          %v550 = vld [vmem:[%s408 + $0x98] sm:$0xf]
          %v551 = vld [vmem:[%s408 + $0x9c] sm:$0xf]
          %v552 = vld [vmem:[%s408 + $0xa0] sm:$0xf]
          %v553 = vld [vmem:[%s408 + $0xa4] sm:$0xf]
          %v554 = vld [vmem:[%s408 + $0xa8] sm:$0xf]
          %v555 = vld [vmem:[%s408 + $0xac] sm:$0xf]
          %v556 = vld [vmem:[%s408 + $0xb0] sm:$0xf]
          %v557 = vld [vmem:[%s408 + $0xb4] sm:$0xf]
          %v558 = vld [vmem:[%s408 + $0xb8] sm:$0xf]
          %v559 = vld [vmem:[%s408 + $0xbc] sm:$0xf]
          %v608 = vunpack.c.l.b16 %v512
          %v609 = vunpack.c.l.b16 %v513
          %v610 = vunpack.c.l.b16 %v514
          %v611 = vunpack.c.l.b16 %v515
          %v612 = vunpack.c.l.b16 %v516
          %v613 = vunpack.c.l.b16 %v517
          %v614 = vunpack.c.l.b16 %v518
          %v615 = vunpack.c.l.b16 %v519
          %v616 = vunpack.c.l.b16 %v520
          %v617 = vunpack.c.l.b16 %v521
          %v618 = vunpack.c.l.b16 %v522
          %v619 = vunpack.c.l.b16 %v523
          %v620 = vunpack.c.l.b16 %v524
          %v621 = vunpack.c.l.b16 %v525
          %v622 = vunpack.c.l.b16 %v526
          %v623 = vunpack.c.l.b16 %v527
          %v624 = vunpack.c.l.b16 %v528
          %v625 = vunpack.c.l.b16 %v529
          %v626 = vunpack.c.l.b16 %v530
          %v627 = vunpack.c.l.b16 %v531
          %v628 = vunpack.c.l.b16 %v532
          %v629 = vunpack.c.l.b16 %v533
          %v630 = vunpack.c.l.b16 %v534
          %v631 = vunpack.c.l.b16 %v535
          %v632 = vunpack.c.l.b16 %v536
          %v633 = vunpack.c.l.b16 %v537
          %v634 = vunpack.c.l.b16 %v538
          %v635 = vunpack.c.l.b16 %v539
          %v636 = vunpack.c.l.b16 %v540
          %v637 = vunpack.c.l.b16 %v541
          %v638 = vunpack.c.l.b16 %v542
          %v639 = vunpack.c.l.b16 %v543
          %v640 = vunpack.c.l.b16 %v544
          %v641 = vunpack.c.l.b16 %v545
          %v642 = vunpack.c.l.b16 %v546
          %v643 = vunpack.c.l.b16 %v547
          %v644 = vunpack.c.l.b16 %v548
          %v645 = vunpack.c.l.b16 %v549
          %v646 = vunpack.c.l.b16 %v550
          %v647 = vunpack.c.l.b16 %v551
          %v648 = vunpack.c.l.b16 %v552
          %v649 = vunpack.c.l.b16 %v553
          %v650 = vunpack.c.l.b16 %v554
          %v651 = vunpack.c.l.b16 %v555
          %v652 = vunpack.c.l.b16 %v556
          %v653 = vunpack.c.l.b16 %v557
          %v654 = vunpack.c.l.b16 %v558
          %v655 = vunpack.c.l.b16 %v559
          %v656 = vpack.c.b16 %v609, %v608
          %v657 = vpack.c.b16 %v611, %v610
          %v658 = vpack.c.b16 %v613, %v612
          %v659 = vpack.c.b16 %v615, %v614
          %v660 = vpack.c.b16 %v617, %v616
          %v661 = vpack.c.b16 %v619, %v618
          %v662 = vpack.c.b16 %v621, %v620
          %v663 = vpack.c.b16 %v623, %v622
          %v664 = vpack.c.b16 %v625, %v624
          %v665 = vpack.c.b16 %v627, %v626
          %v666 = vpack.c.b16 %v629, %v628
          %v667 = vpack.c.b16 %v631, %v630
          %v668 = vpack.c.b16 %v633, %v632
          %v669 = vpack.c.b16 %v635, %v634
          %v670 = vpack.c.b16 %v637, %v636
          %v671 = vpack.c.b16 %v639, %v638
          %v672 = vpack.c.b16 %v641, %v640
          %v673 = vpack.c.b16 %v643, %v642
          %v674 = vpack.c.b16 %v645, %v644
          %v675 = vpack.c.b16 %v647, %v646
          %v676 = vpack.c.b16 %v649, %v648
          %v677 = vpack.c.b16 %v651, %v650
          %v678 = vpack.c.b16 %v653, %v652
          %v679 = vpack.c.b16 %v655, %v654
          %v720 = vunpack.c.l.b16 %v496
          %v721 = vunpack.c.l.b16 %v497
          %v722 = vunpack.c.l.b16 %v498
          %v723 = vunpack.c.l.b16 %v499
          %v724 = vunpack.c.l.b16 %v500
          %v725 = vunpack.c.l.b16 %v501
          %v726 = vunpack.c.l.b16 %v502
          %v727 = vunpack.c.l.b16 %v503
          %v728 = vunpack.c.l.b16 %v504
          %v729 = vunpack.c.l.b16 %v505
          %v730 = vunpack.c.l.b16 %v506
          %v731 = vunpack.c.l.b16 %v507
          %v732 = vunpack.c.l.b16 %v508
          %v733 = vunpack.c.l.b16 %v509
          %v734 = vunpack.c.l.b16 %v510
          %v735 = vunpack.c.l.b16 %v511
          %v736 = vpack.c.b16 %v721, %v720
          %v737 = vpack.c.b16 %v723, %v722
          %v738 = vpack.c.b16 %v725, %v724
          %v739 = vpack.c.b16 %v727, %v726
          %v740 = vpack.c.b16 %v729, %v728
          %v741 = vpack.c.b16 %v731, %v730
          %v742 = vpack.c.b16 %v733, %v732
          %v743 = vpack.c.b16 %v735, %v734
          %752 = vmatprep.subr.bf16.mxu0 0
          %753 = vmatpush1.bf16.msra.mxu0 %v736
          %754 = vmatprep.subr.bf16.mxu0 0
          %755 = vmatpush1.bf16.msra.mxu0 %v737
          %756 = vmatprep.subr.bf16.mxu0 0
          %757 = vmatpush1.bf16.msra.mxu0 %v738
          %758 = vmatprep.subr.bf16.mxu0 0
          %759 = vmatpush1.bf16.msra.mxu0 %v739
          %760 = vmatprep.subr.bf16.mxu0 0
          %761 = vmatpush1.bf16.msra.mxu0 %v740
          %762 = vmatprep.subr.bf16.mxu0 0
          %763 = vmatpush1.bf16.msra.mxu0 %v741
          %764 = vmatprep.subr.bf16.mxu0 0
          %765 = vmatpush1.bf16.msra.mxu0 %v742
          %766 = vmatprep.subr.bf16.mxu0 0
          %767 = vmatpush1.bf16.msra.mxu0 %v743
          %768 = vmatprep.subr.bf16.mxu0 0
          %769 = vmatpush1.bf16.msra.mxu0 0
          %770 = vmatprep.subr.bf16.mxu0 0
          %771 = vmatpush1.bf16.msra.mxu0 0
          %772 = vmatprep.subr.bf16.mxu0 0
          %773 = vmatpush1.bf16.msra.mxu0 0
          %774 = vmatprep.subr.bf16.mxu0 0
          %775 = vmatpush1.bf16.msra.mxu0 0
          %776 = vmatprep.subr.bf16.mxu0 0
          %777 = vmatpush1.bf16.msra.mxu0 0
          %778 = vmatprep.subr.bf16.mxu0 0
          %779 = vmatpush1.bf16.msra.mxu0 0
          %780 = vmatprep.subr.bf16.mxu0 0
          %781 = vmatpush1.bf16.msra.mxu0 0
          %782 = vmatprep.subr.bf16.mxu0 0
          %783 = vmatpush1.bf16.msra.mxu0 0
          %784 = vmatprep.mubr.bf16.mxu0 0
          %785 = vmatmul.mubr.bf16.gmra.mrb[0].mxu0 %v656
          %v786 = vpop.f32.mrb[0].mxu0
          %v787 = vadd.f32 0.0, %v786
          %v788 = vpop.f32.mrb[0].mxu0
          %v789 = vpop.f32.mrb[0].mxu0
          %v790 = vadd.f32 0.0, %v789
          %v791 = vpop.f32.mrb[0].mxu0
          %792 = vmatprep.mubr.bf16.mxu0 0
          %793 = vmatmul.mubr.bf16.gmra.mrb[0].mxu0 %v657
          %v794 = vpop.f32.mrb[0].mxu0
          %v795 = vadd.f32 0.0, %v794
          %v796 = vpop.f32.mrb[0].mxu0
          %v797 = vpop.f32.mrb[0].mxu0
          %v798 = vadd.f32 0.0, %v797
          %v799 = vpop.f32.mrb[0].mxu0
          %800 = vmatprep.mubr.bf16.mxu0 0
          %801 = vmatmul.mubr.bf16.gmra.mrb[0].mxu0 %v658
          %v802 = vpop.f32.mrb[0].mxu0
          %v803 = vadd.f32 0.0, %v802
          %v804 = vpop.f32.mrb[0].mxu0
          %v805 = vpop.f32.mrb[0].mxu0
          %v806 = vadd.f32 0.0, %v805
          %v807 = vpop.f32.mrb[0].mxu0
          %808 = vmatprep.mubr.bf16.mxu0 0
          %809 = vmatmul.mubr.bf16.gmra.mrb[0].mxu0 %v659
          %v810 = vpop.f32.mrb[0].mxu0
          %v811 = vadd.f32 0.0, %v810
          %v812 = vpop.f32.mrb[0].mxu0
          %v813 = vpop.f32.mrb[0].mxu0
          %v814 = vadd.f32 0.0, %v813
          %v815 = vpop.f32.mrb[0].mxu0
          %816 = vmatprep.mubr.bf16.mxu0 0
          %817 = vmatmul.mubr.bf16.gmra.mrb[0].mxu0 %v660
          %v818 = vpop.f32.mrb[0].mxu0
          %v819 = vadd.f32 0.0, %v818
          %v820 = vpop.f32.mrb[0].mxu0
          %v821 = vpop.f32.mrb[0].mxu0
          %v822 = vadd.f32 0.0, %v821
          %v823 = vpop.f32.mrb[0].mxu0
          %824 = vmatprep.mubr.bf16.mxu0 0
          %825 = vmatmul.mubr.bf16.gmra.mrb[0].mxu0 %v661
          %v826 = vpop.f32.mrb[0].mxu0
          %v827 = vadd.f32 0.0, %v826
          %v828 = vpop.f32.mrb[0].mxu0
          %v829 = vpop.f32.mrb[0].mxu0
          %v830 = vadd.f32 0.0, %v829
          %v831 = vpop.f32.mrb[0].mxu0
          %832 = vmatprep.mubr.bf16.mxu0 0
          %833 = vmatmul.mubr.bf16.gmra.mrb[0].mxu0 %v662
          %v834 = vpop.f32.mrb[0].mxu0
          %v835 = vadd.f32 0.0, %v834
          %v836 = vpop.f32.mrb[0].mxu0
          %v837 = vpop.f32.mrb[0].mxu0
          %v838 = vadd.f32 0.0, %v837
          %v839 = vpop.f32.mrb[0].mxu0
          %840 = vmatprep.mubr.bf16.mxu0 0
          %841 = vmatmul.mubr.bf16.gmra.mrb[0].mxu0 %v663
          %v842 = vpop.f32.mrb[0].mxu0
          %v843 = vadd.f32 0.0, %v842
          %v844 = vpop.f32.mrb[0].mxu0
          %v845 = vpop.f32.mrb[0].mxu0
          %v846 = vadd.f32 0.0, %v845
          %v847 = vpop.f32.mrb[0].mxu0
          %848 = vmatprep.mubr.bf16.mxu0 0
          %849 = vmatmul.mubr.bf16.gmra.mrb[0].mxu0 %v664
          %v850 = vpop.f32.mrb[0].mxu0
          %v851 = vadd.f32 0.0, %v850
          %v852 = vpop.f32.mrb[0].mxu0
          %v853 = vpop.f32.mrb[0].mxu0
          %v854 = vadd.f32 0.0, %v853
          %v855 = vpop.f32.mrb[0].mxu0
          %856 = vmatprep.mubr.bf16.mxu0 0
          %857 = vmatmul.mubr.bf16.gmra.mrb[0].mxu0 %v665
          %v858 = vpop.f32.mrb[0].mxu0
          %v859 = vadd.f32 0.0, %v858
          %v860 = vpop.f32.mrb[0].mxu0
          %v861 = vpop.f32.mrb[0].mxu0
          %v862 = vadd.f32 0.0, %v861
          %v863 = vpop.f32.mrb[0].mxu0
          %864 = vmatprep.mubr.bf16.mxu0 0
          %865 = vmatmul.mubr.bf16.gmra.mrb[0].mxu0 %v666
          %v866 = vpop.f32.mrb[0].mxu0
          %v867 = vadd.f32 0.0, %v866
          %v868 = vpop.f32.mrb[0].mxu0
          %v869 = vpop.f32.mrb[0].mxu0
          %v870 = vadd.f32 0.0, %v869
          %v871 = vpop.f32.mrb[0].mxu0
          %872 = vmatprep.mubr.bf16.mxu0 0
          %873 = vmatmul.mubr.bf16.gmra.mrb[0].mxu0 %v667
          %v874 = vpop.f32.mrb[0].mxu0
          %v875 = vadd.f32 0.0, %v874
          %v876 = vpop.f32.mrb[0].mxu0
          %v877 = vpop.f32.mrb[0].mxu0
          %v878 = vadd.f32 0.0, %v877
          %v879 = vpop.f32.mrb[0].mxu0
          %880 = vmatprep.mubr.bf16.mxu0 0
          %881 = vmatmul.mubr.bf16.gmra.mrb[0].mxu0 %v668
          %v882 = vpop.f32.mrb[0].mxu0
          %v883 = vadd.f32 0.0, %v882
          %v884 = vpop.f32.mrb[0].mxu0
          %v885 = vpop.f32.mrb[0].mxu0
          %v886 = vadd.f32 0.0, %v885
          %v887 = vpop.f32.mrb[0].mxu0
          %888 = vmatprep.mubr.bf16.mxu0 0
          %889 = vmatmul.mubr.bf16.gmra.mrb[0].mxu0 %v669
          %v890 = vpop.f32.mrb[0].mxu0
          %v891 = vadd.f32 0.0, %v890
          %v892 = vpop.f32.mrb[0].mxu0
          %v893 = vpop.f32.mrb[0].mxu0
          %v894 = vadd.f32 0.0, %v893
          %v895 = vpop.f32.mrb[0].mxu0
          %896 = vmatprep.mubr.bf16.mxu0 0
          %897 = vmatmul.mubr.bf16.gmra.mrb[0].mxu0 %v670
          %v898 = vpop.f32.mrb[0].mxu0
          %v899 = vadd.f32 0.0, %v898
          %v900 = vpop.f32.mrb[0].mxu0
          %v901 = vpop.f32.mrb[0].mxu0
          %v902 = vadd.f32 0.0, %v901
          %v903 = vpop.f32.mrb[0].mxu0
          %904 = vmatprep.mubr.bf16.mxu0 0
          %905 = vmatmul.mubr.bf16.gmra.mrb[0].mxu0 %v671
          %v906 = vpop.f32.mrb[0].mxu0
          %v907 = vadd.f32 0.0, %v906
          %v908 = vpop.f32.mrb[0].mxu0
          %v909 = vpop.f32.mrb[0].mxu0
          %v910 = vadd.f32 0.0, %v909
          %v911 = vpop.f32.mrb[0].mxu0
          %912 = vmatprep.mubr.bf16.mxu0 0
          %913 = vmatmul.mubr.bf16.gmra.mrb[0].mxu0 %v672
          %v914 = vpop.f32.mrb[0].mxu0
          %v915 = vadd.f32 0.0, %v914
          %v916 = vpop.f32.mrb[0].mxu0
          %v917 = vpop.f32.mrb[0].mxu0
          %v918 = vadd.f32 0.0, %v917
          %v919 = vpop.f32.mrb[0].mxu0
          %920 = vmatprep.mubr.bf16.mxu0 0
          %921 = vmatmul.mubr.bf16.gmra.mrb[0].mxu0 %v673
          %v922 = vpop.f32.mrb[0].mxu0
          %v923 = vadd.f32 0.0, %v922
          %v924 = vpop.f32.mrb[0].mxu0
          %v925 = vpop.f32.mrb[0].mxu0
          %v926 = vadd.f32 0.0, %v925
          %v927 = vpop.f32.mrb[0].mxu0
          %928 = vmatprep.mubr.bf16.mxu0 0
          %929 = vmatmul.mubr.bf16.gmra.mrb[0].mxu0 %v674
          %v930 = vpop.f32.mrb[0].mxu0
          %v931 = vadd.f32 0.0, %v930
          %v932 = vpop.f32.mrb[0].mxu0
          %v933 = vpop.f32.mrb[0].mxu0
          %v934 = vadd.f32 0.0, %v933
          %v935 = vpop.f32.mrb[0].mxu0
          %936 = vmatprep.mubr.bf16.mxu0 0
          %937 = vmatmul.mubr.bf16.gmra.mrb[0].mxu0 %v675
          %v938 = vpop.f32.mrb[0].mxu0
          %v939 = vadd.f32 0.0, %v938
          %v940 = vpop.f32.mrb[0].mxu0
          %v941 = vpop.f32.mrb[0].mxu0
          %v942 = vadd.f32 0.0, %v941
          %v943 = vpop.f32.mrb[0].mxu0
          %944 = vmatprep.mubr.bf16.mxu0 0
          %945 = vmatmul.mubr.bf16.gmra.mrb[0].mxu0 %v676
          %v946 = vpop.f32.mrb[0].mxu0
          %v947 = vadd.f32 0.0, %v946
          %v948 = vpop.f32.mrb[0].mxu0
          %v949 = vpop.f32.mrb[0].mxu0
          %v950 = vadd.f32 0.0, %v949
          %v951 = vpop.f32.mrb[0].mxu0
          %952 = vmatprep.mubr.bf16.mxu0 0
          %953 = vmatmul.mubr.bf16.gmra.mrb[0].mxu0 %v677
          %v954 = vpop.f32.mrb[0].mxu0
          %v955 = vadd.f32 0.0, %v954
          %v956 = vpop.f32.mrb[0].mxu0
          %v957 = vpop.f32.mrb[0].mxu0
          %v958 = vadd.f32 0.0, %v957
          %v959 = vpop.f32.mrb[0].mxu0
          %960 = vmatprep.mubr.bf16.mxu0 0
          %961 = vmatmul.mubr.bf16.gmra.mrb[0].mxu0 %v678
          %v962 = vpop.f32.mrb[0].mxu0
          %v963 = vadd.f32 0.0, %v962
          %v964 = vpop.f32.mrb[0].mxu0
          %v965 = vpop.f32.mrb[0].mxu0
          %v966 = vadd.f32 0.0, %v965
          %v967 = vpop.f32.mrb[0].mxu0
          %968 = vmatprep.mubr.bf16.mxu0 0
          %969 = vmatmul.mubr.bf16.gmra.mrb[0].mxu0 %v679
          %v970 = vpop.f32.mrb[0].mxu0
          %v971 = vadd.f32 0.0, %v970
          %v972 = vpop.f32.mrb[0].mxu0
          %v973 = vpop.f32.mrb[0].mxu0
          %v974 = vadd.f32 0.0, %v973
          %v975 = vpop.f32.mrb[0].mxu0
          %976 = vdwg.mxu0
          %v977 = vld [vmem:[%s417] sm:$0xf]
          %v978 = vld [vmem:[%s417 + $0x4] sm:$0xf]
          %v979 = vld [vmem:[%s417 + $0x8] sm:$0xf]
          %v980 = vld [vmem:[%s417 + $0xc] sm:$0xf]
          %v981 = vld [vmem:[%s417 + $0x10] sm:$0xf]
          %v982 = vld [vmem:[%s417 + $0x14] sm:$0xf]
          %v983 = vld [vmem:[%s417 + $0x18] sm:$0xf]
          %v984 = vld [vmem:[%s417 + $0x1c] sm:$0xf]
          %v985 = vld [vmem:[%s417 + $0x20] sm:$0xf]
          %v986 = vld [vmem:[%s417 + $0x24] sm:$0xf]
          %v987 = vld [vmem:[%s417 + $0x28] sm:$0xf]
          %v988 = vld [vmem:[%s417 + $0x2c] sm:$0xf]
          %v989 = vld [vmem:[%s417 + $0x30] sm:$0xf]
          %v990 = vld [vmem:[%s417 + $0x34] sm:$0xf]
          %v991 = vld [vmem:[%s417 + $0x38] sm:$0xf]
          %v992 = vld [vmem:[%s417 + $0x3c] sm:$0xf]
          %v993 = vld [vmem:[%s417 + $0x40] sm:$0xf]
          %v994 = vld [vmem:[%s417 + $0x44] sm:$0xf]
          %v995 = vld [vmem:[%s417 + $0x48] sm:$0xf]
          %v996 = vld [vmem:[%s417 + $0x4c] sm:$0xf]
          %v997 = vld [vmem:[%s417 + $0x50] sm:$0xf]
          %v998 = vld [vmem:[%s417 + $0x54] sm:$0xf]
          %v999 = vld [vmem:[%s417 + $0x58] sm:$0xf]
          %v1000 = vld [vmem:[%s417 + $0x5c] sm:$0xf]
          %v1001 = vld [vmem:[%s417 + $0x60] sm:$0xf]
          %v1002 = vld [vmem:[%s417 + $0x64] sm:$0xf]
          %v1003 = vld [vmem:[%s417 + $0x68] sm:$0xf]
          %v1004 = vld [vmem:[%s417 + $0x6c] sm:$0xf]
          %v1005 = vld [vmem:[%s417 + $0x70] sm:$0xf]
          %v1006 = vld [vmem:[%s417 + $0x74] sm:$0xf]
          %v1007 = vld [vmem:[%s417 + $0x78] sm:$0xf]
          %v1008 = vld [vmem:[%s417 + $0x7c] sm:$0xf]
          %v1009 = vld [vmem:[%s417 + $0x80] sm:$0xf]
          %v1010 = vld [vmem:[%s417 + $0x84] sm:$0xf]
          %v1011 = vld [vmem:[%s417 + $0x88] sm:$0xf]
          %v1012 = vld [vmem:[%s417 + $0x8c] sm:$0xf]
          %v1013 = vld [vmem:[%s417 + $0x90] sm:$0xf]
          %v1014 = vld [vmem:[%s417 + $0x94] sm:$0xf]
          %v1015 = vld [vmem:[%s417 + $0x98] sm:$0xf]
          %v1016 = vld [vmem:[%s417 + $0x9c] sm:$0xf]
          %v1017 = vld [vmem:[%s417 + $0xa0] sm:$0xf]
          %v1018 = vld [vmem:[%s417 + $0xa4] sm:$0xf]
          %v1019 = vld [vmem:[%s417 + $0xa8] sm:$0xf]
          %v1020 = vld [vmem:[%s417 + $0xac] sm:$0xf]
          %v1021 = vld [vmem:[%s417 + $0xb0] sm:$0xf]
          %v1022 = vld [vmem:[%s417 + $0xb4] sm:$0xf]
          %v1023 = vld [vmem:[%s417 + $0xb8] sm:$0xf]
          %v1024 = vld [vmem:[%s417 + $0xbc] sm:$0xf]
          %v1073 = vunpack.c.l.b16 %v977
          %v1074 = vunpack.c.l.b16 %v978
          %v1075 = vunpack.c.l.b16 %v979
          %v1076 = vunpack.c.l.b16 %v980
          %v1077 = vunpack.c.l.b16 %v981
          %v1078 = vunpack.c.l.b16 %v982
          %v1079 = vunpack.c.l.b16 %v983
          %v1080 = vunpack.c.l.b16 %v984
          %v1081 = vunpack.c.l.b16 %v985
          %v1082 = vunpack.c.l.b16 %v986
          %v1083 = vunpack.c.l.b16 %v987
          %v1084 = vunpack.c.l.b16 %v988
          %v1085 = vunpack.c.l.b16 %v989
          %v1086 = vunpack.c.l.b16 %v990
          %v1087 = vunpack.c.l.b16 %v991
          %v1088 = vunpack.c.l.b16 %v992
          %v1089 = vunpack.c.l.b16 %v993
          %v1090 = vunpack.c.l.b16 %v994
          %v1091 = vunpack.c.l.b16 %v995
          %v1092 = vunpack.c.l.b16 %v996
          %v1093 = vunpack.c.l.b16 %v997
          %v1094 = vunpack.c.l.b16 %v998
          %v1095 = vunpack.c.l.b16 %v999
          %v1096 = vunpack.c.l.b16 %v1000
          %v1097 = vunpack.c.l.b16 %v1001
          %v1098 = vunpack.c.l.b16 %v1002
          %v1099 = vunpack.c.l.b16 %v1003
          %v1100 = vunpack.c.l.b16 %v1004
          %v1101 = vunpack.c.l.b16 %v1005
          %v1102 = vunpack.c.l.b16 %v1006
          %v1103 = vunpack.c.l.b16 %v1007
          %v1104 = vunpack.c.l.b16 %v1008
          %v1105 = vunpack.c.l.b16 %v1009
          %v1106 = vunpack.c.l.b16 %v1010
          %v1107 = vunpack.c.l.b16 %v1011
          %v1108 = vunpack.c.l.b16 %v1012
          %v1109 = vunpack.c.l.b16 %v1013
          %v1110 = vunpack.c.l.b16 %v1014
          %v1111 = vunpack.c.l.b16 %v1015
          %v1112 = vunpack.c.l.b16 %v1016
          %v1113 = vunpack.c.l.b16 %v1017
          %v1114 = vunpack.c.l.b16 %v1018
          %v1115 = vunpack.c.l.b16 %v1019
          %v1116 = vunpack.c.l.b16 %v1020
          %v1117 = vunpack.c.l.b16 %v1021
          %v1118 = vunpack.c.l.b16 %v1022
          %v1119 = vunpack.c.l.b16 %v1023
          %v1120 = vunpack.c.l.b16 %v1024
          %v1121 = vpack.c.b16 %v1074, %v1073
          %v1122 = vpack.c.b16 %v1076, %v1075
          %v1123 = vpack.c.b16 %v1078, %v1077
          %v1124 = vpack.c.b16 %v1080, %v1079
          %v1125 = vpack.c.b16 %v1082, %v1081
          %v1126 = vpack.c.b16 %v1084, %v1083
          %v1127 = vpack.c.b16 %v1086, %v1085
          %v1128 = vpack.c.b16 %v1088, %v1087
          %v1129 = vpack.c.b16 %v1090, %v1089
          %v1130 = vpack.c.b16 %v1092, %v1091
          %v1131 = vpack.c.b16 %v1094, %v1093
          %v1132 = vpack.c.b16 %v1096, %v1095
          %v1133 = vpack.c.b16 %v1098, %v1097
          %v1134 = vpack.c.b16 %v1100, %v1099
          %v1135 = vpack.c.b16 %v1102, %v1101
          %v1136 = vpack.c.b16 %v1104, %v1103
          %v1137 = vpack.c.b16 %v1106, %v1105
          %v1138 = vpack.c.b16 %v1108, %v1107
          %v1139 = vpack.c.b16 %v1110, %v1109
          %v1140 = vpack.c.b16 %v1112, %v1111
          %v1141 = vpack.c.b16 %v1114, %v1113
          %v1142 = vpack.c.b16 %v1116, %v1115
          %v1143 = vpack.c.b16 %v1118, %v1117
          %v1144 = vpack.c.b16 %v1120, %v1119
          %1169 = vmatprep.subr.bf16.mxu0 0
          %1170 = vmatpush1.bf16.msra.mxu0 %v736
          %1171 = vmatprep.subr.bf16.mxu0 0
          %1172 = vmatpush1.bf16.msra.mxu0 %v737
          %1173 = vmatprep.subr.bf16.mxu0 0
          %1174 = vmatpush1.bf16.msra.mxu0 %v738
          %1175 = vmatprep.subr.bf16.mxu0 0
          %1176 = vmatpush1.bf16.msra.mxu0 %v739
          %1177 = vmatprep.subr.bf16.mxu0 0
          %1178 = vmatpush1.bf16.msra.mxu0 %v740
          %1179 = vmatprep.subr.bf16.mxu0 0
          %1180 = vmatpush1.bf16.msra.mxu0 %v741
          %1181 = vmatprep.subr.bf16.mxu0 0
          %1182 = vmatpush1.bf16.msra.mxu0 %v742
          %1183 = vmatprep.subr.bf16.mxu0 0
          %1184 = vmatpush1.bf16.msra.mxu0 %v743
          %1185 = vmatprep.subr.bf16.mxu0 0
          %1186 = vmatpush1.bf16.msra.mxu0 0
          %1187 = vmatprep.subr.bf16.mxu0 0
          %1188 = vmatpush1.bf16.msra.mxu0 0
          %1189 = vmatprep.subr.bf16.mxu0 0
          %1190 = vmatpush1.bf16.msra.mxu0 0
          %1191 = vmatprep.subr.bf16.mxu0 0
          %1192 = vmatpush1.bf16.msra.mxu0 0
          %1193 = vmatprep.subr.bf16.mxu0 0
          %1194 = vmatpush1.bf16.msra.mxu0 0
          %1195 = vmatprep.subr.bf16.mxu0 0
          %1196 = vmatpush1.bf16.msra.mxu0 0
          %1197 = vmatprep.subr.bf16.mxu0 0
          %1198 = vmatpush1.bf16.msra.mxu0 0
          %1199 = vmatprep.subr.bf16.mxu0 0
          %1200 = vmatpush1.bf16.msra.mxu0 0
          %1201 = vmatprep.mubr.bf16.mxu0 0
          %1202 = vmatmul.mubr.bf16.gmra.mrb[0].mxu0 %v1121
          %v1203 = vpop.f32.mrb[0].mxu0
          %v1204 = vadd.f32 0.0, %v1203
          %v1205 = vpop.f32.mrb[0].mxu0
          %v1206 = vpop.f32.mrb[0].mxu0
          %v1207 = vadd.f32 0.0, %v1206
          %v1208 = vpop.f32.mrb[0].mxu0
          %1209 = vmatprep.mubr.bf16.mxu0 0
          %1210 = vmatmul.mubr.bf16.gmra.mrb[0].mxu0 %v1122
          %v1211 = vpop.f32.mrb[0].mxu0
          %v1212 = vadd.f32 0.0, %v1211
          %v1213 = vpop.f32.mrb[0].mxu0
          %v1214 = vpop.f32.mrb[0].mxu0
          %v1215 = vadd.f32 0.0, %v1214
          %v1216 = vpop.f32.mrb[0].mxu0
          %1217 = vmatprep.mubr.bf16.mxu0 0
          %1218 = vmatmul.mubr.bf16.gmra.mrb[0].mxu0 %v1123
          %v1219 = vpop.f32.mrb[0].mxu0
          %v1220 = vadd.f32 0.0, %v1219
          %v1221 = vpop.f32.mrb[0].mxu0
          %v1222 = vpop.f32.mrb[0].mxu0
          %v1223 = vadd.f32 0.0, %v1222
          %v1224 = vpop.f32.mrb[0].mxu0
          %1225 = vmatprep.mubr.bf16.mxu0 0
          %1226 = vmatmul.mubr.bf16.gmra.mrb[0].mxu0 %v1124
          %v1227 = vpop.f32.mrb[0].mxu0
          %v1228 = vadd.f32 0.0, %v1227
          %v1229 = vpop.f32.mrb[0].mxu0
          %v1230 = vpop.f32.mrb[0].mxu0
          %v1231 = vadd.f32 0.0, %v1230
          %v1232 = vpop.f32.mrb[0].mxu0
          %1233 = vmatprep.mubr.bf16.mxu0 0
          %1234 = vmatmul.mubr.bf16.gmra.mrb[0].mxu0 %v1125
          %v1235 = vpop.f32.mrb[0].mxu0
          %v1236 = vadd.f32 0.0, %v1235
          %v1237 = vpop.f32.mrb[0].mxu0
          %v1238 = vpop.f32.mrb[0].mxu0
          %v1239 = vadd.f32 0.0, %v1238
          %v1240 = vpop.f32.mrb[0].mxu0
          %1241 = vmatprep.mubr.bf16.mxu0 0
          %1242 = vmatmul.mubr.bf16.gmra.mrb[0].mxu0 %v1126
          %v1243 = vpop.f32.mrb[0].mxu0
          %v1244 = vadd.f32 0.0, %v1243
          %v1245 = vpop.f32.mrb[0].mxu0
          %v1246 = vpop.f32.mrb[0].mxu0
          %v1247 = vadd.f32 0.0, %v1246
          %v1248 = vpop.f32.mrb[0].mxu0
          %1249 = vmatprep.mubr.bf16.mxu0 0
          %1250 = vmatmul.mubr.bf16.gmra.mrb[0].mxu0 %v1127
          %v1251 = vpop.f32.mrb[0].mxu0
          %v1252 = vadd.f32 0.0, %v1251
          %v1253 = vpop.f32.mrb[0].mxu0
          %v1254 = vpop.f32.mrb[0].mxu0
          %v1255 = vadd.f32 0.0, %v1254
          %v1256 = vpop.f32.mrb[0].mxu0
          %1257 = vmatprep.mubr.bf16.mxu0 0
          %1258 = vmatmul.mubr.bf16.gmra.mrb[0].mxu0 %v1128
          %v1259 = vpop.f32.mrb[0].mxu0
          %v1260 = vadd.f32 0.0, %v1259
          %v1261 = vpop.f32.mrb[0].mxu0
          %v1262 = vpop.f32.mrb[0].mxu0
          %v1263 = vadd.f32 0.0, %v1262
          %v1264 = vpop.f32.mrb[0].mxu0
          %1265 = vmatprep.mubr.bf16.mxu0 0
          %1266 = vmatmul.mubr.bf16.gmra.mrb[0].mxu0 %v1129
          %v1267 = vpop.f32.mrb[0].mxu0
          %v1268 = vadd.f32 0.0, %v1267
          %v1269 = vpop.f32.mrb[0].mxu0
          %v1270 = vpop.f32.mrb[0].mxu0
          %v1271 = vadd.f32 0.0, %v1270
          %v1272 = vpop.f32.mrb[0].mxu0
          %1273 = vmatprep.mubr.bf16.mxu0 0
          %1274 = vmatmul.mubr.bf16.gmra.mrb[0].mxu0 %v1130
          %v1275 = vpop.f32.mrb[0].mxu0
          %v1276 = vadd.f32 0.0, %v1275
          %v1277 = vpop.f32.mrb[0].mxu0
          %v1278 = vpop.f32.mrb[0].mxu0
          %v1279 = vadd.f32 0.0, %v1278
          %v1280 = vpop.f32.mrb[0].mxu0
          %1281 = vmatprep.mubr.bf16.mxu0 0
          %1282 = vmatmul.mubr.bf16.gmra.mrb[0].mxu0 %v1131
          %v1283 = vpop.f32.mrb[0].mxu0
          %v1284 = vadd.f32 0.0, %v1283
          %v1285 = vpop.f32.mrb[0].mxu0
          %v1286 = vpop.f32.mrb[0].mxu0
          %v1287 = vadd.f32 0.0, %v1286
          %v1288 = vpop.f32.mrb[0].mxu0
          %1289 = vmatprep.mubr.bf16.mxu0 0
          %1290 = vmatmul.mubr.bf16.gmra.mrb[0].mxu0 %v1132
          %v1291 = vpop.f32.mrb[0].mxu0
          %v1292 = vadd.f32 0.0, %v1291
          %v1293 = vpop.f32.mrb[0].mxu0
          %v1294 = vpop.f32.mrb[0].mxu0
          %v1295 = vadd.f32 0.0, %v1294
          %v1296 = vpop.f32.mrb[0].mxu0
          %1297 = vmatprep.mubr.bf16.mxu0 0
          %1298 = vmatmul.mubr.bf16.gmra.mrb[0].mxu0 %v1133
          %v1299 = vpop.f32.mrb[0].mxu0
          %v1300 = vadd.f32 0.0, %v1299
          %v1301 = vpop.f32.mrb[0].mxu0
          %v1302 = vpop.f32.mrb[0].mxu0
          %v1303 = vadd.f32 0.0, %v1302
          %v1304 = vpop.f32.mrb[0].mxu0
          %1305 = vmatprep.mubr.bf16.mxu0 0
          %1306 = vmatmul.mubr.bf16.gmra.mrb[0].mxu0 %v1134
          %v1307 = vpop.f32.mrb[0].mxu0
          %v1308 = vadd.f32 0.0, %v1307
          %v1309 = vpop.f32.mrb[0].mxu0
          %v1310 = vpop.f32.mrb[0].mxu0
          %v1311 = vadd.f32 0.0, %v1310
          %v1312 = vpop.f32.mrb[0].mxu0
          %1313 = vmatprep.mubr.bf16.mxu0 0
          %1314 = vmatmul.mubr.bf16.gmra.mrb[0].mxu0 %v1135
          %v1315 = vpop.f32.mrb[0].mxu0
          %v1316 = vadd.f32 0.0, %v1315
          %v1317 = vpop.f32.mrb[0].mxu0
          %v1318 = vpop.f32.mrb[0].mxu0
          %v1319 = vadd.f32 0.0, %v1318
          %v1320 = vpop.f32.mrb[0].mxu0
          %1321 = vmatprep.mubr.bf16.mxu0 0
          %1322 = vmatmul.mubr.bf16.gmra.mrb[0].mxu0 %v1136
          %v1323 = vpop.f32.mrb[0].mxu0
          %v1324 = vadd.f32 0.0, %v1323
          %v1325 = vpop.f32.mrb[0].mxu0
          %v1326 = vpop.f32.mrb[0].mxu0
          %v1327 = vadd.f32 0.0, %v1326
          %v1328 = vpop.f32.mrb[0].mxu0
          %1329 = vmatprep.mubr.bf16.mxu0 0
          %1330 = vmatmul.mubr.bf16.gmra.mrb[0].mxu0 %v1137
          %v1331 = vpop.f32.mrb[0].mxu0
          %v1332 = vadd.f32 0.0, %v1331
          %v1333 = vpop.f32.mrb[0].mxu0
          %v1334 = vpop.f32.mrb[0].mxu0
          %v1335 = vadd.f32 0.0, %v1334
          %v1336 = vpop.f32.mrb[0].mxu0
          %1337 = vmatprep.mubr.bf16.mxu0 0
          %1338 = vmatmul.mubr.bf16.gmra.mrb[0].mxu0 %v1138
          %v1339 = vpop.f32.mrb[0].mxu0
          %v1340 = vadd.f32 0.0, %v1339
          %v1341 = vpop.f32.mrb[0].mxu0
          %v1342 = vpop.f32.mrb[0].mxu0
          %v1343 = vadd.f32 0.0, %v1342
          %v1344 = vpop.f32.mrb[0].mxu0
          %1345 = vmatprep.mubr.bf16.mxu0 0
          %1346 = vmatmul.mubr.bf16.gmra.mrb[0].mxu0 %v1139
          %v1347 = vpop.f32.mrb[0].mxu0
          %v1348 = vadd.f32 0.0, %v1347
          %v1349 = vpop.f32.mrb[0].mxu0
          %v1350 = vpop.f32.mrb[0].mxu0
          %v1351 = vadd.f32 0.0, %v1350
          %v1352 = vpop.f32.mrb[0].mxu0
          %1353 = vmatprep.mubr.bf16.mxu0 0
          %1354 = vmatmul.mubr.bf16.gmra.mrb[0].mxu0 %v1140
          %v1355 = vpop.f32.mrb[0].mxu0
          %v1356 = vadd.f32 0.0, %v1355
          %v1357 = vpop.f32.mrb[0].mxu0
          %v1358 = vpop.f32.mrb[0].mxu0
          %v1359 = vadd.f32 0.0, %v1358
          %v1360 = vpop.f32.mrb[0].mxu0
          %1361 = vmatprep.mubr.bf16.mxu0 0
          %1362 = vmatmul.mubr.bf16.gmra.mrb[0].mxu0 %v1141
          %v1363 = vpop.f32.mrb[0].mxu0
          %v1364 = vadd.f32 0.0, %v1363
          %v1365 = vpop.f32.mrb[0].mxu0
          %v1366 = vpop.f32.mrb[0].mxu0
          %v1367 = vadd.f32 0.0, %v1366
          %v1368 = vpop.f32.mrb[0].mxu0
          %1369 = vmatprep.mubr.bf16.mxu0 0
          %1370 = vmatmul.mubr.bf16.gmra.mrb[0].mxu0 %v1142
          %v1371 = vpop.f32.mrb[0].mxu0
          %v1372 = vadd.f32 0.0, %v1371
          %v1373 = vpop.f32.mrb[0].mxu0
          %v1374 = vpop.f32.mrb[0].mxu0
          %v1375 = vadd.f32 0.0, %v1374
          %v1376 = vpop.f32.mrb[0].mxu0
          %1377 = vmatprep.mubr.bf16.mxu0 0
          %1378 = vmatmul.mubr.bf16.gmra.mrb[0].mxu0 %v1143
          %v1379 = vpop.f32.mrb[0].mxu0
          %v1380 = vadd.f32 0.0, %v1379
          %v1381 = vpop.f32.mrb[0].mxu0
          %v1382 = vpop.f32.mrb[0].mxu0
          %v1383 = vadd.f32 0.0, %v1382
          %v1384 = vpop.f32.mrb[0].mxu0
          %1385 = vmatprep.mubr.bf16.mxu0 0
          %1386 = vmatmul.mubr.bf16.gmra.mrb[0].mxu0 %v1144
          %v1387 = vpop.f32.mrb[0].mxu0
          %v1388 = vadd.f32 0.0, %v1387
          %v1389 = vpop.f32.mrb[0].mxu0
          %v1390 = vpop.f32.mrb[0].mxu0
          %v1391 = vadd.f32 0.0, %v1390
          %v1392 = vpop.f32.mrb[0].mxu0
          %1393 = vdwg.mxu0
          %v1394 = vpack.c.bf16 %v790, %v787
          %v1395 = vpack.c.bf16 %v798, %v795
          %v1396 = vpack.c.bf16 %v806, %v803
          %v1397 = vpack.c.bf16 %v814, %v811
          %v1398 = vpack.c.bf16 %v822, %v819
          %v1399 = vpack.c.bf16 %v830, %v827
          %v1400 = vpack.c.bf16 %v838, %v835
          %v1401 = vpack.c.bf16 %v846, %v843
          %v1402 = vpack.c.bf16 %v854, %v851
          %v1403 = vpack.c.bf16 %v862, %v859
          %v1404 = vpack.c.bf16 %v870, %v867
          %v1405 = vpack.c.bf16 %v878, %v875
          %v1406 = vpack.c.bf16 %v886, %v883
          %v1407 = vpack.c.bf16 %v894, %v891
          %v1408 = vpack.c.bf16 %v902, %v899
          %v1409 = vpack.c.bf16 %v910, %v907
          %v1410 = vpack.c.bf16 %v918, %v915
          %v1411 = vpack.c.bf16 %v926, %v923
          %v1412 = vpack.c.bf16 %v934, %v931
          %v1413 = vpack.c.bf16 %v942, %v939
          %v1414 = vpack.c.bf16 %v950, %v947
          %v1415 = vpack.c.bf16 %v958, %v955
          %v1416 = vpack.c.bf16 %v966, %v963
          %v1417 = vpack.c.bf16 %v974, %v971
          %1418 = vst [vmem:[#allocation2] sm:$0xff] %v1394
          %1419 = vst [vmem:[#allocation2 + $0x10] sm:$0xff] %v1395
          %1420 = vst [vmem:[#allocation2 + $0x20] sm:$0xff] %v1396
          %1421 = vst [vmem:[#allocation2 + $0x30] sm:$0xff] %v1397
          %1422 = vst [vmem:[#allocation2 + $0x40] sm:$0xff] %v1398
          %1423 = vst [vmem:[#allocation2 + $0x50] sm:$0xff] %v1399
          %1424 = vst [vmem:[#allocation2 + $0x60] sm:$0xff] %v1400
          %1425 = vst [vmem:[#allocation2 + $0x70] sm:$0xff] %v1401
          %1426 = vst [vmem:[#allocation2 + $0x80] sm:$0xff] %v1402
          %1427 = vst [vmem:[#allocation2 + $0x90] sm:$0xff] %v1403
          %1428 = vst [vmem:[#allocation2 + $0xa0] sm:$0xff] %v1404
          %1429 = vst [vmem:[#allocation2 + $0xb0] sm:$0xff] %v1405
          %1430 = vst [vmem:[#allocation2 + $0xc0] sm:$0xff] %v1406
          %1431 = vst [vmem:[#allocation2 + $0xd0] sm:$0xff] %v1407
          %1432 = vst [vmem:[#allocation2 + $0xe0] sm:$0xff] %v1408
          %1433 = vst [vmem:[#allocation2 + $0xf0] sm:$0xff] %v1409
          %1434 = vst [vmem:[#allocation2 + $0x100] sm:$0xff] %v1410
          %1435 = vst [vmem:[#allocation2 + $0x110] sm:$0xff] %v1411
          %1436 = vst [vmem:[#allocation2 + $0x120] sm:$0xff] %v1412
          %1437 = vst [vmem:[#allocation2 + $0x130] sm:$0xff] %v1413
          %1438 = vst [vmem:[#allocation2 + $0x140] sm:$0xff] %v1414
          %1439 = vst [vmem:[#allocation2 + $0x150] sm:$0xff] %v1415
          %1440 = vst [vmem:[#allocation2 + $0x160] sm:$0xff] %v1416
          %1441 = vst [vmem:[#allocation2 + $0x170] sm:$0xff] %v1417
          %v1442 = vpack.c.bf16 %v1207, %v1204
          %v1443 = vpack.c.bf16 %v1215, %v1212
          %v1444 = vpack.c.bf16 %v1223, %v1220
          %v1445 = vpack.c.bf16 %v1231, %v1228
          %v1446 = vpack.c.bf16 %v1239, %v1236
          %v1447 = vpack.c.bf16 %v1247, %v1244
          %v1448 = vpack.c.bf16 %v1255, %v1252
          %v1449 = vpack.c.bf16 %v1263, %v1260
          %v1450 = vpack.c.bf16 %v1271, %v1268
          %v1451 = vpack.c.bf16 %v1279, %v1276
          %v1452 = vpack.c.bf16 %v1287, %v1284
          %v1453 = vpack.c.bf16 %v1295, %v1292
          %v1454 = vpack.c.bf16 %v1303, %v1300
          %v1455 = vpack.c.bf16 %v1311, %v1308
          %v1456 = vpack.c.bf16 %v1319, %v1316
          %v1457 = vpack.c.bf16 %v1327, %v1324
          %v1458 = vpack.c.bf16 %v1335, %v1332
          %v1459 = vpack.c.bf16 %v1343, %v1340
          %v1460 = vpack.c.bf16 %v1351, %v1348
          %v1461 = vpack.c.bf16 %v1359, %v1356
          %v1462 = vpack.c.bf16 %v1367, %v1364
          %v1463 = vpack.c.bf16 %v1375, %v1372
          %v1464 = vpack.c.bf16 %v1383, %v1380
          %v1465 = vpack.c.bf16 %v1391, %v1388
          %1466 = vst [vmem:[#allocation2 + $0x8] sm:$0xff] %v1442
          %1467 = vst [vmem:[#allocation2 + $0x18] sm:$0xff] %v1443
          %1468 = vst [vmem:[#allocation2 + $0x28] sm:$0xff] %v1444
          %1469 = vst [vmem:[#allocation2 + $0x38] sm:$0xff] %v1445
          %1470 = vst [vmem:[#allocation2 + $0x48] sm:$0xff] %v1446
          %1471 = vst [vmem:[#allocation2 + $0x58] sm:$0xff] %v1447
          %1472 = vst [vmem:[#allocation2 + $0x68] sm:$0xff] %v1448
          %1473 = vst [vmem:[#allocation2 + $0x78] sm:$0xff] %v1449
          %1474 = vst [vmem:[#allocation2 + $0x88] sm:$0xff] %v1450
          %1475 = vst [vmem:[#allocation2 + $0x98] sm:$0xff] %v1451
          %1476 = vst [vmem:[#allocation2 + $0xa8] sm:$0xff] %v1452
          %1477 = vst [vmem:[#allocation2 + $0xb8] sm:$0xff] %v1453
          %1478 = vst [vmem:[#allocation2 + $0xc8] sm:$0xff] %v1454
          %1479 = vst [vmem:[#allocation2 + $0xd8] sm:$0xff] %v1455
          %1480 = vst [vmem:[#allocation2 + $0xe8] sm:$0xff] %v1456
          %1481 = vst [vmem:[#allocation2 + $0xf8] sm:$0xff] %v1457
          %1482 = vst [vmem:[#allocation2 + $0x108] sm:$0xff] %v1458
          %1483 = vst [vmem:[#allocation2 + $0x118] sm:$0xff] %v1459
          %1484 = vst [vmem:[#allocation2 + $0x128] sm:$0xff] %v1460
          %1485 = vst [vmem:[#allocation2 + $0x138] sm:$0xff] %v1461
          %1486 = vst [vmem:[#allocation2 + $0x148] sm:$0xff] %v1462
          %1487 = vst [vmem:[#allocation2 + $0x158] sm:$0xff] %v1463
          %1488 = vst [vmem:[#allocation2 + $0x168] sm:$0xff] %v1464
          %1489 = vst [vmem:[#allocation2 + $0x178] sm:$0xff] %v1465
        $region84: #{tpu_custom_call.1} parent=51 // pred_fallthru
          _
        %s1490 = smul.u32 %s39, 384
        %v1491 = vld [vmem:[%s426] sm:$0xff]
        %v1492 = vld [vmem:[%s426 + $0x8] sm:$0xf]
        %v1493 = vld [vmem:[%s426 + $0xc] sm:$0xff]
        %v1494 = vld [vmem:[%s426 + $0x14] sm:$0xf]
        %v1495 = vld [vmem:[%s426 + $0x18] sm:$0xff]
        %v1496 = vld [vmem:[%s426 + $0x20] sm:$0xf]
        %v1497 = vld [vmem:[%s426 + $0x24] sm:$0xff]
        %v1498 = vld [vmem:[%s426 + $0x2c] sm:$0xf]
        %v1499 = vld [vmem:[%s426 + $0x30] sm:$0xff]
        %v1500 = vld [vmem:[%s426 + $0x38] sm:$0xf]
        %v1501 = vld [vmem:[%s426 + $0x3c] sm:$0xff]
        %v1502 = vld [vmem:[%s426 + $0x44] sm:$0xf]
        %v1503 = vld [vmem:[%s426 + $0x48] sm:$0xff]
        %v1504 = vld [vmem:[%s426 + $0x50] sm:$0xf]
        %v1505 = vld [vmem:[%s426 + $0x54] sm:$0xff]
        %v1506 = vld [vmem:[%s426 + $0x5c] sm:$0xf]
        %v1507 = vld [vmem:[%s426 + $0x60] sm:$0xff]
        %v1508 = vld [vmem:[%s426 + $0x68] sm:$0xf]
        %v1509 = vld [vmem:[%s426 + $0x6c] sm:$0xff]
        %v1510 = vld [vmem:[%s426 + $0x74] sm:$0xf]
        %v1511 = vld [vmem:[%s426 + $0x78] sm:$0xff]
        %v1512 = vld [vmem:[%s426 + $0x80] sm:$0xf]
        %v1513 = vld [vmem:[%s426 + $0x84] sm:$0xff]
        %v1514 = vld [vmem:[%s426 + $0x8c] sm:$0xf]
        %v1515 = vld [vmem:[%s426 + $0x90] sm:$0xff]
        %v1516 = vld [vmem:[%s426 + $0x98] sm:$0xf]
        %v1517 = vld [vmem:[%s426 + $0x9c] sm:$0xff]
        %v1518 = vld [vmem:[%s426 + $0xa4] sm:$0xf]
        %v1519 = vld [vmem:[%s426 + $0xa8] sm:$0xff]
        %v1520 = vld [vmem:[%s426 + $0xb0] sm:$0xf]
        %v1521 = vld [vmem:[%s426 + $0xb4] sm:$0xff]
        %v1522 = vld [vmem:[%s426 + $0xbc] sm:$0xf]
        %v1523 = vld [vmem:[%s426 + $0xc0] sm:$0xff]
        %v1524 = vld [vmem:[%s426 + $0xc8] sm:$0xf]
        %v1525 = vld [vmem:[%s426 + $0xcc] sm:$0xff]
        %v1526 = vld [vmem:[%s426 + $0xd4] sm:$0xf]
        %v1527 = vld [vmem:[%s426 + $0xd8] sm:$0xff]
        %v1528 = vld [vmem:[%s426 + $0xe0] sm:$0xf]
        %v1529 = vld [vmem:[%s426 + $0xe4] sm:$0xff]
        %v1530 = vld [vmem:[%s426 + $0xec] sm:$0xf]
        %v1531 = vld [vmem:[%s426 + $0xf0] sm:$0xff]
        %v1532 = vld [vmem:[%s426 + $0xf8] sm:$0xf]
        %v1533 = vld [vmem:[%s426 + $0xfc] sm:$0xff]
        %v1534 = vld [vmem:[%s426 + $0x104] sm:$0xf]
        %v1535 = vld [vmem:[%s426 + $0x108] sm:$0xff]
        %v1536 = vld [vmem:[%s426 + $0x110] sm:$0xf]
        %v1537 = vld [vmem:[%s426 + $0x114] sm:$0xff]
        %v1538 = vld [vmem:[%s426 + $0x11c] sm:$0xf]
        %v1539 = vld [vmem:[%s426 + $0x120] sm:$0xff]
        %v1540 = vld [vmem:[%s426 + $0x128] sm:$0xf]
        %v1541 = vld [vmem:[%s426 + $0x12c] sm:$0xff]
        %v1542 = vld [vmem:[%s426 + $0x134] sm:$0xf]
        %v1543 = vld [vmem:[%s426 + $0x138] sm:$0xff]
        %v1544 = vld [vmem:[%s426 + $0x140] sm:$0xf]
        %v1545 = vld [vmem:[%s426 + $0x144] sm:$0xff]
        %v1546 = vld [vmem:[%s426 + $0x14c] sm:$0xf]
        %v1547 = vld [vmem:[%s426 + $0x150] sm:$0xff]
        %v1548 = vld [vmem:[%s426 + $0x158] sm:$0xf]
        %v1549 = vld [vmem:[%s426 + $0x15c] sm:$0xff]
        %v1550 = vld [vmem:[%s426 + $0x164] sm:$0xf]
        %v1551 = vld [vmem:[%s426 + $0x168] sm:$0xff]
        %v1552 = vld [vmem:[%s426 + $0x170] sm:$0xf]
        %v1553 = vld [vmem:[%s426 + $0x174] sm:$0xff]
        %v1554 = vld [vmem:[%s426 + $0x17c] sm:$0xf]
        %v1555 = vld [vmem:[%s426 + $0x180] sm:$0xff]
        %v1556 = vld [vmem:[%s426 + $0x188] sm:$0xf]
        %v1557 = vld [vmem:[%s426 + $0x18c] sm:$0xff]
        %v1558 = vld [vmem:[%s426 + $0x194] sm:$0xf]
        %v1559 = vld [vmem:[%s426 + $0x198] sm:$0xff]
        %v1560 = vld [vmem:[%s426 + $0x1a0] sm:$0xf]
        %v1561 = vld [vmem:[%s426 + $0x1a4] sm:$0xff]
        %v1562 = vld [vmem:[%s426 + $0x1ac] sm:$0xf]
        %v1563 = vld [vmem:[%s426 + $0x1b0] sm:$0xff]
        %v1564 = vld [vmem:[%s426 + $0x1b8] sm:$0xf]
        %v1565 = vld [vmem:[%s426 + $0x1bc] sm:$0xff]
        %v1566 = vld [vmem:[%s426 + $0x1c4] sm:$0xf]
        %v1567 = vld [vmem:[%s426 + $0x1c8] sm:$0xff]
        %v1568 = vld [vmem:[%s426 + $0x1d0] sm:$0xf]
        %v1569 = vld [vmem:[%s426 + $0x1d4] sm:$0xff]
        %v1570 = vld [vmem:[%s426 + $0x1dc] sm:$0xf]
        %v1571 = vld [vmem:[%s426 + $0x1e0] sm:$0xff]
        %v1572 = vld [vmem:[%s426 + $0x1e8] sm:$0xf]
        %v1573 = vld [vmem:[%s426 + $0x1ec] sm:$0xff]
        %v1574 = vld [vmem:[%s426 + $0x1f4] sm:$0xf]
        %v1575 = vld [vmem:[%s426 + $0x1f8] sm:$0xff]
        %v1576 = vld [vmem:[%s426 + $0x200] sm:$0xf]
        %v1577 = vld [vmem:[%s426 + $0x204] sm:$0xff]
        %v1578 = vld [vmem:[%s426 + $0x20c] sm:$0xf]
        %v1579 = vld [vmem:[%s426 + $0x210] sm:$0xff]
        %v1580 = vld [vmem:[%s426 + $0x218] sm:$0xf]
        %v1581 = vld [vmem:[%s426 + $0x21c] sm:$0xff]
        %v1582 = vld [vmem:[%s426 + $0x224] sm:$0xf]
        %v1583 = vld [vmem:[%s426 + $0x228] sm:$0xff]
        %v1584 = vld [vmem:[%s426 + $0x230] sm:$0xf]
        %v1585 = vld [vmem:[%s426 + $0x234] sm:$0xff]
        %v1586 = vld [vmem:[%s426 + $0x23c] sm:$0xf]
        %v1587 = vld [vmem:[#allocation2] sm:$0xff]
        %v1588 = vld [vmem:[#allocation2 + $0x8] sm:$0xff]
        %v1589 = vld [vmem:[#allocation2 + $0x10] sm:$0xff]
        %v1590 = vld [vmem:[#allocation2 + $0x18] sm:$0xff]
        %v1591 = vld [vmem:[#allocation2 + $0x20] sm:$0xff]
        %v1592 = vld [vmem:[#allocation2 + $0x28] sm:$0xff]
        %v1593 = vld [vmem:[#allocation2 + $0x30] sm:$0xff]
        %v1594 = vld [vmem:[#allocation2 + $0x38] sm:$0xff]
        %v1595 = vld [vmem:[#allocation2 + $0x40] sm:$0xff]
        %v1596 = vld [vmem:[#allocation2 + $0x48] sm:$0xff]
        %v1597 = vld [vmem:[#allocation2 + $0x50] sm:$0xff]
        %v1598 = vld [vmem:[#allocation2 + $0x58] sm:$0xff]
        %v1599 = vld [vmem:[#allocation2 + $0x60] sm:$0xff]
        %v1600 = vld [vmem:[#allocation2 + $0x68] sm:$0xff]
        %v1601 = vld [vmem:[#allocation2 + $0x70] sm:$0xff]
        %v1602 = vld [vmem:[#allocation2 + $0x78] sm:$0xff]
        %v1603 = vld [vmem:[#allocation2 + $0x80] sm:$0xff]
        %v1604 = vld [vmem:[#allocation2 + $0x88] sm:$0xff]
        %v1605 = vld [vmem:[#allocation2 + $0x90] sm:$0xff]
        %v1606 = vld [vmem:[#allocation2 + $0x98] sm:$0xff]
        %v1607 = vld [vmem:[#allocation2 + $0xa0] sm:$0xff]
        %v1608 = vld [vmem:[#allocation2 + $0xa8] sm:$0xff]
        %v1609 = vld [vmem:[#allocation2 + $0xb0] sm:$0xff]
        %v1610 = vld [vmem:[#allocation2 + $0xb8] sm:$0xff]
        %v1611 = vld [vmem:[#allocation2 + $0xc0] sm:$0xff]
        %v1612 = vld [vmem:[#allocation2 + $0xc8] sm:$0xff]
        %v1613 = vld [vmem:[#allocation2 + $0xd0] sm:$0xff]
        %v1614 = vld [vmem:[#allocation2 + $0xd8] sm:$0xff]
        %v1615 = vld [vmem:[#allocation2 + $0xe0] sm:$0xff]
        %v1616 = vld [vmem:[#allocation2 + $0xe8] sm:$0xff]
        %v1617 = vld [vmem:[#allocation2 + $0xf0] sm:$0xff]
        %v1618 = vld [vmem:[#allocation2 + $0xf8] sm:$0xff]
        %v1619 = vld [vmem:[#allocation2 + $0x100] sm:$0xff]
        %v1620 = vld [vmem:[#allocation2 + $0x108] sm:$0xff]
        %v1621 = vld [vmem:[#allocation2 + $0x110] sm:$0xff]
        %v1622 = vld [vmem:[#allocation2 + $0x118] sm:$0xff]
        %v1623 = vld [vmem:[#allocation2 + $0x120] sm:$0xff]
        %v1624 = vld [vmem:[#allocation2 + $0x128] sm:$0xff]
        %v1625 = vld [vmem:[#allocation2 + $0x130] sm:$0xff]
        %v1626 = vld [vmem:[#allocation2 + $0x138] sm:$0xff]
        %v1627 = vld [vmem:[#allocation2 + $0x140] sm:$0xff]
        %v1628 = vld [vmem:[#allocation2 + $0x148] sm:$0xff]
        %v1629 = vld [vmem:[#allocation2 + $0x150] sm:$0xff]
        %v1630 = vld [vmem:[#allocation2 + $0x158] sm:$0xff]
        %v1631 = vld [vmem:[#allocation2 + $0x160] sm:$0xff]
        %v1632 = vld [vmem:[#allocation2 + $0x168] sm:$0xff]
        %v1633 = vld [vmem:[#allocation2 + $0x170] sm:$0xff]
        %v1634 = vld [vmem:[#allocation2 + $0x178] sm:$0xff]
        %v1731 = vunpack.c.l.b16 %v1491
        %v1732 = vunpack.c.h.b16 %v1491
        %v1733 = vunpack.c.l.b16 %v1492
        %v1734 = vunpack.c.l.b16 %v1493
        %v1735 = vunpack.c.h.b16 %v1493
        %v1736 = vunpack.c.l.b16 %v1494
        %v1737 = vunpack.c.l.b16 %v1495
        %v1738 = vunpack.c.h.b16 %v1495
        %v1739 = vunpack.c.l.b16 %v1496
        %v1740 = vunpack.c.l.b16 %v1497
        %v1741 = vunpack.c.h.b16 %v1497
        %v1742 = vunpack.c.l.b16 %v1498
        %v1743 = vunpack.c.l.b16 %v1499
        %v1744 = vunpack.c.h.b16 %v1499
        %v1745 = vunpack.c.l.b16 %v1500
        %v1746 = vunpack.c.l.b16 %v1501
        %v1747 = vunpack.c.h.b16 %v1501
        %v1748 = vunpack.c.l.b16 %v1502
        %v1749 = vunpack.c.l.b16 %v1503
        %v1750 = vunpack.c.h.b16 %v1503
        %v1751 = vunpack.c.l.b16 %v1504
        %v1752 = vunpack.c.l.b16 %v1505
        %v1753 = vunpack.c.h.b16 %v1505
        %v1754 = vunpack.c.l.b16 %v1506
        %v1755 = vunpack.c.l.b16 %v1507
        %v1756 = vunpack.c.h.b16 %v1507
        %v1757 = vunpack.c.l.b16 %v1508
        %v1758 = vunpack.c.l.b16 %v1509
        %v1759 = vunpack.c.h.b16 %v1509
        %v1760 = vunpack.c.l.b16 %v1510
        %v1761 = vunpack.c.l.b16 %v1511
        %v1762 = vunpack.c.h.b16 %v1511
        %v1763 = vunpack.c.l.b16 %v1512
        %v1764 = vunpack.c.l.b16 %v1513
        %v1765 = vunpack.c.h.b16 %v1513
        %v1766 = vunpack.c.l.b16 %v1514
        %v1767 = vunpack.c.l.b16 %v1515
        %v1768 = vunpack.c.h.b16 %v1515
        %v1769 = vunpack.c.l.b16 %v1516
        %v1770 = vunpack.c.l.b16 %v1517
        %v1771 = vunpack.c.h.b16 %v1517
        %v1772 = vunpack.c.l.b16 %v1518
        %v1773 = vunpack.c.l.b16 %v1519
        %v1774 = vunpack.c.h.b16 %v1519
        %v1775 = vunpack.c.l.b16 %v1520
        %v1776 = vunpack.c.l.b16 %v1521
        %v1777 = vunpack.c.h.b16 %v1521
        %v1778 = vunpack.c.l.b16 %v1522
        %v1779 = vunpack.c.l.b16 %v1523
        %v1780 = vunpack.c.h.b16 %v1523
        %v1781 = vunpack.c.l.b16 %v1524
        %v1782 = vunpack.c.l.b16 %v1525
        %v1783 = vunpack.c.h.b16 %v1525
        %v1784 = vunpack.c.l.b16 %v1526
        %v1785 = vunpack.c.l.b16 %v1527
        %v1786 = vunpack.c.h.b16 %v1527
        %v1787 = vunpack.c.l.b16 %v1528
        %v1788 = vunpack.c.l.b16 %v1529
        %v1789 = vunpack.c.h.b16 %v1529
        %v1790 = vunpack.c.l.b16 %v1530
        %v1791 = vunpack.c.l.b16 %v1531
        %v1792 = vunpack.c.h.b16 %v1531
        %v1793 = vunpack.c.l.b16 %v1532
        %v1794 = vunpack.c.l.b16 %v1533
        %v1795 = vunpack.c.h.b16 %v1533
        %v1796 = vunpack.c.l.b16 %v1534
        %v1797 = vunpack.c.l.b16 %v1535
        %v1798 = vunpack.c.h.b16 %v1535
        %v1799 = vunpack.c.l.b16 %v1536
        %v1800 = vunpack.c.l.b16 %v1537
        %v1801 = vunpack.c.h.b16 %v1537
        %v1802 = vunpack.c.l.b16 %v1538
        %v1803 = vunpack.c.l.b16 %v1539
        %v1804 = vunpack.c.h.b16 %v1539
        %v1805 = vunpack.c.l.b16 %v1540
        %v1806 = vunpack.c.l.b16 %v1541
        %v1807 = vunpack.c.h.b16 %v1541
        %v1808 = vunpack.c.l.b16 %v1542
        %v1809 = vunpack.c.l.b16 %v1543
        %v1810 = vunpack.c.h.b16 %v1543
        %v1811 = vunpack.c.l.b16 %v1544
        %v1812 = vunpack.c.l.b16 %v1545
        %v1813 = vunpack.c.h.b16 %v1545
        %v1814 = vunpack.c.l.b16 %v1546
        %v1815 = vunpack.c.l.b16 %v1547
        %v1816 = vunpack.c.h.b16 %v1547
        %v1817 = vunpack.c.l.b16 %v1548
        %v1818 = vunpack.c.l.b16 %v1549
        %v1819 = vunpack.c.h.b16 %v1549
        %v1820 = vunpack.c.l.b16 %v1550
        %v1821 = vunpack.c.l.b16 %v1551
        %v1822 = vunpack.c.h.b16 %v1551
        %v1823 = vunpack.c.l.b16 %v1552
        %v1824 = vunpack.c.l.b16 %v1553
        %v1825 = vunpack.c.h.b16 %v1553
        %v1826 = vunpack.c.l.b16 %v1554
        %v1827 = vunpack.c.l.b16 %v1555
        %v1828 = vunpack.c.h.b16 %v1555
        %v1829 = vunpack.c.l.b16 %v1556
        %v1830 = vunpack.c.l.b16 %v1557
        %v1831 = vunpack.c.h.b16 %v1557
        %v1832 = vunpack.c.l.b16 %v1558
        %v1833 = vunpack.c.l.b16 %v1559
        %v1834 = vunpack.c.h.b16 %v1559
        %v1835 = vunpack.c.l.b16 %v1560
        %v1836 = vunpack.c.l.b16 %v1561
        %v1837 = vunpack.c.h.b16 %v1561
        %v1838 = vunpack.c.l.b16 %v1562
        %v1839 = vunpack.c.l.b16 %v1563
        %v1840 = vunpack.c.h.b16 %v1563
        %v1841 = vunpack.c.l.b16 %v1564
        %v1842 = vunpack.c.l.b16 %v1565
        %v1843 = vunpack.c.h.b16 %v1565
        %v1844 = vunpack.c.l.b16 %v1566
        %v1845 = vunpack.c.l.b16 %v1567
        %v1846 = vunpack.c.h.b16 %v1567
        %v1847 = vunpack.c.l.b16 %v1568
        %v1848 = vunpack.c.l.b16 %v1569
        %v1849 = vunpack.c.h.b16 %v1569
        %v1850 = vunpack.c.l.b16 %v1570
        %v1851 = vunpack.c.l.b16 %v1571
        %v1852 = vunpack.c.h.b16 %v1571
        %v1853 = vunpack.c.l.b16 %v1572
        %v1854 = vunpack.c.l.b16 %v1573
        %v1855 = vunpack.c.h.b16 %v1573
        %v1856 = vunpack.c.l.b16 %v1574
        %v1857 = vunpack.c.l.b16 %v1575
        %v1858 = vunpack.c.h.b16 %v1575
        %v1859 = vunpack.c.l.b16 %v1576
        %v1860 = vunpack.c.l.b16 %v1577
        %v1861 = vunpack.c.h.b16 %v1577
        %v1862 = vunpack.c.l.b16 %v1578
        %v1863 = vunpack.c.l.b16 %v1579
        %v1864 = vunpack.c.h.b16 %v1579
        %v1865 = vunpack.c.l.b16 %v1580
        %v1866 = vunpack.c.l.b16 %v1581
        %v1867 = vunpack.c.h.b16 %v1581
        %v1868 = vunpack.c.l.b16 %v1582
        %v1869 = vunpack.c.l.b16 %v1583
        %v1870 = vunpack.c.h.b16 %v1583
        %v1871 = vunpack.c.l.b16 %v1584
        %v1872 = vunpack.c.l.b16 %v1585
        %v1873 = vunpack.c.h.b16 %v1585
        %v1874 = vunpack.c.l.b16 %v1586
        %v1875 = vpack.c.b16 %v1734, %v1731
        %v1876 = vpack.c.b16 %v1735, %v1732
        %v1877 = vpack.c.b16 %v1736, %v1733
        %v1878 = vpack.c.b16 %v1740, %v1737
        %v1879 = vpack.c.b16 %v1741, %v1738
        %v1880 = vpack.c.b16 %v1742, %v1739
        %v1881 = vpack.c.b16 %v1746, %v1743
        %v1882 = vpack.c.b16 %v1747, %v1744
        %v1883 = vpack.c.b16 %v1748, %v1745
        %v1884 = vpack.c.b16 %v1752, %v1749
        %v1885 = vpack.c.b16 %v1753, %v1750
        %v1886 = vpack.c.b16 %v1754, %v1751
        %v1887 = vpack.c.b16 %v1758, %v1755
        %v1888 = vpack.c.b16 %v1759, %v1756
        %v1889 = vpack.c.b16 %v1760, %v1757
        %v1890 = vpack.c.b16 %v1764, %v1761
        %v1891 = vpack.c.b16 %v1765, %v1762
        %v1892 = vpack.c.b16 %v1766, %v1763
        %v1893 = vpack.c.b16 %v1770, %v1767
        %v1894 = vpack.c.b16 %v1771, %v1768
        %v1895 = vpack.c.b16 %v1772, %v1769
        %v1896 = vpack.c.b16 %v1776, %v1773
        %v1897 = vpack.c.b16 %v1777, %v1774
        %v1898 = vpack.c.b16 %v1778, %v1775
        %v1899 = vpack.c.b16 %v1782, %v1779
        %v1900 = vpack.c.b16 %v1783, %v1780
        %v1901 = vpack.c.b16 %v1784, %v1781
        %v1902 = vpack.c.b16 %v1788, %v1785
        %v1903 = vpack.c.b16 %v1789, %v1786
        %v1904 = vpack.c.b16 %v1790, %v1787
        %v1905 = vpack.c.b16 %v1794, %v1791
        %v1906 = vpack.c.b16 %v1795, %v1792
        %v1907 = vpack.c.b16 %v1796, %v1793
        %v1908 = vpack.c.b16 %v1800, %v1797
        %v1909 = vpack.c.b16 %v1801, %v1798
        %v1910 = vpack.c.b16 %v1802, %v1799
        %v1911 = vpack.c.b16 %v1806, %v1803
        %v1912 = vpack.c.b16 %v1807, %v1804
        %v1913 = vpack.c.b16 %v1808, %v1805
        %v1914 = vpack.c.b16 %v1812, %v1809
        %v1915 = vpack.c.b16 %v1813, %v1810
        %v1916 = vpack.c.b16 %v1814, %v1811
        %v1917 = vpack.c.b16 %v1818, %v1815
        %v1918 = vpack.c.b16 %v1819, %v1816
        %v1919 = vpack.c.b16 %v1820, %v1817
        %v1920 = vpack.c.b16 %v1824, %v1821
        %v1921 = vpack.c.b16 %v1825, %v1822
        %v1922 = vpack.c.b16 %v1826, %v1823
        %v1923 = vpack.c.b16 %v1830, %v1827
        %v1924 = vpack.c.b16 %v1831, %v1828
        %v1925 = vpack.c.b16 %v1832, %v1829
        %v1926 = vpack.c.b16 %v1836, %v1833
        %v1927 = vpack.c.b16 %v1837, %v1834
        %v1928 = vpack.c.b16 %v1838, %v1835
        %v1929 = vpack.c.b16 %v1842, %v1839
        %v1930 = vpack.c.b16 %v1843, %v1840
        %v1931 = vpack.c.b16 %v1844, %v1841
        %v1932 = vpack.c.b16 %v1848, %v1845
        %v1933 = vpack.c.b16 %v1849, %v1846
        %v1934 = vpack.c.b16 %v1850, %v1847
        %v1935 = vpack.c.b16 %v1854, %v1851
        %v1936 = vpack.c.b16 %v1855, %v1852
        %v1937 = vpack.c.b16 %v1856, %v1853
        %v1938 = vpack.c.b16 %v1860, %v1857
        %v1939 = vpack.c.b16 %v1861, %v1858
        %v1940 = vpack.c.b16 %v1862, %v1859
        %v1941 = vpack.c.b16 %v1866, %v1863
        %v1942 = vpack.c.b16 %v1867, %v1864
        %v1943 = vpack.c.b16 %v1868, %v1865
        %v1944 = vpack.c.b16 %v1872, %v1869
        %v1945 = vpack.c.b16 %v1873, %v1870
        %v1946 = vpack.c.b16 %v1874, %v1871
        %2019 = vmatprep.subr.bf16.mxu0 %v1588
        %2020 = vmatpush1.bf16.msra.mxu0 %v1587
        %2021 = vmatprep.subr.bf16.mxu0 %v1590
        %2022 = vmatpush1.bf16.msra.mxu0 %v1589
        %2023 = vmatprep.subr.bf16.mxu0 %v1592
        %2024 = vmatpush1.bf16.msra.mxu0 %v1591
        %2025 = vmatprep.subr.bf16.mxu0 %v1594
        %2026 = vmatpush1.bf16.msra.mxu0 %v1593
        %2027 = vmatprep.subr.bf16.mxu0 %v1596
        %2028 = vmatpush1.bf16.msra.mxu0 %v1595
        %2029 = vmatprep.subr.bf16.mxu0 %v1598
        %2030 = vmatpush1.bf16.msra.mxu0 %v1597
        %2031 = vmatprep.subr.bf16.mxu0 %v1600
        %2032 = vmatpush1.bf16.msra.mxu0 %v1599
        %2033 = vmatprep.subr.bf16.mxu0 %v1602
        %2034 = vmatpush1.bf16.msra.mxu0 %v1601
        %2035 = vmatprep.subr.bf16.mxu0 %v1604
        %2036 = vmatpush1.bf16.msra.mxu0 %v1603
        %2037 = vmatprep.subr.bf16.mxu0 %v1606
        %2038 = vmatpush1.bf16.msra.mxu0 %v1605
        %2039 = vmatprep.subr.bf16.mxu0 %v1608
        %2040 = vmatpush1.bf16.msra.mxu0 %v1607
        %2041 = vmatprep.subr.bf16.mxu0 %v1610
        %2042 = vmatpush1.bf16.msra.mxu0 %v1609
        %2043 = vmatprep.subr.bf16.mxu0 %v1612
        %2044 = vmatpush1.bf16.msra.mxu0 %v1611
        %2045 = vmatprep.subr.bf16.mxu0 %v1614
        %2046 = vmatpush1.bf16.msra.mxu0 %v1613
        %2047 = vmatprep.subr.bf16.mxu0 %v1616
        %2048 = vmatpush1.bf16.msra.mxu0 %v1615
        %2049 = vmatprep.subr.bf16.mxu0 %v1618
        %2050 = vmatpush1.bf16.msra.mxu0 %v1617
        %2051 = vmatprep.mubr.bf16.mxu0 %v1876
        %2052 = vmatmul.mubr.bf16.gmra.mrb[0].mxu0 %v1875
        %v2053 = vpop.f32.mrb[0].mxu0
        %v2054 = vadd.f32 0.0, %v2053
        %v2055 = vpop.f32.mrb[0].mxu0
        %v2056 = vadd.f32 0.0, %v2055
        %v2057 = vpop.f32.mrb[0].mxu0
        %v2058 = vadd.f32 0.0, %v2057
        %v2059 = vpop.f32.mrb[0].mxu0
        %v2060 = vadd.f32 0.0, %v2059
        %2061 = vmatprep.mubr.bf16.mxu0 %v1879
        %2062 = vmatmul.mubr.bf16.gmra.mrb[0].mxu0 %v1878
        %v2063 = vpop.f32.mrb[0].mxu0
        %v2064 = vadd.f32 0.0, %v2063
        %v2065 = vpop.f32.mrb[0].mxu0
        %v2066 = vadd.f32 0.0, %v2065
        %v2067 = vpop.f32.mrb[0].mxu0
        %v2068 = vadd.f32 0.0, %v2067
        %v2069 = vpop.f32.mrb[0].mxu0
        %v2070 = vadd.f32 0.0, %v2069
        %2071 = vmatprep.mubr.bf16.mxu0 %v1882
        %2072 = vmatmul.mubr.bf16.gmra.mrb[0].mxu0 %v1881
        %v2073 = vpop.f32.mrb[0].mxu0
        %v2074 = vadd.f32 0.0, %v2073
        %v2075 = vpop.f32.mrb[0].mxu0
        %v2076 = vadd.f32 0.0, %v2075
        %v2077 = vpop.f32.mrb[0].mxu0
        %v2078 = vadd.f32 0.0, %v2077
        %v2079 = vpop.f32.mrb[0].mxu0
        %v2080 = vadd.f32 0.0, %v2079
        %2081 = vmatprep.mubr.bf16.mxu0 %v1885
        %2082 = vmatmul.mubr.bf16.gmra.mrb[0].mxu0 %v1884
        %v2083 = vpop.f32.mrb[0].mxu0
        %v2084 = vadd.f32 0.0, %v2083
        %v2085 = vpop.f32.mrb[0].mxu0
        %v2086 = vadd.f32 0.0, %v2085
        %v2087 = vpop.f32.mrb[0].mxu0
        %v2088 = vadd.f32 0.0, %v2087
        %v2089 = vpop.f32.mrb[0].mxu0
        %v2090 = vadd.f32 0.0, %v2089
        %2091 = vmatprep.mubr.bf16.mxu0 %v1888
        %2092 = vmatmul.mubr.bf16.gmra.mrb[0].mxu0 %v1887
        %v2093 = vpop.f32.mrb[0].mxu0
        %v2094 = vadd.f32 0.0, %v2093
        %v2095 = vpop.f32.mrb[0].mxu0
        %v2096 = vadd.f32 0.0, %v2095
        %v2097 = vpop.f32.mrb[0].mxu0
        %v2098 = vadd.f32 0.0, %v2097
        %v2099 = vpop.f32.mrb[0].mxu0
        %v2100 = vadd.f32 0.0, %v2099
        %2101 = vmatprep.mubr.bf16.mxu0 %v1891
        %2102 = vmatmul.mubr.bf16.gmra.mrb[0].mxu0 %v1890
        %v2103 = vpop.f32.mrb[0].mxu0
        %v2104 = vadd.f32 0.0, %v2103
        %v2105 = vpop.f32.mrb[0].mxu0
        %v2106 = vadd.f32 0.0, %v2105
        %v2107 = vpop.f32.mrb[0].mxu0
        %v2108 = vadd.f32 0.0, %v2107
        %v2109 = vpop.f32.mrb[0].mxu0
        %v2110 = vadd.f32 0.0, %v2109
        %2111 = vmatprep.mubr.bf16.mxu0 %v1894
        %2112 = vmatmul.mubr.bf16.gmra.mrb[0].mxu0 %v1893
        %v2113 = vpop.f32.mrb[0].mxu0
        %v2114 = vadd.f32 0.0, %v2113
        %v2115 = vpop.f32.mrb[0].mxu0
        %v2116 = vadd.f32 0.0, %v2115
        %v2117 = vpop.f32.mrb[0].mxu0
        %v2118 = vadd.f32 0.0, %v2117
        %v2119 = vpop.f32.mrb[0].mxu0
        %v2120 = vadd.f32 0.0, %v2119
        %2121 = vmatprep.mubr.bf16.mxu0 %v1897
        %2122 = vmatmul.mubr.bf16.gmra.mrb[0].mxu0 %v1896
        %v2123 = vpop.f32.mrb[0].mxu0
        %v2124 = vadd.f32 0.0, %v2123
        %v2125 = vpop.f32.mrb[0].mxu0
        %v2126 = vadd.f32 0.0, %v2125
        %v2127 = vpop.f32.mrb[0].mxu0
        %v2128 = vadd.f32 0.0, %v2127
        %v2129 = vpop.f32.mrb[0].mxu0
        %v2130 = vadd.f32 0.0, %v2129
        %2131 = vmatprep.mubr.bf16.mxu0 %v1900
        %2132 = vmatmul.mubr.bf16.gmra.mrb[0].mxu0 %v1899
        %v2133 = vpop.f32.mrb[0].mxu0
        %v2134 = vadd.f32 0.0, %v2133
        %v2135 = vpop.f32.mrb[0].mxu0
        %v2136 = vadd.f32 0.0, %v2135
        %v2137 = vpop.f32.mrb[0].mxu0
        %v2138 = vadd.f32 0.0, %v2137
        %v2139 = vpop.f32.mrb[0].mxu0
        %v2140 = vadd.f32 0.0, %v2139
        %2141 = vmatprep.mubr.bf16.mxu0 %v1903
        %2142 = vmatmul.mubr.bf16.gmra.mrb[0].mxu0 %v1902
        %v2143 = vpop.f32.mrb[0].mxu0
        %v2144 = vadd.f32 0.0, %v2143
        %v2145 = vpop.f32.mrb[0].mxu0
        %v2146 = vadd.f32 0.0, %v2145
        %v2147 = vpop.f32.mrb[0].mxu0
        %v2148 = vadd.f32 0.0, %v2147
        %v2149 = vpop.f32.mrb[0].mxu0
        %v2150 = vadd.f32 0.0, %v2149
        %2151 = vmatprep.mubr.bf16.mxu0 %v1906
        %2152 = vmatmul.mubr.bf16.gmra.mrb[0].mxu0 %v1905
        %v2153 = vpop.f32.mrb[0].mxu0
        %v2154 = vadd.f32 0.0, %v2153
        %v2155 = vpop.f32.mrb[0].mxu0
        %v2156 = vadd.f32 0.0, %v2155
        %v2157 = vpop.f32.mrb[0].mxu0
        %v2158 = vadd.f32 0.0, %v2157
        %v2159 = vpop.f32.mrb[0].mxu0
        %v2160 = vadd.f32 0.0, %v2159
        %2161 = vmatprep.mubr.bf16.mxu0 %v1909
        %2162 = vmatmul.mubr.bf16.gmra.mrb[0].mxu0 %v1908
        %v2163 = vpop.f32.mrb[0].mxu0
        %v2164 = vadd.f32 0.0, %v2163
        %v2165 = vpop.f32.mrb[0].mxu0
        %v2166 = vadd.f32 0.0, %v2165
        %v2167 = vpop.f32.mrb[0].mxu0
        %v2168 = vadd.f32 0.0, %v2167
        %v2169 = vpop.f32.mrb[0].mxu0
        %v2170 = vadd.f32 0.0, %v2169
        %2171 = vmatprep.mubr.bf16.mxu0 %v1912
        %2172 = vmatmul.mubr.bf16.gmra.mrb[0].mxu0 %v1911
        %v2173 = vpop.f32.mrb[0].mxu0
        %v2174 = vadd.f32 0.0, %v2173
        %v2175 = vpop.f32.mrb[0].mxu0
        %v2176 = vadd.f32 0.0, %v2175
        %v2177 = vpop.f32.mrb[0].mxu0
        %v2178 = vadd.f32 0.0, %v2177
        %v2179 = vpop.f32.mrb[0].mxu0
        %v2180 = vadd.f32 0.0, %v2179
        %2181 = vmatprep.mubr.bf16.mxu0 %v1915
        %2182 = vmatmul.mubr.bf16.gmra.mrb[0].mxu0 %v1914
        %v2183 = vpop.f32.mrb[0].mxu0
        %v2184 = vadd.f32 0.0, %v2183
        %v2185 = vpop.f32.mrb[0].mxu0
        %v2186 = vadd.f32 0.0, %v2185
        %v2187 = vpop.f32.mrb[0].mxu0
        %v2188 = vadd.f32 0.0, %v2187
        %v2189 = vpop.f32.mrb[0].mxu0
        %v2190 = vadd.f32 0.0, %v2189
        %2191 = vmatprep.mubr.bf16.mxu0 %v1918
        %2192 = vmatmul.mubr.bf16.gmra.mrb[0].mxu0 %v1917
        %v2193 = vpop.f32.mrb[0].mxu0
        %v2194 = vadd.f32 0.0, %v2193
        %v2195 = vpop.f32.mrb[0].mxu0
        %v2196 = vadd.f32 0.0, %v2195
        %v2197 = vpop.f32.mrb[0].mxu0
        %v2198 = vadd.f32 0.0, %v2197
        %v2199 = vpop.f32.mrb[0].mxu0
        %v2200 = vadd.f32 0.0, %v2199
        %2201 = vmatprep.mubr.bf16.mxu0 %v1921
        %2202 = vmatmul.mubr.bf16.gmra.mrb[0].mxu0 %v1920
        %v2203 = vpop.f32.mrb[0].mxu0
        %v2204 = vadd.f32 0.0, %v2203
        %v2205 = vpop.f32.mrb[0].mxu0
        %v2206 = vadd.f32 0.0, %v2205
        %v2207 = vpop.f32.mrb[0].mxu0
        %v2208 = vadd.f32 0.0, %v2207
        %v2209 = vpop.f32.mrb[0].mxu0
        %v2210 = vadd.f32 0.0, %v2209
        %2211 = vmatprep.mubr.bf16.mxu0 %v1924
        %2212 = vmatmul.mubr.bf16.gmra.mrb[0].mxu0 %v1923
        %v2213 = vpop.f32.mrb[0].mxu0
        %v2214 = vadd.f32 0.0, %v2213
        %v2215 = vpop.f32.mrb[0].mxu0
        %v2216 = vadd.f32 0.0, %v2215
        %v2217 = vpop.f32.mrb[0].mxu0
        %v2218 = vadd.f32 0.0, %v2217
        %v2219 = vpop.f32.mrb[0].mxu0
        %v2220 = vadd.f32 0.0, %v2219
        %2221 = vmatprep.mubr.bf16.mxu0 %v1927
        %2222 = vmatmul.mubr.bf16.gmra.mrb[0].mxu0 %v1926
        %v2223 = vpop.f32.mrb[0].mxu0
        %v2224 = vadd.f32 0.0, %v2223
        %v2225 = vpop.f32.mrb[0].mxu0
        %v2226 = vadd.f32 0.0, %v2225
        %v2227 = vpop.f32.mrb[0].mxu0
        %v2228 = vadd.f32 0.0, %v2227
        %v2229 = vpop.f32.mrb[0].mxu0
        %v2230 = vadd.f32 0.0, %v2229
        %2231 = vmatprep.mubr.bf16.mxu0 %v1930
        %2232 = vmatmul.mubr.bf16.gmra.mrb[0].mxu0 %v1929
        %v2233 = vpop.f32.mrb[0].mxu0
        %v2234 = vadd.f32 0.0, %v2233
        %v2235 = vpop.f32.mrb[0].mxu0
        %v2236 = vadd.f32 0.0, %v2235
        %v2237 = vpop.f32.mrb[0].mxu0
        %v2238 = vadd.f32 0.0, %v2237
        %v2239 = vpop.f32.mrb[0].mxu0
        %v2240 = vadd.f32 0.0, %v2239
        %2241 = vmatprep.mubr.bf16.mxu0 %v1933
        %2242 = vmatmul.mubr.bf16.gmra.mrb[0].mxu0 %v1932
        %v2243 = vpop.f32.mrb[0].mxu0
        %v2244 = vadd.f32 0.0, %v2243
        %v2245 = vpop.f32.mrb[0].mxu0
        %v2246 = vadd.f32 0.0, %v2245
        %v2247 = vpop.f32.mrb[0].mxu0
        %v2248 = vadd.f32 0.0, %v2247
        %v2249 = vpop.f32.mrb[0].mxu0
        %v2250 = vadd.f32 0.0, %v2249
        %2251 = vmatprep.mubr.bf16.mxu0 %v1936
        %2252 = vmatmul.mubr.bf16.gmra.mrb[0].mxu0 %v1935
        %v2253 = vpop.f32.mrb[0].mxu0
        %v2254 = vadd.f32 0.0, %v2253
        %v2255 = vpop.f32.mrb[0].mxu0
        %v2256 = vadd.f32 0.0, %v2255
        %v2257 = vpop.f32.mrb[0].mxu0
        %v2258 = vadd.f32 0.0, %v2257
        %v2259 = vpop.f32.mrb[0].mxu0
        %v2260 = vadd.f32 0.0, %v2259
        %2261 = vmatprep.mubr.bf16.mxu0 %v1939
        %2262 = vmatmul.mubr.bf16.gmra.mrb[0].mxu0 %v1938
        %v2263 = vpop.f32.mrb[0].mxu0
        %v2264 = vadd.f32 0.0, %v2263
        %v2265 = vpop.f32.mrb[0].mxu0
        %v2266 = vadd.f32 0.0, %v2265
        %v2267 = vpop.f32.mrb[0].mxu0
        %v2268 = vadd.f32 0.0, %v2267
        %v2269 = vpop.f32.mrb[0].mxu0
        %v2270 = vadd.f32 0.0, %v2269
        %2271 = vmatprep.mubr.bf16.mxu0 %v1942
        %2272 = vmatmul.mubr.bf16.gmra.mrb[0].mxu0 %v1941
        %v2273 = vpop.f32.mrb[0].mxu0
        %v2274 = vadd.f32 0.0, %v2273
        %v2275 = vpop.f32.mrb[0].mxu0
        %v2276 = vadd.f32 0.0, %v2275
        %v2277 = vpop.f32.mrb[0].mxu0
        %v2278 = vadd.f32 0.0, %v2277
        %v2279 = vpop.f32.mrb[0].mxu0
        %v2280 = vadd.f32 0.0, %v2279
        %2281 = vmatprep.mubr.bf16.mxu0 %v1945
        %2282 = vmatmul.mubr.bf16.gmra.mrb[0].mxu0 %v1944
        %v2283 = vpop.f32.mrb[0].mxu0
        %v2284 = vadd.f32 0.0, %v2283
        %v2285 = vpop.f32.mrb[0].mxu0
        %v2286 = vadd.f32 0.0, %v2285
        %v2287 = vpop.f32.mrb[0].mxu0
        %v2288 = vadd.f32 0.0, %v2287
        %v2289 = vpop.f32.mrb[0].mxu0
        %v2290 = vadd.f32 0.0, %v2289
        %2291 = vdwg.mxu0
        %2292 = vmatprep.subr.bf16.mxu0 %v1620
        %2293 = vmatpush1.bf16.msra.mxu0 %v1619
        %2294 = vmatprep.subr.bf16.mxu0 %v1622
        %2295 = vmatpush1.bf16.msra.mxu0 %v1621
        %2296 = vmatprep.subr.bf16.mxu0 %v1624
        %2297 = vmatpush1.bf16.msra.mxu0 %v1623
        %2298 = vmatprep.subr.bf16.mxu0 %v1626
        %2299 = vmatpush1.bf16.msra.mxu0 %v1625
        %2300 = vmatprep.subr.bf16.mxu0 %v1628
        %2301 = vmatpush1.bf16.msra.mxu0 %v1627
        %2302 = vmatprep.subr.bf16.mxu0 %v1630
        %2303 = vmatpush1.bf16.msra.mxu0 %v1629
        %2304 = vmatprep.subr.bf16.mxu0 %v1632
        %2305 = vmatpush1.bf16.msra.mxu0 %v1631
        %2306 = vmatprep.subr.bf16.mxu0 %v1634
        %2307 = vmatpush1.bf16.msra.mxu0 %v1633
        %2308 = vmatprep.subr.bf16.mxu0 0
        %2309 = vmatpush1.bf16.msra.mxu0 0
        %2310 = vmatprep.subr.bf16.mxu0 0
        %2311 = vmatpush1.bf16.msra.mxu0 0
        %2312 = vmatprep.subr.bf16.mxu0 0
        %2313 = vmatpush1.bf16.msra.mxu0 0
        %2314 = vmatprep.subr.bf16.mxu0 0
        %2315 = vmatpush1.bf16.msra.mxu0 0
        %2316 = vmatprep.subr.bf16.mxu0 0
        %2317 = vmatpush1.bf16.msra.mxu0 0
        %2318 = vmatprep.subr.bf16.mxu0 0
        %2319 = vmatpush1.bf16.msra.mxu0 0
        %2320 = vmatprep.subr.bf16.mxu0 0
        %2321 = vmatpush1.bf16.msra.mxu0 0
        %2322 = vmatprep.subr.bf16.mxu0 0
        %2323 = vmatpush1.bf16.msra.mxu0 0
        %2324 = vmatprep.mubr.bf16.mxu0 0
        %2325 = vmatmul.mubr.bf16.gmra.mrb[0].mxu0 %v1877
        %v2326 = vpop.f32.mrb[0].mxu0
        %v2327 = vadd.f32 %v2054, %v2326
        %v2328 = vpop.f32.mrb[0].mxu0
        %v2329 = vadd.f32 %v2056, %v2328
        %v2330 = vpop.f32.mrb[0].mxu0
        %v2331 = vadd.f32 %v2058, %v2330
        %v2332 = vpop.f32.mrb[0].mxu0
        %v2333 = vadd.f32 %v2060, %v2332
        %2334 = vmatprep.mubr.bf16.mxu0 0
        %2335 = vmatmul.mubr.bf16.gmra.mrb[0].mxu0 %v1880
        %v2336 = vpop.f32.mrb[0].mxu0
        %v2337 = vadd.f32 %v2064, %v2336
        %v2338 = vpop.f32.mrb[0].mxu0
        %v2339 = vadd.f32 %v2066, %v2338
        %v2340 = vpop.f32.mrb[0].mxu0
        %v2341 = vadd.f32 %v2068, %v2340
        %v2342 = vpop.f32.mrb[0].mxu0
        %v2343 = vadd.f32 %v2070, %v2342
        %2344 = vmatprep.mubr.bf16.mxu0 0
        %2345 = vmatmul.mubr.bf16.gmra.mrb[0].mxu0 %v1883
        %v2346 = vpop.f32.mrb[0].mxu0
        %v2347 = vadd.f32 %v2074, %v2346
        %v2348 = vpop.f32.mrb[0].mxu0
        %v2349 = vadd.f32 %v2076, %v2348
        %v2350 = vpop.f32.mrb[0].mxu0
        %v2351 = vadd.f32 %v2078, %v2350
        %v2352 = vpop.f32.mrb[0].mxu0
        %v2353 = vadd.f32 %v2080, %v2352
        %2354 = vmatprep.mubr.bf16.mxu0 0
        %2355 = vmatmul.mubr.bf16.gmra.mrb[0].mxu0 %v1886
        %v2356 = vpop.f32.mrb[0].mxu0
        %v2357 = vadd.f32 %v2084, %v2356
        %v2358 = vpop.f32.mrb[0].mxu0
        %v2359 = vadd.f32 %v2086, %v2358
        %v2360 = vpop.f32.mrb[0].mxu0
        %v2361 = vadd.f32 %v2088, %v2360
        %v2362 = vpop.f32.mrb[0].mxu0
        %v2363 = vadd.f32 %v2090, %v2362
        %2364 = vmatprep.mubr.bf16.mxu0 0
        %2365 = vmatmul.mubr.bf16.gmra.mrb[0].mxu0 %v1889
        %v2366 = vpop.f32.mrb[0].mxu0
        %v2367 = vadd.f32 %v2094, %v2366
        %v2368 = vpop.f32.mrb[0].mxu0
        %v2369 = vadd.f32 %v2096, %v2368
        %v2370 = vpop.f32.mrb[0].mxu0
        %v2371 = vadd.f32 %v2098, %v2370
        %v2372 = vpop.f32.mrb[0].mxu0
        %v2373 = vadd.f32 %v2100, %v2372
        %2374 = vmatprep.mubr.bf16.mxu0 0
        %2375 = vmatmul.mubr.bf16.gmra.mrb[0].mxu0 %v1892
        %v2376 = vpop.f32.mrb[0].mxu0
        %v2377 = vadd.f32 %v2104, %v2376
        %v2378 = vpop.f32.mrb[0].mxu0
        %v2379 = vadd.f32 %v2106, %v2378
        %v2380 = vpop.f32.mrb[0].mxu0
        %v2381 = vadd.f32 %v2108, %v2380
        %v2382 = vpop.f32.mrb[0].mxu0
        %v2383 = vadd.f32 %v2110, %v2382
        %2384 = vmatprep.mubr.bf16.mxu0 0
        %2385 = vmatmul.mubr.bf16.gmra.mrb[0].mxu0 %v1895
        %v2386 = vpop.f32.mrb[0].mxu0
        %v2387 = vadd.f32 %v2114, %v2386
        %v2388 = vpop.f32.mrb[0].mxu0
        %v2389 = vadd.f32 %v2116, %v2388
        %v2390 = vpop.f32.mrb[0].mxu0
        %v2391 = vadd.f32 %v2118, %v2390
        %v2392 = vpop.f32.mrb[0].mxu0
        %v2393 = vadd.f32 %v2120, %v2392
        %2394 = vmatprep.mubr.bf16.mxu0 0
        %2395 = vmatmul.mubr.bf16.gmra.mrb[0].mxu0 %v1898
        %v2396 = vpop.f32.mrb[0].mxu0
        %v2397 = vadd.f32 %v2124, %v2396
        %v2398 = vpop.f32.mrb[0].mxu0
        %v2399 = vadd.f32 %v2126, %v2398
        %v2400 = vpop.f32.mrb[0].mxu0
        %v2401 = vadd.f32 %v2128, %v2400
        %v2402 = vpop.f32.mrb[0].mxu0
        %v2403 = vadd.f32 %v2130, %v2402
        %2404 = vmatprep.mubr.bf16.mxu0 0
        %2405 = vmatmul.mubr.bf16.gmra.mrb[0].mxu0 %v1901
        %v2406 = vpop.f32.mrb[0].mxu0
        %v2407 = vadd.f32 %v2134, %v2406
        %v2408 = vpop.f32.mrb[0].mxu0
        %v2409 = vadd.f32 %v2136, %v2408
        %v2410 = vpop.f32.mrb[0].mxu0
        %v2411 = vadd.f32 %v2138, %v2410
        %v2412 = vpop.f32.mrb[0].mxu0
        %v2413 = vadd.f32 %v2140, %v2412
        %2414 = vmatprep.mubr.bf16.mxu0 0
        %2415 = vmatmul.mubr.bf16.gmra.mrb[0].mxu0 %v1904
        %v2416 = vpop.f32.mrb[0].mxu0
        %v2417 = vadd.f32 %v2144, %v2416
        %v2418 = vpop.f32.mrb[0].mxu0
        %v2419 = vadd.f32 %v2146, %v2418
        %v2420 = vpop.f32.mrb[0].mxu0
        %v2421 = vadd.f32 %v2148, %v2420
        %v2422 = vpop.f32.mrb[0].mxu0
        %v2423 = vadd.f32 %v2150, %v2422
        %2424 = vmatprep.mubr.bf16.mxu0 0
        %2425 = vmatmul.mubr.bf16.gmra.mrb[0].mxu0 %v1907
        %v2426 = vpop.f32.mrb[0].mxu0
        %v2427 = vadd.f32 %v2154, %v2426
        %v2428 = vpop.f32.mrb[0].mxu0
        %v2429 = vadd.f32 %v2156, %v2428
        %v2430 = vpop.f32.mrb[0].mxu0
        %v2431 = vadd.f32 %v2158, %v2430
        %v2432 = vpop.f32.mrb[0].mxu0
        %v2433 = vadd.f32 %v2160, %v2432
        %2434 = vmatprep.mubr.bf16.mxu0 0
        %2435 = vmatmul.mubr.bf16.gmra.mrb[0].mxu0 %v1910
        %v2436 = vpop.f32.mrb[0].mxu0
        %v2437 = vadd.f32 %v2164, %v2436
        %v2438 = vpop.f32.mrb[0].mxu0
        %v2439 = vadd.f32 %v2166, %v2438
        %v2440 = vpop.f32.mrb[0].mxu0
        %v2441 = vadd.f32 %v2168, %v2440
        %v2442 = vpop.f32.mrb[0].mxu0
        %v2443 = vadd.f32 %v2170, %v2442
        %2444 = vmatprep.mubr.bf16.mxu0 0
        %2445 = vmatmul.mubr.bf16.gmra.mrb[0].mxu0 %v1913
        %v2446 = vpop.f32.mrb[0].mxu0
        %v2447 = vadd.f32 %v2174, %v2446
        %v2448 = vpop.f32.mrb[0].mxu0
        %v2449 = vadd.f32 %v2176, %v2448
        %v2450 = vpop.f32.mrb[0].mxu0
        %v2451 = vadd.f32 %v2178, %v2450
        %v2452 = vpop.f32.mrb[0].mxu0
        %v2453 = vadd.f32 %v2180, %v2452
        %2454 = vmatprep.mubr.bf16.mxu0 0
        %2455 = vmatmul.mubr.bf16.gmra.mrb[0].mxu0 %v1916
        %v2456 = vpop.f32.mrb[0].mxu0
        %v2457 = vadd.f32 %v2184, %v2456
        %v2458 = vpop.f32.mrb[0].mxu0
        %v2459 = vadd.f32 %v2186, %v2458
        %v2460 = vpop.f32.mrb[0].mxu0
        %v2461 = vadd.f32 %v2188, %v2460
        %v2462 = vpop.f32.mrb[0].mxu0
        %v2463 = vadd.f32 %v2190, %v2462
        %2464 = vmatprep.mubr.bf16.mxu0 0
        %2465 = vmatmul.mubr.bf16.gmra.mrb[0].mxu0 %v1919
        %v2466 = vpop.f32.mrb[0].mxu0
        %v2467 = vadd.f32 %v2194, %v2466
        %v2468 = vpop.f32.mrb[0].mxu0
        %v2469 = vadd.f32 %v2196, %v2468
        %v2470 = vpop.f32.mrb[0].mxu0
        %v2471 = vadd.f32 %v2198, %v2470
        %v2472 = vpop.f32.mrb[0].mxu0
        %v2473 = vadd.f32 %v2200, %v2472
        %2474 = vmatprep.mubr.bf16.mxu0 0
        %2475 = vmatmul.mubr.bf16.gmra.mrb[0].mxu0 %v1922
        %v2476 = vpop.f32.mrb[0].mxu0
        %v2477 = vadd.f32 %v2204, %v2476
        %v2478 = vpop.f32.mrb[0].mxu0
        %v2479 = vadd.f32 %v2206, %v2478
        %v2480 = vpop.f32.mrb[0].mxu0
        %v2481 = vadd.f32 %v2208, %v2480
        %v2482 = vpop.f32.mrb[0].mxu0
        %v2483 = vadd.f32 %v2210, %v2482
        %2484 = vmatprep.mubr.bf16.mxu0 0
        %2485 = vmatmul.mubr.bf16.gmra.mrb[0].mxu0 %v1925
        %v2486 = vpop.f32.mrb[0].mxu0
        %v2487 = vadd.f32 %v2214, %v2486
        %v2488 = vpop.f32.mrb[0].mxu0
        %v2489 = vadd.f32 %v2216, %v2488
        %v2490 = vpop.f32.mrb[0].mxu0
        %v2491 = vadd.f32 %v2218, %v2490
        %v2492 = vpop.f32.mrb[0].mxu0
        %v2493 = vadd.f32 %v2220, %v2492
        %2494 = vmatprep.mubr.bf16.mxu0 0
        %2495 = vmatmul.mubr.bf16.gmra.mrb[0].mxu0 %v1928
        %v2496 = vpop.f32.mrb[0].mxu0
        %v2497 = vadd.f32 %v2224, %v2496
        %v2498 = vpop.f32.mrb[0].mxu0
        %v2499 = vadd.f32 %v2226, %v2498
        %v2500 = vpop.f32.mrb[0].mxu0
        %v2501 = vadd.f32 %v2228, %v2500
        %v2502 = vpop.f32.mrb[0].mxu0
        %v2503 = vadd.f32 %v2230, %v2502
        %2504 = vmatprep.mubr.bf16.mxu0 0
        %2505 = vmatmul.mubr.bf16.gmra.mrb[0].mxu0 %v1931
        %v2506 = vpop.f32.mrb[0].mxu0
        %v2507 = vadd.f32 %v2234, %v2506
        %v2508 = vpop.f32.mrb[0].mxu0
        %v2509 = vadd.f32 %v2236, %v2508
        %v2510 = vpop.f32.mrb[0].mxu0
        %v2511 = vadd.f32 %v2238, %v2510
        %v2512 = vpop.f32.mrb[0].mxu0
        %v2513 = vadd.f32 %v2240, %v2512
        %2514 = vmatprep.mubr.bf16.mxu0 0
        %2515 = vmatmul.mubr.bf16.gmra.mrb[0].mxu0 %v1934
        %v2516 = vpop.f32.mrb[0].mxu0
        %v2517 = vadd.f32 %v2244, %v2516
        %v2518 = vpop.f32.mrb[0].mxu0
        %v2519 = vadd.f32 %v2246, %v2518
        %v2520 = vpop.f32.mrb[0].mxu0
        %v2521 = vadd.f32 %v2248, %v2520
        %v2522 = vpop.f32.mrb[0].mxu0
        %v2523 = vadd.f32 %v2250, %v2522
        %2524 = vmatprep.mubr.bf16.mxu0 0
        %2525 = vmatmul.mubr.bf16.gmra.mrb[0].mxu0 %v1937
        %v2526 = vpop.f32.mrb[0].mxu0
        %v2527 = vadd.f32 %v2254, %v2526
        %v2528 = vpop.f32.mrb[0].mxu0
        %v2529 = vadd.f32 %v2256, %v2528
        %v2530 = vpop.f32.mrb[0].mxu0
        %v2531 = vadd.f32 %v2258, %v2530
        %v2532 = vpop.f32.mrb[0].mxu0
        %v2533 = vadd.f32 %v2260, %v2532
        %2534 = vmatprep.mubr.bf16.mxu0 0
        %2535 = vmatmul.mubr.bf16.gmra.mrb[0].mxu0 %v1940
        %v2536 = vpop.f32.mrb[0].mxu0
        %v2537 = vadd.f32 %v2264, %v2536
        %v2538 = vpop.f32.mrb[0].mxu0
        %v2539 = vadd.f32 %v2266, %v2538
        %v2540 = vpop.f32.mrb[0].mxu0
        %v2541 = vadd.f32 %v2268, %v2540
        %v2542 = vpop.f32.mrb[0].mxu0
        %v2543 = vadd.f32 %v2270, %v2542
        %2544 = vmatprep.mubr.bf16.mxu0 0
        %2545 = vmatmul.mubr.bf16.gmra.mrb[0].mxu0 %v1943
        %v2546 = vpop.f32.mrb[0].mxu0
        %v2547 = vadd.f32 %v2274, %v2546
        %v2548 = vpop.f32.mrb[0].mxu0
        %v2549 = vadd.f32 %v2276, %v2548
        %v2550 = vpop.f32.mrb[0].mxu0
        %v2551 = vadd.f32 %v2278, %v2550
        %v2552 = vpop.f32.mrb[0].mxu0
        %v2553 = vadd.f32 %v2280, %v2552
        %2554 = vmatprep.mubr.bf16.mxu0 0
        %2555 = vmatmul.mubr.bf16.gmra.mrb[0].mxu0 %v1946
        %v2556 = vpop.f32.mrb[0].mxu0
        %v2557 = vadd.f32 %v2284, %v2556
        %v2558 = vpop.f32.mrb[0].mxu0
        %v2559 = vadd.f32 %v2286, %v2558
        %v2560 = vpop.f32.mrb[0].mxu0
        %v2561 = vadd.f32 %v2288, %v2560
        %v2562 = vpop.f32.mrb[0].mxu0
        %v2563 = vadd.f32 %v2290, %v2562
        %2564 = vdwg.mxu0
        // Predicated region
        $region85: #{tpu_custom_call.1} parent=51 // pred_check
          %p2565 = pneg %p486
        $region86: #{tpu_custom_call.1} parent=51 // pred_check_branch
          %2567 = sbr.rel (%p2565) target = $region88
        $region87: #{tpu_custom_call.1} parent=51 // pred_region
          %s2568 = sshra.s32 %s1490, 3
          %s2569 = sand.u32 %s1490, 7
          %s2570 = smul.u32 %s2568, 2
          %s2571 = smul.addr %s2570, 8
          %s2572 = scalar_lea.vmem [#allocation3], %s2571
          %2573 = vst [vmem:[%s2572] sm:$0xff] %v2327
          %2574 = vst [vmem:[%s2572 + $0x8] sm:$0xff] %v2329
          %2575 = vst [vmem:[%s2572 + $0x10] sm:$0xff] %v2331
          %2576 = vst [vmem:[%s2572 + $0x18] sm:$0xff] %v2333
          %2577 = vst [vmem:[%s2572 + $0x20] sm:$0xff] %v2337
          %2578 = vst [vmem:[%s2572 + $0x28] sm:$0xff] %v2339
          %2579 = vst [vmem:[%s2572 + $0x30] sm:$0xff] %v2341
          %2580 = vst [vmem:[%s2572 + $0x38] sm:$0xff] %v2343
          %2581 = vst [vmem:[%s2572 + $0x40] sm:$0xff] %v2347
          %2582 = vst [vmem:[%s2572 + $0x48] sm:$0xff] %v2349
          %2583 = vst [vmem:[%s2572 + $0x50] sm:$0xff] %v2351
          %2584 = vst [vmem:[%s2572 + $0x58] sm:$0xff] %v2353
          %2585 = vst [vmem:[%s2572 + $0x60] sm:$0xff] %v2357
          %2586 = vst [vmem:[%s2572 + $0x68] sm:$0xff] %v2359
          %2587 = vst [vmem:[%s2572 + $0x70] sm:$0xff] %v2361
          %2588 = vst [vmem:[%s2572 + $0x78] sm:$0xff] %v2363
          %2589 = vst [vmem:[%s2572 + $0x80] sm:$0xff] %v2367
          %2590 = vst [vmem:[%s2572 + $0x88] sm:$0xff] %v2369
          %2591 = vst [vmem:[%s2572 + $0x90] sm:$0xff] %v2371
          %2592 = vst [vmem:[%s2572 + $0x98] sm:$0xff] %v2373
          %2593 = vst [vmem:[%s2572 + $0xa0] sm:$0xff] %v2377
          %2594 = vst [vmem:[%s2572 + $0xa8] sm:$0xff] %v2379
          %2595 = vst [vmem:[%s2572 + $0xb0] sm:$0xff] %v2381
          %2596 = vst [vmem:[%s2572 + $0xb8] sm:$0xff] %v2383
          %2597 = vst [vmem:[%s2572 + $0xc0] sm:$0xff] %v2387
          %2598 = vst [vmem:[%s2572 + $0xc8] sm:$0xff] %v2389
          %2599 = vst [vmem:[%s2572 + $0xd0] sm:$0xff] %v2391
          %2600 = vst [vmem:[%s2572 + $0xd8] sm:$0xff] %v2393
          %2601 = vst [vmem:[%s2572 + $0xe0] sm:$0xff] %v2397
          %2602 = vst [vmem:[%s2572 + $0xe8] sm:$0xff] %v2399
          %2603 = vst [vmem:[%s2572 + $0xf0] sm:$0xff] %v2401
          %2604 = vst [vmem:[%s2572 + $0xf8] sm:$0xff] %v2403
          %2605 = vst [vmem:[%s2572 + $0x100] sm:$0xff] %v2407
          %2606 = vst [vmem:[%s2572 + $0x108] sm:$0xff] %v2409
          %2607 = vst [vmem:[%s2572 + $0x110] sm:$0xff] %v2411
          %2608 = vst [vmem:[%s2572 + $0x118] sm:$0xff] %v2413
          %2609 = vst [vmem:[%s2572 + $0x120] sm:$0xff] %v2417
          %2610 = vst [vmem:[%s2572 + $0x128] sm:$0xff] %v2419
          %2611 = vst [vmem:[%s2572 + $0x130] sm:$0xff] %v2421
          %2612 = vst [vmem:[%s2572 + $0x138] sm:$0xff] %v2423
          %2613 = vst [vmem:[%s2572 + $0x140] sm:$0xff] %v2427
          %2614 = vst [vmem:[%s2572 + $0x148] sm:$0xff] %v2429
          %2615 = vst [vmem:[%s2572 + $0x150] sm:$0xff] %v2431
          %2616 = vst [vmem:[%s2572 + $0x158] sm:$0xff] %v2433
          %2617 = vst [vmem:[%s2572 + $0x160] sm:$0xff] %v2437
          %2618 = vst [vmem:[%s2572 + $0x168] sm:$0xff] %v2439
          %2619 = vst [vmem:[%s2572 + $0x170] sm:$0xff] %v2441
          %2620 = vst [vmem:[%s2572 + $0x178] sm:$0xff] %v2443
          %2621 = vst [vmem:[%s2572 + $0x180] sm:$0xff] %v2447
          %2622 = vst [vmem:[%s2572 + $0x188] sm:$0xff] %v2449
          %2623 = vst [vmem:[%s2572 + $0x190] sm:$0xff] %v2451
          %2624 = vst [vmem:[%s2572 + $0x198] sm:$0xff] %v2453
          %2625 = vst [vmem:[%s2572 + $0x1a0] sm:$0xff] %v2457
          %2626 = vst [vmem:[%s2572 + $0x1a8] sm:$0xff] %v2459
          %2627 = vst [vmem:[%s2572 + $0x1b0] sm:$0xff] %v2461
          %2628 = vst [vmem:[%s2572 + $0x1b8] sm:$0xff] %v2463
          %2629 = vst [vmem:[%s2572 + $0x1c0] sm:$0xff] %v2467
          %2630 = vst [vmem:[%s2572 + $0x1c8] sm:$0xff] %v2469
          %2631 = vst [vmem:[%s2572 + $0x1d0] sm:$0xff] %v2471
          %2632 = vst [vmem:[%s2572 + $0x1d8] sm:$0xff] %v2473
          %2633 = vst [vmem:[%s2572 + $0x1e0] sm:$0xff] %v2477
          %2634 = vst [vmem:[%s2572 + $0x1e8] sm:$0xff] %v2479
          %2635 = vst [vmem:[%s2572 + $0x1f0] sm:$0xff] %v2481
          %2636 = vst [vmem:[%s2572 + $0x1f8] sm:$0xff] %v2483
          %2637 = vst [vmem:[%s2572 + $0x200] sm:$0xff] %v2487
          %2638 = vst [vmem:[%s2572 + $0x208] sm:$0xff] %v2489
          %2639 = vst [vmem:[%s2572 + $0x210] sm:$0xff] %v2491
          %2640 = vst [vmem:[%s2572 + $0x218] sm:$0xff] %v2493
          %2641 = vst [vmem:[%s2572 + $0x220] sm:$0xff] %v2497
          %2642 = vst [vmem:[%s2572 + $0x228] sm:$0xff] %v2499
          %2643 = vst [vmem:[%s2572 + $0x230] sm:$0xff] %v2501
          %2644 = vst [vmem:[%s2572 + $0x238] sm:$0xff] %v2503
          %2645 = vst [vmem:[%s2572 + $0x240] sm:$0xff] %v2507
          %2646 = vst [vmem:[%s2572 + $0x248] sm:$0xff] %v2509
          %2647 = vst [vmem:[%s2572 + $0x250] sm:$0xff] %v2511
          %2648 = vst [vmem:[%s2572 + $0x258] sm:$0xff] %v2513
          %2649 = vst [vmem:[%s2572 + $0x260] sm:$0xff] %v2517
          %2650 = vst [vmem:[%s2572 + $0x268] sm:$0xff] %v2519
          %2651 = vst [vmem:[%s2572 + $0x270] sm:$0xff] %v2521
          %2652 = vst [vmem:[%s2572 + $0x278] sm:$0xff] %v2523
          %2653 = vst [vmem:[%s2572 + $0x280] sm:$0xff] %v2527
          %2654 = vst [vmem:[%s2572 + $0x288] sm:$0xff] %v2529
          %2655 = vst [vmem:[%s2572 + $0x290] sm:$0xff] %v2531
          %2656 = vst [vmem:[%s2572 + $0x298] sm:$0xff] %v2533
          %2657 = vst [vmem:[%s2572 + $0x2a0] sm:$0xff] %v2537
          %2658 = vst [vmem:[%s2572 + $0x2a8] sm:$0xff] %v2539
          %2659 = vst [vmem:[%s2572 + $0x2b0] sm:$0xff] %v2541
          %2660 = vst [vmem:[%s2572 + $0x2b8] sm:$0xff] %v2543
          %2661 = vst [vmem:[%s2572 + $0x2c0] sm:$0xff] %v2547
          %2662 = vst [vmem:[%s2572 + $0x2c8] sm:$0xff] %v2549
          %2663 = vst [vmem:[%s2572 + $0x2d0] sm:$0xff] %v2551
          %2664 = vst [vmem:[%s2572 + $0x2d8] sm:$0xff] %v2553
          %2665 = vst [vmem:[%s2572 + $0x2e0] sm:$0xff] %v2557
          %2666 = vst [vmem:[%s2572 + $0x2e8] sm:$0xff] %v2559
          %2667 = vst [vmem:[%s2572 + $0x2f0] sm:$0xff] %v2561
          %2668 = vst [vmem:[%s2572 + $0x2f8] sm:$0xff] %v2563
        $region88: #{tpu_custom_call.1} parent=51 // pred_fallthru
          _
        %p2669 = scmp.gt.s32.totalorder %s38, 0
        // Predicated region
        $region89: #{tpu_custom_call.1} parent=51 // pred_check
          %p2670 = pneg %p2669
        $region90: #{tpu_custom_call.1} parent=51 // pred_check_branch
          %2672 = sbr.rel (%p2670) target = $region92
        $region91: #{tpu_custom_call.1} parent=51 // pred_region
          %s2673 = sshra.s32 %s1490, 3
          %s2674 = sand.u32 %s1490, 7
          %s2675 = smul.u32 %s2673, 2
          %s2676 = smul.addr %s2675, 8
          %s2677 = scalar_lea.vmem [#allocation3], %s2676
          %v2678 = vld [vmem:[%s2677] sm:$0xff]
          %v2679 = vld [vmem:[%s2677 + $0x8] sm:$0xff]
          %v2680 = vld [vmem:[%s2677 + $0x10] sm:$0xff]
          %v2681 = vld [vmem:[%s2677 + $0x18] sm:$0xff]
          %v2682 = vld [vmem:[%s2677 + $0x20] sm:$0xff]
          %v2683 = vld [vmem:[%s2677 + $0x28] sm:$0xff]
          %v2684 = vld [vmem:[%s2677 + $0x30] sm:$0xff]
          %v2685 = vld [vmem:[%s2677 + $0x38] sm:$0xff]
          %v2686 = vld [vmem:[%s2677 + $0x40] sm:$0xff]
          %v2687 = vld [vmem:[%s2677 + $0x48] sm:$0xff]
          %v2688 = vld [vmem:[%s2677 + $0x50] sm:$0xff]
          %v2689 = vld [vmem:[%s2677 + $0x58] sm:$0xff]
          %v2690 = vld [vmem:[%s2677 + $0x60] sm:$0xff]
          %v2691 = vld [vmem:[%s2677 + $0x68] sm:$0xff]
          %v2692 = vld [vmem:[%s2677 + $0x70] sm:$0xff]
          %v2693 = vld [vmem:[%s2677 + $0x78] sm:$0xff]
          %v2694 = vld [vmem:[%s2677 + $0x80] sm:$0xff]
          %v2695 = vld [vmem:[%s2677 + $0x88] sm:$0xff]
          %v2696 = vld [vmem:[%s2677 + $0x90] sm:$0xff]
          %v2697 = vld [vmem:[%s2677 + $0x98] sm:$0xff]
          %v2698 = vld [vmem:[%s2677 + $0xa0] sm:$0xff]
          %v2699 = vld [vmem:[%s2677 + $0xa8] sm:$0xff]
          %v2700 = vld [vmem:[%s2677 + $0xb0] sm:$0xff]
          %v2701 = vld [vmem:[%s2677 + $0xb8] sm:$0xff]
          %v2702 = vld [vmem:[%s2677 + $0xc0] sm:$0xff]
          %v2703 = vld [vmem:[%s2677 + $0xc8] sm:$0xff]
          %v2704 = vld [vmem:[%s2677 + $0xd0] sm:$0xff]
          %v2705 = vld [vmem:[%s2677 + $0xd8] sm:$0xff]
          %v2706 = vld [vmem:[%s2677 + $0xe0] sm:$0xff]
          %v2707 = vld [vmem:[%s2677 + $0xe8] sm:$0xff]
          %v2708 = vld [vmem:[%s2677 + $0xf0] sm:$0xff]
          %v2709 = vld [vmem:[%s2677 + $0xf8] sm:$0xff]
          %v2710 = vld [vmem:[%s2677 + $0x100] sm:$0xff]
          %v2711 = vld [vmem:[%s2677 + $0x108] sm:$0xff]
          %v2712 = vld [vmem:[%s2677 + $0x110] sm:$0xff]
          %v2713 = vld [vmem:[%s2677 + $0x118] sm:$0xff]
          %v2714 = vld [vmem:[%s2677 + $0x120] sm:$0xff]
          %v2715 = vld [vmem:[%s2677 + $0x128] sm:$0xff]
          %v2716 = vld [vmem:[%s2677 + $0x130] sm:$0xff]
          %v2717 = vld [vmem:[%s2677 + $0x138] sm:$0xff]
          %v2718 = vld [vmem:[%s2677 + $0x140] sm:$0xff]
          %v2719 = vld [vmem:[%s2677 + $0x148] sm:$0xff]
          %v2720 = vld [vmem:[%s2677 + $0x150] sm:$0xff]
          %v2721 = vld [vmem:[%s2677 + $0x158] sm:$0xff]
          %v2722 = vld [vmem:[%s2677 + $0x160] sm:$0xff]
          %v2723 = vld [vmem:[%s2677 + $0x168] sm:$0xff]
          %v2724 = vld [vmem:[%s2677 + $0x170] sm:$0xff]
          %v2725 = vld [vmem:[%s2677 + $0x178] sm:$0xff]
          %v2726 = vld [vmem:[%s2677 + $0x180] sm:$0xff]
          %v2727 = vld [vmem:[%s2677 + $0x188] sm:$0xff]
          %v2728 = vld [vmem:[%s2677 + $0x190] sm:$0xff]
          %v2729 = vld [vmem:[%s2677 + $0x198] sm:$0xff]
          %v2730 = vld [vmem:[%s2677 + $0x1a0] sm:$0xff]
          %v2731 = vld [vmem:[%s2677 + $0x1a8] sm:$0xff]
          %v2732 = vld [vmem:[%s2677 + $0x1b0] sm:$0xff]
          %v2733 = vld [vmem:[%s2677 + $0x1b8] sm:$0xff]
          %v2734 = vld [vmem:[%s2677 + $0x1c0] sm:$0xff]
          %v2735 = vld [vmem:[%s2677 + $0x1c8] sm:$0xff]
          %v2736 = vld [vmem:[%s2677 + $0x1d0] sm:$0xff]
          %v2737 = vld [vmem:[%s2677 + $0x1d8] sm:$0xff]
          %v2738 = vld [vmem:[%s2677 + $0x1e0] sm:$0xff]
          %v2739 = vld [vmem:[%s2677 + $0x1e8] sm:$0xff]
          %v2740 = vld [vmem:[%s2677 + $0x1f0] sm:$0xff]
          %v2741 = vld [vmem:[%s2677 + $0x1f8] sm:$0xff]
          %v2742 = vld [vmem:[%s2677 + $0x200] sm:$0xff]
          %v2743 = vld [vmem:[%s2677 + $0x208] sm:$0xff]
          %v2744 = vld [vmem:[%s2677 + $0x210] sm:$0xff]
          %v2745 = vld [vmem:[%s2677 + $0x218] sm:$0xff]
          %v2746 = vld [vmem:[%s2677 + $0x220] sm:$0xff]
          %v2747 = vld [vmem:[%s2677 + $0x228] sm:$0xff]
          %v2748 = vld [vmem:[%s2677 + $0x230] sm:$0xff]
          %v2749 = vld [vmem:[%s2677 + $0x238] sm:$0xff]
          %v2750 = vld [vmem:[%s2677 + $0x240] sm:$0xff]
          %v2751 = vld [vmem:[%s2677 + $0x248] sm:$0xff]
          %v2752 = vld [vmem:[%s2677 + $0x250] sm:$0xff]
          %v2753 = vld [vmem:[%s2677 + $0x258] sm:$0xff]
          %v2754 = vld [vmem:[%s2677 + $0x260] sm:$0xff]
          %v2755 = vld [vmem:[%s2677 + $0x268] sm:$0xff]
          %v2756 = vld [vmem:[%s2677 + $0x270] sm:$0xff]
          %v2757 = vld [vmem:[%s2677 + $0x278] sm:$0xff]
          %v2758 = vld [vmem:[%s2677 + $0x280] sm:$0xff]
          %v2759 = vld [vmem:[%s2677 + $0x288] sm:$0xff]
          %v2760 = vld [vmem:[%s2677 + $0x290] sm:$0xff]
          %v2761 = vld [vmem:[%s2677 + $0x298] sm:$0xff]
          %v2762 = vld [vmem:[%s2677 + $0x2a0] sm:$0xff]
          %v2763 = vld [vmem:[%s2677 + $0x2a8] sm:$0xff]
          %v2764 = vld [vmem:[%s2677 + $0x2b0] sm:$0xff]
          %v2765 = vld [vmem:[%s2677 + $0x2b8] sm:$0xff]
          %v2766 = vld [vmem:[%s2677 + $0x2c0] sm:$0xff]
          %v2767 = vld [vmem:[%s2677 + $0x2c8] sm:$0xff]
          %v2768 = vld [vmem:[%s2677 + $0x2d0] sm:$0xff]
          %v2769 = vld [vmem:[%s2677 + $0x2d8] sm:$0xff]
          %v2770 = vld [vmem:[%s2677 + $0x2e0] sm:$0xff]
          %v2771 = vld [vmem:[%s2677 + $0x2e8] sm:$0xff]
          %v2772 = vld [vmem:[%s2677 + $0x2f0] sm:$0xff]
          %v2773 = vld [vmem:[%s2677 + $0x2f8] sm:$0xff]
          %v2774 = vadd.f32 %v2678, %v2327
          %v2775 = vadd.f32 %v2679, %v2329
          %v2776 = vadd.f32 %v2680, %v2331
          %v2777 = vadd.f32 %v2681, %v2333
          %v2778 = vadd.f32 %v2682, %v2337
          %v2779 = vadd.f32 %v2683, %v2339
          %v2780 = vadd.f32 %v2684, %v2341
          %v2781 = vadd.f32 %v2685, %v2343
          %v2782 = vadd.f32 %v2686, %v2347
          %v2783 = vadd.f32 %v2687, %v2349
          %v2784 = vadd.f32 %v2688, %v2351
          %v2785 = vadd.f32 %v2689, %v2353
          %v2786 = vadd.f32 %v2690, %v2357
          %v2787 = vadd.f32 %v2691, %v2359
          %v2788 = vadd.f32 %v2692, %v2361
          %v2789 = vadd.f32 %v2693, %v2363
          %v2790 = vadd.f32 %v2694, %v2367
          %v2791 = vadd.f32 %v2695, %v2369
          %v2792 = vadd.f32 %v2696, %v2371
          %v2793 = vadd.f32 %v2697, %v2373
          %v2794 = vadd.f32 %v2698, %v2377
          %v2795 = vadd.f32 %v2699, %v2379
          %v2796 = vadd.f32 %v2700, %v2381
          %v2797 = vadd.f32 %v2701, %v2383
          %v2798 = vadd.f32 %v2702, %v2387
          %v2799 = vadd.f32 %v2703, %v2389
          %v2800 = vadd.f32 %v2704, %v2391
          %v2801 = vadd.f32 %v2705, %v2393
          %v2802 = vadd.f32 %v2706, %v2397
          %v2803 = vadd.f32 %v2707, %v2399
          %v2804 = vadd.f32 %v2708, %v2401
          %v2805 = vadd.f32 %v2709, %v2403
          %v2806 = vadd.f32 %v2710, %v2407
          %v2807 = vadd.f32 %v2711, %v2409
          %v2808 = vadd.f32 %v2712, %v2411
          %v2809 = vadd.f32 %v2713, %v2413
          %v2810 = vadd.f32 %v2714, %v2417
          %v2811 = vadd.f32 %v2715, %v2419
          %v2812 = vadd.f32 %v2716, %v2421
          %v2813 = vadd.f32 %v2717, %v2423
          %v2814 = vadd.f32 %v2718, %v2427
          %v2815 = vadd.f32 %v2719, %v2429
          %v2816 = vadd.f32 %v2720, %v2431
          %v2817 = vadd.f32 %v2721, %v2433
          %v2818 = vadd.f32 %v2722, %v2437
          %v2819 = vadd.f32 %v2723, %v2439
          %v2820 = vadd.f32 %v2724, %v2441
          %v2821 = vadd.f32 %v2725, %v2443
          %v2822 = vadd.f32 %v2726, %v2447
          %v2823 = vadd.f32 %v2727, %v2449
          %v2824 = vadd.f32 %v2728, %v2451
          %v2825 = vadd.f32 %v2729, %v2453
          %v2826 = vadd.f32 %v2730, %v2457
          %v2827 = vadd.f32 %v2731, %v2459
          %v2828 = vadd.f32 %v2732, %v2461
          %v2829 = vadd.f32 %v2733, %v2463
          %v2830 = vadd.f32 %v2734, %v2467
          %v2831 = vadd.f32 %v2735, %v2469
          %v2832 = vadd.f32 %v2736, %v2471
          %v2833 = vadd.f32 %v2737, %v2473
          %v2834 = vadd.f32 %v2738, %v2477
          %v2835 = vadd.f32 %v2739, %v2479
          %v2836 = vadd.f32 %v2740, %v2481
          %v2837 = vadd.f32 %v2741, %v2483
          %v2838 = vadd.f32 %v2742, %v2487
          %v2839 = vadd.f32 %v2743, %v2489
          %v2840 = vadd.f32 %v2744, %v2491
          %v2841 = vadd.f32 %v2745, %v2493
          %v2842 = vadd.f32 %v2746, %v2497
          %v2843 = vadd.f32 %v2747, %v2499
          %v2844 = vadd.f32 %v2748, %v2501
          %v2845 = vadd.f32 %v2749, %v2503
          %v2846 = vadd.f32 %v2750, %v2507
          %v2847 = vadd.f32 %v2751, %v2509
          %v2848 = vadd.f32 %v2752, %v2511
          %v2849 = vadd.f32 %v2753, %v2513
          %v2850 = vadd.f32 %v2754, %v2517
          %v2851 = vadd.f32 %v2755, %v2519
          %v2852 = vadd.f32 %v2756, %v2521
          %v2853 = vadd.f32 %v2757, %v2523
          %v2854 = vadd.f32 %v2758, %v2527
          %v2855 = vadd.f32 %v2759, %v2529
          %v2856 = vadd.f32 %v2760, %v2531
          %v2857 = vadd.f32 %v2761, %v2533
          %v2858 = vadd.f32 %v2762, %v2537
          %v2859 = vadd.f32 %v2763, %v2539
          %v2860 = vadd.f32 %v2764, %v2541
          %v2861 = vadd.f32 %v2765, %v2543
          %v2862 = vadd.f32 %v2766, %v2547
          %v2863 = vadd.f32 %v2767, %v2549
          %v2864 = vadd.f32 %v2768, %v2551
          %v2865 = vadd.f32 %v2769, %v2553
          %v2866 = vadd.f32 %v2770, %v2557
          %v2867 = vadd.f32 %v2771, %v2559
          %v2868 = vadd.f32 %v2772, %v2561
          %v2869 = vadd.f32 %v2773, %v2563
          %2870 = vst [vmem:[%s2677] sm:$0xff] %v2774
          %2871 = vst [vmem:[%s2677 + $0x8] sm:$0xff] %v2775
          %2872 = vst [vmem:[%s2677 + $0x10] sm:$0xff] %v2776
          %2873 = vst [vmem:[%s2677 + $0x18] sm:$0xff] %v2777
          %2874 = vst [vmem:[%s2677 + $0x20] sm:$0xff] %v2778
          %2875 = vst [vmem:[%s2677 + $0x28] sm:$0xff] %v2779
          %2876 = vst [vmem:[%s2677 + $0x30] sm:$0xff] %v2780
          %2877 = vst [vmem:[%s2677 + $0x38] sm:$0xff] %v2781
          %2878 = vst [vmem:[%s2677 + $0x40] sm:$0xff] %v2782
          %2879 = vst [vmem:[%s2677 + $0x48] sm:$0xff] %v2783
          %2880 = vst [vmem:[%s2677 + $0x50] sm:$0xff] %v2784
          %2881 = vst [vmem:[%s2677 + $0x58] sm:$0xff] %v2785
          %2882 = vst [vmem:[%s2677 + $0x60] sm:$0xff] %v2786
          %2883 = vst [vmem:[%s2677 + $0x68] sm:$0xff] %v2787
          %2884 = vst [vmem:[%s2677 + $0x70] sm:$0xff] %v2788
          %2885 = vst [vmem:[%s2677 + $0x78] sm:$0xff] %v2789
          %2886 = vst [vmem:[%s2677 + $0x80] sm:$0xff] %v2790
          %2887 = vst [vmem:[%s2677 + $0x88] sm:$0xff] %v2791
          %2888 = vst [vmem:[%s2677 + $0x90] sm:$0xff] %v2792
          %2889 = vst [vmem:[%s2677 + $0x98] sm:$0xff] %v2793
          %2890 = vst [vmem:[%s2677 + $0xa0] sm:$0xff] %v2794
          %2891 = vst [vmem:[%s2677 + $0xa8] sm:$0xff] %v2795
          %2892 = vst [vmem:[%s2677 + $0xb0] sm:$0xff] %v2796
          %2893 = vst [vmem:[%s2677 + $0xb8] sm:$0xff] %v2797
          %2894 = vst [vmem:[%s2677 + $0xc0] sm:$0xff] %v2798
          %2895 = vst [vmem:[%s2677 + $0xc8] sm:$0xff] %v2799
          %2896 = vst [vmem:[%s2677 + $0xd0] sm:$0xff] %v2800
          %2897 = vst [vmem:[%s2677 + $0xd8] sm:$0xff] %v2801
          %2898 = vst [vmem:[%s2677 + $0xe0] sm:$0xff] %v2802
          %2899 = vst [vmem:[%s2677 + $0xe8] sm:$0xff] %v2803
          %2900 = vst [vmem:[%s2677 + $0xf0] sm:$0xff] %v2804
          %2901 = vst [vmem:[%s2677 + $0xf8] sm:$0xff] %v2805
          %2902 = vst [vmem:[%s2677 + $0x100] sm:$0xff] %v2806
          %2903 = vst [vmem:[%s2677 + $0x108] sm:$0xff] %v2807
          %2904 = vst [vmem:[%s2677 + $0x110] sm:$0xff] %v2808
          %2905 = vst [vmem:[%s2677 + $0x118] sm:$0xff] %v2809
          %2906 = vst [vmem:[%s2677 + $0x120] sm:$0xff] %v2810
          %2907 = vst [vmem:[%s2677 + $0x128] sm:$0xff] %v2811
          %2908 = vst [vmem:[%s2677 + $0x130] sm:$0xff] %v2812
          %2909 = vst [vmem:[%s2677 + $0x138] sm:$0xff] %v2813
          %2910 = vst [vmem:[%s2677 + $0x140] sm:$0xff] %v2814
          %2911 = vst [vmem:[%s2677 + $0x148] sm:$0xff] %v2815
          %2912 = vst [vmem:[%s2677 + $0x150] sm:$0xff] %v2816
          %2913 = vst [vmem:[%s2677 + $0x158] sm:$0xff] %v2817
          %2914 = vst [vmem:[%s2677 + $0x160] sm:$0xff] %v2818
          %2915 = vst [vmem:[%s2677 + $0x168] sm:$0xff] %v2819
          %2916 = vst [vmem:[%s2677 + $0x170] sm:$0xff] %v2820
          %2917 = vst [vmem:[%s2677 + $0x178] sm:$0xff] %v2821
          %2918 = vst [vmem:[%s2677 + $0x180] sm:$0xff] %v2822
          %2919 = vst [vmem:[%s2677 + $0x188] sm:$0xff] %v2823
          %2920 = vst [vmem:[%s2677 + $0x190] sm:$0xff] %v2824
          %2921 = vst [vmem:[%s2677 + $0x198] sm:$0xff] %v2825
          %2922 = vst [vmem:[%s2677 + $0x1a0] sm:$0xff] %v2826
          %2923 = vst [vmem:[%s2677 + $0x1a8] sm:$0xff] %v2827
          %2924 = vst [vmem:[%s2677 + $0x1b0] sm:$0xff] %v2828
          %2925 = vst [vmem:[%s2677 + $0x1b8] sm:$0xff] %v2829
          %2926 = vst [vmem:[%s2677 + $0x1c0] sm:$0xff] %v2830
          %2927 = vst [vmem:[%s2677 + $0x1c8] sm:$0xff] %v2831
          %2928 = vst [vmem:[%s2677 + $0x1d0] sm:$0xff] %v2832
          %2929 = vst [vmem:[%s2677 + $0x1d8] sm:$0xff] %v2833
          %2930 = vst [vmem:[%s2677 + $0x1e0] sm:$0xff] %v2834
          %2931 = vst [vmem:[%s2677 + $0x1e8] sm:$0xff] %v2835
          %2932 = vst [vmem:[%s2677 + $0x1f0] sm:$0xff] %v2836
          %2933 = vst [vmem:[%s2677 + $0x1f8] sm:$0xff] %v2837
          %2934 = vst [vmem:[%s2677 + $0x200] sm:$0xff] %v2838
          %2935 = vst [vmem:[%s2677 + $0x208] sm:$0xff] %v2839
          %2936 = vst [vmem:[%s2677 + $0x210] sm:$0xff] %v2840
          %2937 = vst [vmem:[%s2677 + $0x218] sm:$0xff] %v2841
          %2938 = vst [vmem:[%s2677 + $0x220] sm:$0xff] %v2842
          %2939 = vst [vmem:[%s2677 + $0x228] sm:$0xff] %v2843
          %2940 = vst [vmem:[%s2677 + $0x230] sm:$0xff] %v2844
          %2941 = vst [vmem:[%s2677 + $0x238] sm:$0xff] %v2845
          %2942 = vst [vmem:[%s2677 + $0x240] sm:$0xff] %v2846
          %2943 = vst [vmem:[%s2677 + $0x248] sm:$0xff] %v2847
          %2944 = vst [vmem:[%s2677 + $0x250] sm:$0xff] %v2848
          %2945 = vst [vmem:[%s2677 + $0x258] sm:$0xff] %v2849
          %2946 = vst [vmem:[%s2677 + $0x260] sm:$0xff] %v2850
          %2947 = vst [vmem:[%s2677 + $0x268] sm:$0xff] %v2851
          %2948 = vst [vmem:[%s2677 + $0x270] sm:$0xff] %v2852
          %2949 = vst [vmem:[%s2677 + $0x278] sm:$0xff] %v2853
          %2950 = vst [vmem:[%s2677 + $0x280] sm:$0xff] %v2854
          %2951 = vst [vmem:[%s2677 + $0x288] sm:$0xff] %v2855
          %2952 = vst [vmem:[%s2677 + $0x290] sm:$0xff] %v2856
          %2953 = vst [vmem:[%s2677 + $0x298] sm:$0xff] %v2857
          %2954 = vst [vmem:[%s2677 + $0x2a0] sm:$0xff] %v2858
          %2955 = vst [vmem:[%s2677 + $0x2a8] sm:$0xff] %v2859
          %2956 = vst [vmem:[%s2677 + $0x2b0] sm:$0xff] %v2860
          %2957 = vst [vmem:[%s2677 + $0x2b8] sm:$0xff] %v2861
          %2958 = vst [vmem:[%s2677 + $0x2c0] sm:$0xff] %v2862
          %2959 = vst [vmem:[%s2677 + $0x2c8] sm:$0xff] %v2863
          %2960 = vst [vmem:[%s2677 + $0x2d0] sm:$0xff] %v2864
          %2961 = vst [vmem:[%s2677 + $0x2d8] sm:$0xff] %v2865
          %2962 = vst [vmem:[%s2677 + $0x2e0] sm:$0xff] %v2866
          %2963 = vst [vmem:[%s2677 + $0x2e8] sm:$0xff] %v2867
          %2964 = vst [vmem:[%s2677 + $0x2f0] sm:$0xff] %v2868
          %2965 = vst [vmem:[%s2677 + $0x2f8] sm:$0xff] %v2869
        $region92: #{tpu_custom_call.1} parent=51 // pred_fallthru
          _
        // Predicated region
        $region93: #{tpu_custom_call.1} parent=51 // pred_check
          %p2966 = pneg %p486
        $region94: #{tpu_custom_call.1} parent=51 // pred_check_branch
          %2968 = sbr.rel (%p2966) target = $region96
        $region95: #{tpu_custom_call.1} parent=51 // pred_region
          %s2969 = sld [smem:[#allocation5]]
          %s2970 = sshra.s32 %s1490, 3
          %s2971 = sand.u32 %s1490, 7
          %s2972 = smul.u32 %s2970, 2
          %s2973 = smul.addr %s2972, 8
          %s2974 = scalar_lea.vmem [#allocation3], %s2973
          %v2975 = vld [vmem:[%s2974] sm:$0xff]
          %v2976 = vld [vmem:[%s2974 + $0x8] sm:$0xff]
          %v2977 = vld [vmem:[%s2974 + $0x10] sm:$0xff]
          %v2978 = vld [vmem:[%s2974 + $0x18] sm:$0xff]
          %v2979 = vld [vmem:[%s2974 + $0x20] sm:$0xff]
          %v2980 = vld [vmem:[%s2974 + $0x28] sm:$0xff]
          %v2981 = vld [vmem:[%s2974 + $0x30] sm:$0xff]
          %v2982 = vld [vmem:[%s2974 + $0x38] sm:$0xff]
          %v2983 = vld [vmem:[%s2974 + $0x40] sm:$0xff]
          %v2984 = vld [vmem:[%s2974 + $0x48] sm:$0xff]
          %v2985 = vld [vmem:[%s2974 + $0x50] sm:$0xff]
          %v2986 = vld [vmem:[%s2974 + $0x58] sm:$0xff]
          %v2987 = vld [vmem:[%s2974 + $0x60] sm:$0xff]
          %v2988 = vld [vmem:[%s2974 + $0x68] sm:$0xff]
          %v2989 = vld [vmem:[%s2974 + $0x70] sm:$0xff]
          %v2990 = vld [vmem:[%s2974 + $0x78] sm:$0xff]
          %v2991 = vld [vmem:[%s2974 + $0x80] sm:$0xff]
          %v2992 = vld [vmem:[%s2974 + $0x88] sm:$0xff]
          %v2993 = vld [vmem:[%s2974 + $0x90] sm:$0xff]
          %v2994 = vld [vmem:[%s2974 + $0x98] sm:$0xff]
          %v2995 = vld [vmem:[%s2974 + $0xa0] sm:$0xff]
          %v2996 = vld [vmem:[%s2974 + $0xa8] sm:$0xff]
          %v2997 = vld [vmem:[%s2974 + $0xb0] sm:$0xff]
          %v2998 = vld [vmem:[%s2974 + $0xb8] sm:$0xff]
          %v2999 = vld [vmem:[%s2974 + $0xc0] sm:$0xff]
          %v3000 = vld [vmem:[%s2974 + $0xc8] sm:$0xff]
          %v3001 = vld [vmem:[%s2974 + $0xd0] sm:$0xff]
          %v3002 = vld [vmem:[%s2974 + $0xd8] sm:$0xff]
          %v3003 = vld [vmem:[%s2974 + $0xe0] sm:$0xff]
          %v3004 = vld [vmem:[%s2974 + $0xe8] sm:$0xff]
          %v3005 = vld [vmem:[%s2974 + $0xf0] sm:$0xff]
          %v3006 = vld [vmem:[%s2974 + $0xf8] sm:$0xff]
          %v3007 = vld [vmem:[%s2974 + $0x100] sm:$0xff]
          %v3008 = vld [vmem:[%s2974 + $0x108] sm:$0xff]
          %v3009 = vld [vmem:[%s2974 + $0x110] sm:$0xff]
          %v3010 = vld [vmem:[%s2974 + $0x118] sm:$0xff]
          %v3011 = vld [vmem:[%s2974 + $0x120] sm:$0xff]
          %v3012 = vld [vmem:[%s2974 + $0x128] sm:$0xff]
          %v3013 = vld [vmem:[%s2974 + $0x130] sm:$0xff]
          %v3014 = vld [vmem:[%s2974 + $0x138] sm:$0xff]
          %v3015 = vld [vmem:[%s2974 + $0x140] sm:$0xff]
          %v3016 = vld [vmem:[%s2974 + $0x148] sm:$0xff]
          %v3017 = vld [vmem:[%s2974 + $0x150] sm:$0xff]
          %v3018 = vld [vmem:[%s2974 + $0x158] sm:$0xff]
          %v3019 = vld [vmem:[%s2974 + $0x160] sm:$0xff]
          %v3020 = vld [vmem:[%s2974 + $0x168] sm:$0xff]
          %v3021 = vld [vmem:[%s2974 + $0x170] sm:$0xff]
          %v3022 = vld [vmem:[%s2974 + $0x178] sm:$0xff]
          %v3023 = vld [vmem:[%s2974 + $0x180] sm:$0xff]
          %v3024 = vld [vmem:[%s2974 + $0x188] sm:$0xff]
          %v3025 = vld [vmem:[%s2974 + $0x190] sm:$0xff]
          %v3026 = vld [vmem:[%s2974 + $0x198] sm:$0xff]
          %v3027 = vld [vmem:[%s2974 + $0x1a0] sm:$0xff]
          %v3028 = vld [vmem:[%s2974 + $0x1a8] sm:$0xff]
          %v3029 = vld [vmem:[%s2974 + $0x1b0] sm:$0xff]
          %v3030 = vld [vmem:[%s2974 + $0x1b8] sm:$0xff]
          %v3031 = vld [vmem:[%s2974 + $0x1c0] sm:$0xff]
          %v3032 = vld [vmem:[%s2974 + $0x1c8] sm:$0xff]
          %v3033 = vld [vmem:[%s2974 + $0x1d0] sm:$0xff]
          %v3034 = vld [vmem:[%s2974 + $0x1d8] sm:$0xff]
          %v3035 = vld [vmem:[%s2974 + $0x1e0] sm:$0xff]
          %v3036 = vld [vmem:[%s2974 + $0x1e8] sm:$0xff]
          %v3037 = vld [vmem:[%s2974 + $0x1f0] sm:$0xff]
          %v3038 = vld [vmem:[%s2974 + $0x1f8] sm:$0xff]
          %v3039 = vld [vmem:[%s2974 + $0x200] sm:$0xff]
          %v3040 = vld [vmem:[%s2974 + $0x208] sm:$0xff]
          %v3041 = vld [vmem:[%s2974 + $0x210] sm:$0xff]
          %v3042 = vld [vmem:[%s2974 + $0x218] sm:$0xff]
          %v3043 = vld [vmem:[%s2974 + $0x220] sm:$0xff]
          %v3044 = vld [vmem:[%s2974 + $0x228] sm:$0xff]
          %v3045 = vld [vmem:[%s2974 + $0x230] sm:$0xff]
          %v3046 = vld [vmem:[%s2974 + $0x238] sm:$0xff]
          %v3047 = vld [vmem:[%s2974 + $0x240] sm:$0xff]
          %v3048 = vld [vmem:[%s2974 + $0x248] sm:$0xff]
          %v3049 = vld [vmem:[%s2974 + $0x250] sm:$0xff]
          %v3050 = vld [vmem:[%s2974 + $0x258] sm:$0xff]
          %v3051 = vld [vmem:[%s2974 + $0x260] sm:$0xff]
          %v3052 = vld [vmem:[%s2974 + $0x268] sm:$0xff]
          %v3053 = vld [vmem:[%s2974 + $0x270] sm:$0xff]
          %v3054 = vld [vmem:[%s2974 + $0x278] sm:$0xff]
          %v3055 = vld [vmem:[%s2974 + $0x280] sm:$0xff]
          %v3056 = vld [vmem:[%s2974 + $0x288] sm:$0xff]
          %v3057 = vld [vmem:[%s2974 + $0x290] sm:$0xff]
          %v3058 = vld [vmem:[%s2974 + $0x298] sm:$0xff]
          %v3059 = vld [vmem:[%s2974 + $0x2a0] sm:$0xff]
          %v3060 = vld [vmem:[%s2974 + $0x2a8] sm:$0xff]
          %v3061 = vld [vmem:[%s2974 + $0x2b0] sm:$0xff]
          %v3062 = vld [vmem:[%s2974 + $0x2b8] sm:$0xff]
          %v3063 = vld [vmem:[%s2974 + $0x2c0] sm:$0xff]
          %v3064 = vld [vmem:[%s2974 + $0x2c8] sm:$0xff]
          %v3065 = vld [vmem:[%s2974 + $0x2d0] sm:$0xff]
          %v3066 = vld [vmem:[%s2974 + $0x2d8] sm:$0xff]
          %v3067 = vld [vmem:[%s2974 + $0x2e0] sm:$0xff]
          %v3068 = vld [vmem:[%s2974 + $0x2e8] sm:$0xff]
          %v3069 = vld [vmem:[%s2974 + $0x2f0] sm:$0xff]
          %v3070 = vld [vmem:[%s2974 + $0x2f8] sm:$0xff]
          %v3071 = vld [vmem:[#allocation15] sm:$0x3]
          %v3073 = vlaneseq
          %v3074 = vshrl.u32 %v3073, 7
          %v3075 = vsub.s32 0, %v3074
          %v3076 = vrot.slane %v3071, %v3075
          %v3077 = vlaneseq
          %v3078 = vshrl.u32 %v3077, 7
          %v3079 = vsub.s32 1, %v3078
          %v3080 = vrot.slane %v3071, %v3079
          %v3083 = vadd.f32 %v2975, %v3076
          %v3084 = vadd.f32 %v2976, %v3080
          %v3085 = vadd.f32 %v2977, %v3076
          %v3086 = vadd.f32 %v2978, %v3080
          %v3087 = vadd.f32 %v2979, %v3076
          %v3088 = vadd.f32 %v2980, %v3080
          %v3089 = vadd.f32 %v2981, %v3076
          %v3090 = vadd.f32 %v2982, %v3080
          %v3091 = vadd.f32 %v2983, %v3076
          %v3092 = vadd.f32 %v2984, %v3080
          %v3093 = vadd.f32 %v2985, %v3076
          %v3094 = vadd.f32 %v2986, %v3080
          %v3095 = vadd.f32 %v2987, %v3076
          %v3096 = vadd.f32 %v2988, %v3080
          %v3097 = vadd.f32 %v2989, %v3076
          %v3098 = vadd.f32 %v2990, %v3080
          %v3099 = vadd.f32 %v2991, %v3076
          %v3100 = vadd.f32 %v2992, %v3080
          %v3101 = vadd.f32 %v2993, %v3076
          %v3102 = vadd.f32 %v2994, %v3080
          %v3103 = vadd.f32 %v2995, %v3076
          %v3104 = vadd.f32 %v2996, %v3080
          %v3105 = vadd.f32 %v2997, %v3076
          %v3106 = vadd.f32 %v2998, %v3080
          %v3107 = vadd.f32 %v2999, %v3076
          %v3108 = vadd.f32 %v3000, %v3080
          %v3109 = vadd.f32 %v3001, %v3076
          %v3110 = vadd.f32 %v3002, %v3080
          %v3111 = vadd.f32 %v3003, %v3076
          %v3112 = vadd.f32 %v3004, %v3080
          %v3113 = vadd.f32 %v3005, %v3076
          %v3114 = vadd.f32 %v3006, %v3080
          %v3115 = vadd.f32 %v3007, %v3076
          %v3116 = vadd.f32 %v3008, %v3080
          %v3117 = vadd.f32 %v3009, %v3076
          %v3118 = vadd.f32 %v3010, %v3080
          %v3119 = vadd.f32 %v3011, %v3076
          %v3120 = vadd.f32 %v3012, %v3080
          %v3121 = vadd.f32 %v3013, %v3076
          %v3122 = vadd.f32 %v3014, %v3080
          %v3123 = vadd.f32 %v3015, %v3076
          %v3124 = vadd.f32 %v3016, %v3080
          %v3125 = vadd.f32 %v3017, %v3076
          %v3126 = vadd.f32 %v3018, %v3080
          %v3127 = vadd.f32 %v3019, %v3076
          %v3128 = vadd.f32 %v3020, %v3080
          %v3129 = vadd.f32 %v3021, %v3076
          %v3130 = vadd.f32 %v3022, %v3080
          %v3131 = vadd.f32 %v3023, %v3076
          %v3132 = vadd.f32 %v3024, %v3080
          %v3133 = vadd.f32 %v3025, %v3076
          %v3134 = vadd.f32 %v3026, %v3080
          %v3135 = vadd.f32 %v3027, %v3076
          %v3136 = vadd.f32 %v3028, %v3080
          %v3137 = vadd.f32 %v3029, %v3076
          %v3138 = vadd.f32 %v3030, %v3080
          %v3139 = vadd.f32 %v3031, %v3076
          %v3140 = vadd.f32 %v3032, %v3080
          %v3141 = vadd.f32 %v3033, %v3076
          %v3142 = vadd.f32 %v3034, %v3080
          %v3143 = vadd.f32 %v3035, %v3076
          %v3144 = vadd.f32 %v3036, %v3080
          %v3145 = vadd.f32 %v3037, %v3076
          %v3146 = vadd.f32 %v3038, %v3080
          %v3147 = vadd.f32 %v3039, %v3076
          %v3148 = vadd.f32 %v3040, %v3080
          %v3149 = vadd.f32 %v3041, %v3076
          %v3150 = vadd.f32 %v3042, %v3080
          %v3151 = vadd.f32 %v3043, %v3076
          %v3152 = vadd.f32 %v3044, %v3080
          %v3153 = vadd.f32 %v3045, %v3076
          %v3154 = vadd.f32 %v3046, %v3080
          %v3155 = vadd.f32 %v3047, %v3076
          %v3156 = vadd.f32 %v3048, %v3080
          %v3157 = vadd.f32 %v3049, %v3076
          %v3158 = vadd.f32 %v3050, %v3080
          %v3159 = vadd.f32 %v3051, %v3076
          %v3160 = vadd.f32 %v3052, %v3080
          %v3161 = vadd.f32 %v3053, %v3076
          %v3162 = vadd.f32 %v3054, %v3080
          %v3163 = vadd.f32 %v3055, %v3076
          %v3164 = vadd.f32 %v3056, %v3080
          %v3165 = vadd.f32 %v3057, %v3076
          %v3166 = vadd.f32 %v3058, %v3080
          %v3167 = vadd.f32 %v3059, %v3076
          %v3168 = vadd.f32 %v3060, %v3080
          %v3169 = vadd.f32 %v3061, %v3076
          %v3170 = vadd.f32 %v3062, %v3080
          %v3171 = vadd.f32 %v3063, %v3076
          %v3172 = vadd.f32 %v3064, %v3080
          %v3173 = vadd.f32 %v3065, %v3076
          %v3174 = vadd.f32 %v3066, %v3080
          %v3175 = vadd.f32 %v3067, %v3076
          %v3176 = vadd.f32 %v3068, %v3080
          %v3177 = vadd.f32 %v3069, %v3076
          %v3178 = vadd.f32 %v3070, %v3080
          %vm3179 = vcmp.gt.f32.partialorder %v3083, 0.0
          %vm3180 = vcmp.gt.f32.partialorder %v3084, 0.0
          %vm3181 = vcmp.gt.f32.partialorder %v3085, 0.0
          %vm3182 = vcmp.gt.f32.partialorder %v3086, 0.0
          %vm3183 = vcmp.gt.f32.partialorder %v3087, 0.0
          %vm3184 = vcmp.gt.f32.partialorder %v3088, 0.0
          %vm3185 = vcmp.gt.f32.partialorder %v3089, 0.0
          %vm3186 = vcmp.gt.f32.partialorder %v3090, 0.0
          %vm3187 = vcmp.gt.f32.partialorder %v3091, 0.0
          %vm3188 = vcmp.gt.f32.partialorder %v3092, 0.0
          %vm3189 = vcmp.gt.f32.partialorder %v3093, 0.0
          %vm3190 = vcmp.gt.f32.partialorder %v3094, 0.0
          %vm3191 = vcmp.gt.f32.partialorder %v3095, 0.0
          %vm3192 = vcmp.gt.f32.partialorder %v3096, 0.0
          %vm3193 = vcmp.gt.f32.partialorder %v3097, 0.0
          %vm3194 = vcmp.gt.f32.partialorder %v3098, 0.0
          %vm3195 = vcmp.gt.f32.partialorder %v3099, 0.0
          %vm3196 = vcmp.gt.f32.partialorder %v3100, 0.0
          %vm3197 = vcmp.gt.f32.partialorder %v3101, 0.0
          %vm3198 = vcmp.gt.f32.partialorder %v3102, 0.0
          %vm3199 = vcmp.gt.f32.partialorder %v3103, 0.0
          %vm3200 = vcmp.gt.f32.partialorder %v3104, 0.0
          %vm3201 = vcmp.gt.f32.partialorder %v3105, 0.0
          %vm3202 = vcmp.gt.f32.partialorder %v3106, 0.0
          %vm3203 = vcmp.gt.f32.partialorder %v3107, 0.0
          %vm3204 = vcmp.gt.f32.partialorder %v3108, 0.0
          %vm3205 = vcmp.gt.f32.partialorder %v3109, 0.0
          %vm3206 = vcmp.gt.f32.partialorder %v3110, 0.0
          %vm3207 = vcmp.gt.f32.partialorder %v3111, 0.0
          %vm3208 = vcmp.gt.f32.partialorder %v3112, 0.0
          %vm3209 = vcmp.gt.f32.partialorder %v3113, 0.0
          %vm3210 = vcmp.gt.f32.partialorder %v3114, 0.0
          %vm3211 = vcmp.gt.f32.partialorder %v3115, 0.0
          %vm3212 = vcmp.gt.f32.partialorder %v3116, 0.0
          %vm3213 = vcmp.gt.f32.partialorder %v3117, 0.0
          %vm3214 = vcmp.gt.f32.partialorder %v3118, 0.0
          %vm3215 = vcmp.gt.f32.partialorder %v3119, 0.0
          %vm3216 = vcmp.gt.f32.partialorder %v3120, 0.0
          %vm3217 = vcmp.gt.f32.partialorder %v3121, 0.0
          %vm3218 = vcmp.gt.f32.partialorder %v3122, 0.0
          %vm3219 = vcmp.gt.f32.partialorder %v3123, 0.0
          %vm3220 = vcmp.gt.f32.partialorder %v3124, 0.0
          %vm3221 = vcmp.gt.f32.partialorder %v3125, 0.0
          %vm3222 = vcmp.gt.f32.partialorder %v3126, 0.0
          %vm3223 = vcmp.gt.f32.partialorder %v3127, 0.0
          %vm3224 = vcmp.gt.f32.partialorder %v3128, 0.0
          %vm3225 = vcmp.gt.f32.partialorder %v3129, 0.0
          %vm3226 = vcmp.gt.f32.partialorder %v3130, 0.0
          %vm3227 = vcmp.gt.f32.partialorder %v3131, 0.0
          %vm3228 = vcmp.gt.f32.partialorder %v3132, 0.0
          %vm3229 = vcmp.gt.f32.partialorder %v3133, 0.0
          %vm3230 = vcmp.gt.f32.partialorder %v3134, 0.0
          %vm3231 = vcmp.gt.f32.partialorder %v3135, 0.0
          %vm3232 = vcmp.gt.f32.partialorder %v3136, 0.0
          %vm3233 = vcmp.gt.f32.partialorder %v3137, 0.0
          %vm3234 = vcmp.gt.f32.partialorder %v3138, 0.0
          %vm3235 = vcmp.gt.f32.partialorder %v3139, 0.0
          %vm3236 = vcmp.gt.f32.partialorder %v3140, 0.0
          %vm3237 = vcmp.gt.f32.partialorder %v3141, 0.0
          %vm3238 = vcmp.gt.f32.partialorder %v3142, 0.0
          %vm3239 = vcmp.gt.f32.partialorder %v3143, 0.0
          %vm3240 = vcmp.gt.f32.partialorder %v3144, 0.0
          %vm3241 = vcmp.gt.f32.partialorder %v3145, 0.0
          %vm3242 = vcmp.gt.f32.partialorder %v3146, 0.0
          %vm3243 = vcmp.gt.f32.partialorder %v3147, 0.0
          %vm3244 = vcmp.gt.f32.partialorder %v3148, 0.0
          %vm3245 = vcmp.gt.f32.partialorder %v3149, 0.0
          %vm3246 = vcmp.gt.f32.partialorder %v3150, 0.0
          %vm3247 = vcmp.gt.f32.partialorder %v3151, 0.0
          %vm3248 = vcmp.gt.f32.partialorder %v3152, 0.0
          %vm3249 = vcmp.gt.f32.partialorder %v3153, 0.0
          %vm3250 = vcmp.gt.f32.partialorder %v3154, 0.0
          %vm3251 = vcmp.gt.f32.partialorder %v3155, 0.0
          %vm3252 = vcmp.gt.f32.partialorder %v3156, 0.0
          %vm3253 = vcmp.gt.f32.partialorder %v3157, 0.0
          %vm3254 = vcmp.gt.f32.partialorder %v3158, 0.0
          %vm3255 = vcmp.gt.f32.partialorder %v3159, 0.0
          %vm3256 = vcmp.gt.f32.partialorder %v3160, 0.0
          %vm3257 = vcmp.gt.f32.partialorder %v3161, 0.0
          %vm3258 = vcmp.gt.f32.partialorder %v3162, 0.0
          %vm3259 = vcmp.gt.f32.partialorder %v3163, 0.0
          %vm3260 = vcmp.gt.f32.partialorder %v3164, 0.0
          %vm3261 = vcmp.gt.f32.partialorder %v3165, 0.0
          %vm3262 = vcmp.gt.f32.partialorder %v3166, 0.0
          %vm3263 = vcmp.gt.f32.partialorder %v3167, 0.0
          %vm3264 = vcmp.gt.f32.partialorder %v3168, 0.0
          %vm3265 = vcmp.gt.f32.partialorder %v3169, 0.0
          %vm3266 = vcmp.gt.f32.partialorder %v3170, 0.0
          %vm3267 = vcmp.gt.f32.partialorder %v3171, 0.0
          %vm3268 = vcmp.gt.f32.partialorder %v3172, 0.0
          %vm3269 = vcmp.gt.f32.partialorder %v3173, 0.0
          %vm3270 = vcmp.gt.f32.partialorder %v3174, 0.0
          %vm3271 = vcmp.gt.f32.partialorder %v3175, 0.0
          %vm3272 = vcmp.gt.f32.partialorder %v3176, 0.0
          %vm3273 = vcmp.gt.f32.partialorder %v3177, 0.0
          %vm3274 = vcmp.gt.f32.partialorder %v3178, 0.0
          %v3275 = vstv %s2969
          %v3276 = vmul.f32 %v3275, %v3083
          %v3277 = vmul.f32 %v3275, %v3084
          %v3278 = vmul.f32 %v3275, %v3085
          %v3279 = vmul.f32 %v3275, %v3086
          %v3280 = vmul.f32 %v3275, %v3087
          %v3281 = vmul.f32 %v3275, %v3088
          %v3282 = vmul.f32 %v3275, %v3089
          %v3283 = vmul.f32 %v3275, %v3090
          %v3284 = vmul.f32 %v3275, %v3091
          %v3285 = vmul.f32 %v3275, %v3092
          %v3286 = vmul.f32 %v3275, %v3093
          %v3287 = vmul.f32 %v3275, %v3094
          %v3288 = vmul.f32 %v3275, %v3095
          %v3289 = vmul.f32 %v3275, %v3096
          %v3290 = vmul.f32 %v3275, %v3097
          %v3291 = vmul.f32 %v3275, %v3098
          %v3292 = vmul.f32 %v3275, %v3099
          %v3293 = vmul.f32 %v3275, %v3100
          %v3294 = vmul.f32 %v3275, %v3101
          %v3295 = vmul.f32 %v3275, %v3102
          %v3296 = vmul.f32 %v3275, %v3103
          %v3297 = vmul.f32 %v3275, %v3104
          %v3298 = vmul.f32 %v3275, %v3105
          %v3299 = vmul.f32 %v3275, %v3106
          %v3300 = vmul.f32 %v3275, %v3107
          %v3301 = vmul.f32 %v3275, %v3108
          %v3302 = vmul.f32 %v3275, %v3109
          %v3303 = vmul.f32 %v3275, %v3110
          %v3304 = vmul.f32 %v3275, %v3111
          %v3305 = vmul.f32 %v3275, %v3112
          %v3306 = vmul.f32 %v3275, %v3113
          %v3307 = vmul.f32 %v3275, %v3114
          %v3308 = vmul.f32 %v3275, %v3115
          %v3309 = vmul.f32 %v3275, %v3116
          %v3310 = vmul.f32 %v3275, %v3117
          %v3311 = vmul.f32 %v3275, %v3118
          %v3312 = vmul.f32 %v3275, %v3119
          %v3313 = vmul.f32 %v3275, %v3120
          %v3314 = vmul.f32 %v3275, %v3121
          %v3315 = vmul.f32 %v3275, %v3122
          %v3316 = vmul.f32 %v3275, %v3123
          %v3317 = vmul.f32 %v3275, %v3124
          %v3318 = vmul.f32 %v3275, %v3125
          %v3319 = vmul.f32 %v3275, %v3126
          %v3320 = vmul.f32 %v3275, %v3127
          %v3321 = vmul.f32 %v3275, %v3128
          %v3322 = vmul.f32 %v3275, %v3129
          %v3323 = vmul.f32 %v3275, %v3130
          %v3324 = vmul.f32 %v3275, %v3131
          %v3325 = vmul.f32 %v3275, %v3132
          %v3326 = vmul.f32 %v3275, %v3133
          %v3327 = vmul.f32 %v3275, %v3134
          %v3328 = vmul.f32 %v3275, %v3135
          %v3329 = vmul.f32 %v3275, %v3136
          %v3330 = vmul.f32 %v3275, %v3137
          %v3331 = vmul.f32 %v3275, %v3138
          %v3332 = vmul.f32 %v3275, %v3139
          %v3333 = vmul.f32 %v3275, %v3140
          %v3334 = vmul.f32 %v3275, %v3141
          %v3335 = vmul.f32 %v3275, %v3142
          %v3336 = vmul.f32 %v3275, %v3143
          %v3337 = vmul.f32 %v3275, %v3144
          %v3338 = vmul.f32 %v3275, %v3145
          %v3339 = vmul.f32 %v3275, %v3146
          %v3340 = vmul.f32 %v3275, %v3147
          %v3341 = vmul.f32 %v3275, %v3148
          %v3342 = vmul.f32 %v3275, %v3149
          %v3343 = vmul.f32 %v3275, %v3150
          %v3344 = vmul.f32 %v3275, %v3151
          %v3345 = vmul.f32 %v3275, %v3152
          %v3346 = vmul.f32 %v3275, %v3153
          %v3347 = vmul.f32 %v3275, %v3154
          %v3348 = vmul.f32 %v3275, %v3155
          %v3349 = vmul.f32 %v3275, %v3156
          %v3350 = vmul.f32 %v3275, %v3157
          %v3351 = vmul.f32 %v3275, %v3158
          %v3352 = vmul.f32 %v3275, %v3159
          %v3353 = vmul.f32 %v3275, %v3160
          %v3354 = vmul.f32 %v3275, %v3161
          %v3355 = vmul.f32 %v3275, %v3162
          %v3356 = vmul.f32 %v3275, %v3163
          %v3357 = vmul.f32 %v3275, %v3164
          %v3358 = vmul.f32 %v3275, %v3165
          %v3359 = vmul.f32 %v3275, %v3166
          %v3360 = vmul.f32 %v3275, %v3167
          %v3361 = vmul.f32 %v3275, %v3168
          %v3362 = vmul.f32 %v3275, %v3169
          %v3363 = vmul.f32 %v3275, %v3170
          %v3364 = vmul.f32 %v3275, %v3171
          %v3365 = vmul.f32 %v3275, %v3172
          %v3366 = vmul.f32 %v3275, %v3173
          %v3367 = vmul.f32 %v3275, %v3174
          %v3368 = vmul.f32 %v3275, %v3175
          %v3369 = vmul.f32 %v3275, %v3176
          %v3370 = vmul.f32 %v3275, %v3177
          %v3371 = vmul.f32 %v3275, %v3178
          %v3372 = vsel %vm3179, %v3083, %v3276
          %v3373 = vsel %vm3180, %v3084, %v3277
          %v3374 = vsel %vm3181, %v3085, %v3278
          %v3375 = vsel %vm3182, %v3086, %v3279
          %v3376 = vsel %vm3183, %v3087, %v3280
          %v3377 = vsel %vm3184, %v3088, %v3281
          %v3378 = vsel %vm3185, %v3089, %v3282
          %v3379 = vsel %vm3186, %v3090, %v3283
          %v3380 = vsel %vm3187, %v3091, %v3284
          %v3381 = vsel %vm3188, %v3092, %v3285
          %v3382 = vsel %vm3189, %v3093, %v3286
          %v3383 = vsel %vm3190, %v3094, %v3287
          %v3384 = vsel %vm3191, %v3095, %v3288
          %v3385 = vsel %vm3192, %v3096, %v3289
          %v3386 = vsel %vm3193, %v3097, %v3290
          %v3387 = vsel %vm3194, %v3098, %v3291
          %v3388 = vsel %vm3195, %v3099, %v3292
          %v3389 = vsel %vm3196, %v3100, %v3293
          %v3390 = vsel %vm3197, %v3101, %v3294
          %v3391 = vsel %vm3198, %v3102, %v3295
          %v3392 = vsel %vm3199, %v3103, %v3296
          %v3393 = vsel %vm3200, %v3104, %v3297
          %v3394 = vsel %vm3201, %v3105, %v3298
          %v3395 = vsel %vm3202, %v3106, %v3299
          %v3396 = vsel %vm3203, %v3107, %v3300
          %v3397 = vsel %vm3204, %v3108, %v3301
          %v3398 = vsel %vm3205, %v3109, %v3302
          %v3399 = vsel %vm3206, %v3110, %v3303
          %v3400 = vsel %vm3207, %v3111, %v3304
          %v3401 = vsel %vm3208, %v3112, %v3305
          %v3402 = vsel %vm3209, %v3113, %v3306
          %v3403 = vsel %vm3210, %v3114, %v3307
          %v3404 = vsel %vm3211, %v3115, %v3308
          %v3405 = vsel %vm3212, %v3116, %v3309
          %v3406 = vsel %vm3213, %v3117, %v3310
          %v3407 = vsel %vm3214, %v3118, %v3311
          %v3408 = vsel %vm3215, %v3119, %v3312
          %v3409 = vsel %vm3216, %v3120, %v3313
          %v3410 = vsel %vm3217, %v3121, %v3314
          %v3411 = vsel %vm3218, %v3122, %v3315
          %v3412 = vsel %vm3219, %v3123, %v3316
          %v3413 = vsel %vm3220, %v3124, %v3317
          %v3414 = vsel %vm3221, %v3125, %v3318
          %v3415 = vsel %vm3222, %v3126, %v3319
          %v3416 = vsel %vm3223, %v3127, %v3320
          %v3417 = vsel %vm3224, %v3128, %v3321
          %v3418 = vsel %vm3225, %v3129, %v3322
          %v3419 = vsel %vm3226, %v3130, %v3323
          %v3420 = vsel %vm3227, %v3131, %v3324
          %v3421 = vsel %vm3228, %v3132, %v3325
          %v3422 = vsel %vm3229, %v3133, %v3326
          %v3423 = vsel %vm3230, %v3134, %v3327
          %v3424 = vsel %vm3231, %v3135, %v3328
          %v3425 = vsel %vm3232, %v3136, %v3329
          %v3426 = vsel %vm3233, %v3137, %v3330
          %v3427 = vsel %vm3234, %v3138, %v3331
          %v3428 = vsel %vm3235, %v3139, %v3332
          %v3429 = vsel %vm3236, %v3140, %v3333
          %v3430 = vsel %vm3237, %v3141, %v3334
          %v3431 = vsel %vm3238, %v3142, %v3335
          %v3432 = vsel %vm3239, %v3143, %v3336
          %v3433 = vsel %vm3240, %v3144, %v3337
          %v3434 = vsel %vm3241, %v3145, %v3338
          %v3435 = vsel %vm3242, %v3146, %v3339
          %v3436 = vsel %vm3243, %v3147, %v3340
          %v3437 = vsel %vm3244, %v3148, %v3341
          %v3438 = vsel %vm3245, %v3149, %v3342
          %v3439 = vsel %vm3246, %v3150, %v3343
          %v3440 = vsel %vm3247, %v3151, %v3344
          %v3441 = vsel %vm3248, %v3152, %v3345
          %v3442 = vsel %vm3249, %v3153, %v3346
          %v3443 = vsel %vm3250, %v3154, %v3347
          %v3444 = vsel %vm3251, %v3155, %v3348
          %v3445 = vsel %vm3252, %v3156, %v3349
          %v3446 = vsel %vm3253, %v3157, %v3350
          %v3447 = vsel %vm3254, %v3158, %v3351
          %v3448 = vsel %vm3255, %v3159, %v3352
          %v3449 = vsel %vm3256, %v3160, %v3353
          %v3450 = vsel %vm3257, %v3161, %v3354
          %v3451 = vsel %vm3258, %v3162, %v3355
          %v3452 = vsel %vm3259, %v3163, %v3356
          %v3453 = vsel %vm3260, %v3164, %v3357
          %v3454 = vsel %vm3261, %v3165, %v3358
          %v3455 = vsel %vm3262, %v3166, %v3359
          %v3456 = vsel %vm3263, %v3167, %v3360
          %v3457 = vsel %vm3264, %v3168, %v3361
          %v3458 = vsel %vm3265, %v3169, %v3362
          %v3459 = vsel %vm3266, %v3170, %v3363
          %v3460 = vsel %vm3267, %v3171, %v3364
          %v3461 = vsel %vm3268, %v3172, %v3365
          %v3462 = vsel %vm3269, %v3173, %v3366
          %v3463 = vsel %vm3270, %v3174, %v3367
          %v3464 = vsel %vm3271, %v3175, %v3368
          %v3465 = vsel %vm3272, %v3176, %v3369
          %v3466 = vsel %vm3273, %v3177, %v3370
          %v3467 = vsel %vm3274, %v3178, %v3371
          %3468 = vst [vmem:[%s2974] sm:$0xff] %v3372
          %3469 = vst [vmem:[%s2974 + $0x8] sm:$0xff] %v3373
          %3470 = vst [vmem:[%s2974 + $0x10] sm:$0xff] %v3374
          %3471 = vst [vmem:[%s2974 + $0x18] sm:$0xff] %v3375
          %3472 = vst [vmem:[%s2974 + $0x20] sm:$0xff] %v3376
          %3473 = vst [vmem:[%s2974 + $0x28] sm:$0xff] %v3377
          %3474 = vst [vmem:[%s2974 + $0x30] sm:$0xff] %v3378
          %3475 = vst [vmem:[%s2974 + $0x38] sm:$0xff] %v3379
          %3476 = vst [vmem:[%s2974 + $0x40] sm:$0xff] %v3380
          %3477 = vst [vmem:[%s2974 + $0x48] sm:$0xff] %v3381
          %3478 = vst [vmem:[%s2974 + $0x50] sm:$0xff] %v3382
          %3479 = vst [vmem:[%s2974 + $0x58] sm:$0xff] %v3383
          %3480 = vst [vmem:[%s2974 + $0x60] sm:$0xff] %v3384
          %3481 = vst [vmem:[%s2974 + $0x68] sm:$0xff] %v3385
          %3482 = vst [vmem:[%s2974 + $0x70] sm:$0xff] %v3386
          %3483 = vst [vmem:[%s2974 + $0x78] sm:$0xff] %v3387
          %3484 = vst [vmem:[%s2974 + $0x80] sm:$0xff] %v3388
          %3485 = vst [vmem:[%s2974 + $0x88] sm:$0xff] %v3389
          %3486 = vst [vmem:[%s2974 + $0x90] sm:$0xff] %v3390
          %3487 = vst [vmem:[%s2974 + $0x98] sm:$0xff] %v3391
          %3488 = vst [vmem:[%s2974 + $0xa0] sm:$0xff] %v3392
          %3489 = vst [vmem:[%s2974 + $0xa8] sm:$0xff] %v3393
          %3490 = vst [vmem:[%s2974 + $0xb0] sm:$0xff] %v3394
          %3491 = vst [vmem:[%s2974 + $0xb8] sm:$0xff] %v3395
          %3492 = vst [vmem:[%s2974 + $0xc0] sm:$0xff] %v3396
          %3493 = vst [vmem:[%s2974 + $0xc8] sm:$0xff] %v3397
          %3494 = vst [vmem:[%s2974 + $0xd0] sm:$0xff] %v3398
          %3495 = vst [vmem:[%s2974 + $0xd8] sm:$0xff] %v3399
          %3496 = vst [vmem:[%s2974 + $0xe0] sm:$0xff] %v3400
          %3497 = vst [vmem:[%s2974 + $0xe8] sm:$0xff] %v3401
          %3498 = vst [vmem:[%s2974 + $0xf0] sm:$0xff] %v3402
          %3499 = vst [vmem:[%s2974 + $0xf8] sm:$0xff] %v3403
          %3500 = vst [vmem:[%s2974 + $0x100] sm:$0xff] %v3404
          %3501 = vst [vmem:[%s2974 + $0x108] sm:$0xff] %v3405
          %3502 = vst [vmem:[%s2974 + $0x110] sm:$0xff] %v3406
          %3503 = vst [vmem:[%s2974 + $0x118] sm:$0xff] %v3407
          %3504 = vst [vmem:[%s2974 + $0x120] sm:$0xff] %v3408
          %3505 = vst [vmem:[%s2974 + $0x128] sm:$0xff] %v3409
          %3506 = vst [vmem:[%s2974 + $0x130] sm:$0xff] %v3410
          %3507 = vst [vmem:[%s2974 + $0x138] sm:$0xff] %v3411
          %3508 = vst [vmem:[%s2974 + $0x140] sm:$0xff] %v3412
          %3509 = vst [vmem:[%s2974 + $0x148] sm:$0xff] %v3413
          %3510 = vst [vmem:[%s2974 + $0x150] sm:$0xff] %v3414
          %3511 = vst [vmem:[%s2974 + $0x158] sm:$0xff] %v3415
          %3512 = vst [vmem:[%s2974 + $0x160] sm:$0xff] %v3416
          %3513 = vst [vmem:[%s2974 + $0x168] sm:$0xff] %v3417
          %3514 = vst [vmem:[%s2974 + $0x170] sm:$0xff] %v3418
          %3515 = vst [vmem:[%s2974 + $0x178] sm:$0xff] %v3419
          %3516 = vst [vmem:[%s2974 + $0x180] sm:$0xff] %v3420
          %3517 = vst [vmem:[%s2974 + $0x188] sm:$0xff] %v3421
          %3518 = vst [vmem:[%s2974 + $0x190] sm:$0xff] %v3422
          %3519 = vst [vmem:[%s2974 + $0x198] sm:$0xff] %v3423
          %3520 = vst [vmem:[%s2974 + $0x1a0] sm:$0xff] %v3424
          %3521 = vst [vmem:[%s2974 + $0x1a8] sm:$0xff] %v3425
          %3522 = vst [vmem:[%s2974 + $0x1b0] sm:$0xff] %v3426
          %3523 = vst [vmem:[%s2974 + $0x1b8] sm:$0xff] %v3427
          %3524 = vst [vmem:[%s2974 + $0x1c0] sm:$0xff] %v3428
          %3525 = vst [vmem:[%s2974 + $0x1c8] sm:$0xff] %v3429
          %3526 = vst [vmem:[%s2974 + $0x1d0] sm:$0xff] %v3430
          %3527 = vst [vmem:[%s2974 + $0x1d8] sm:$0xff] %v3431
          %3528 = vst [vmem:[%s2974 + $0x1e0] sm:$0xff] %v3432
          %3529 = vst [vmem:[%s2974 + $0x1e8] sm:$0xff] %v3433
          %3530 = vst [vmem:[%s2974 + $0x1f0] sm:$0xff] %v3434
          %3531 = vst [vmem:[%s2974 + $0x1f8] sm:$0xff] %v3435
          %3532 = vst [vmem:[%s2974 + $0x200] sm:$0xff] %v3436
          %3533 = vst [vmem:[%s2974 + $0x208] sm:$0xff] %v3437
          %3534 = vst [vmem:[%s2974 + $0x210] sm:$0xff] %v3438
          %3535 = vst [vmem:[%s2974 + $0x218] sm:$0xff] %v3439
          %3536 = vst [vmem:[%s2974 + $0x220] sm:$0xff] %v3440
          %3537 = vst [vmem:[%s2974 + $0x228] sm:$0xff] %v3441
          %3538 = vst [vmem:[%s2974 + $0x230] sm:$0xff] %v3442
          %3539 = vst [vmem:[%s2974 + $0x238] sm:$0xff] %v3443
          %3540 = vst [vmem:[%s2974 + $0x240] sm:$0xff] %v3444
          %3541 = vst [vmem:[%s2974 + $0x248] sm:$0xff] %v3445
          %3542 = vst [vmem:[%s2974 + $0x250] sm:$0xff] %v3446
          %3543 = vst [vmem:[%s2974 + $0x258] sm:$0xff] %v3447
          %3544 = vst [vmem:[%s2974 + $0x260] sm:$0xff] %v3448
          %3545 = vst [vmem:[%s2974 + $0x268] sm:$0xff] %v3449
          %3546 = vst [vmem:[%s2974 + $0x270] sm:$0xff] %v3450
          %3547 = vst [vmem:[%s2974 + $0x278] sm:$0xff] %v3451
          %3548 = vst [vmem:[%s2974 + $0x280] sm:$0xff] %v3452
          %3549 = vst [vmem:[%s2974 + $0x288] sm:$0xff] %v3453
          %3550 = vst [vmem:[%s2974 + $0x290] sm:$0xff] %v3454
          %3551 = vst [vmem:[%s2974 + $0x298] sm:$0xff] %v3455
          %3552 = vst [vmem:[%s2974 + $0x2a0] sm:$0xff] %v3456
          %3553 = vst [vmem:[%s2974 + $0x2a8] sm:$0xff] %v3457
          %3554 = vst [vmem:[%s2974 + $0x2b0] sm:$0xff] %v3458
          %3555 = vst [vmem:[%s2974 + $0x2b8] sm:$0xff] %v3459
          %3556 = vst [vmem:[%s2974 + $0x2c0] sm:$0xff] %v3460
          %3557 = vst [vmem:[%s2974 + $0x2c8] sm:$0xff] %v3461
          %3558 = vst [vmem:[%s2974 + $0x2d0] sm:$0xff] %v3462
          %3559 = vst [vmem:[%s2974 + $0x2d8] sm:$0xff] %v3463
          %3560 = vst [vmem:[%s2974 + $0x2e0] sm:$0xff] %v3464
          %3561 = vst [vmem:[%s2974 + $0x2e8] sm:$0xff] %v3465
          %3562 = vst [vmem:[%s2974 + $0x2f0] sm:$0xff] %v3466
          %3563 = vst [vmem:[%s2974 + $0x2f8] sm:$0xff] %v3467
          %v3564 = vlaneseq
          %v3565 = vshrl.u32 %v3564, 7
          %v3566 = vadd.s32 %v3565, 8
          %v3567 = vadd.s32 %v3565, 16
          %v3568 = vadd.s32 %v3565, 24
          %v3569 = vadd.s32 %v3565, 32
          %v3570 = vadd.s32 %v3565, 40
          %v3571 = vadd.s32 %v3565, 48
          %v3572 = vadd.s32 %v3565, 56
          %v3573 = vadd.s32 %v3565, 64
          %v3574 = vadd.s32 %v3565, 72
          %v3575 = vadd.s32 %v3565, 80
          %v3576 = vadd.s32 %v3565, 88
          %v3577 = vadd.s32 %v3565, 96
          %v3578 = vadd.s32 %v3565, 104
          %v3579 = vadd.s32 %v3565, 112
          %v3580 = vadd.s32 %v3565, 120
          %v3581 = vadd.s32 %v3565, 128
          %v3582 = vadd.s32 %v3565, 136
          %v3583 = vadd.s32 %v3565, 144
          %v3584 = vadd.s32 %v3565, 152
          %v3585 = vadd.s32 %v3565, 160
          %v3586 = vadd.s32 %v3565, 168
          %v3587 = vadd.s32 %v3565, 176
          %v3588 = vadd.s32 %v3565, 184
          %v3589 = vadd.s32 %v3565, 192
          %v3590 = vadd.s32 %v3565, 200
          %v3591 = vadd.s32 %v3565, 208
          %v3592 = vadd.s32 %v3565, 216
          %v3593 = vadd.s32 %v3565, 224
          %v3594 = vadd.s32 %v3565, 232
          %v3595 = vadd.s32 %v3565, 240
          %v3596 = vadd.s32 %v3565, 248
          %v3597 = vadd.s32 %v3565, 256
          %v3598 = vadd.s32 %v3565, 264
          %v3599 = vadd.s32 %v3565, 272
          %v3600 = vadd.s32 %v3565, 280
          %v3601 = vadd.s32 %v3565, 288
          %v3602 = vadd.s32 %v3565, 296
          %v3603 = vadd.s32 %v3565, 304
          %v3604 = vadd.s32 %v3565, 312
          %v3605 = vadd.s32 %v3565, 320
          %v3606 = vadd.s32 %v3565, 328
          %v3607 = vadd.s32 %v3565, 336
          %v3608 = vadd.s32 %v3565, 344
          %v3609 = vadd.s32 %v3565, 352
          %v3610 = vadd.s32 %v3565, 360
          %v3611 = vadd.s32 %v3565, 368
          %v3612 = vadd.s32 %v3565, 376
          %v3613 = vstv %s1490
          %v3614 = vadd.s32 %v3613, %v3565
          %v3615 = vadd.s32 %v3613, %v3566
          %v3616 = vadd.s32 %v3613, %v3567
          %v3617 = vadd.s32 %v3613, %v3568
          %v3618 = vadd.s32 %v3613, %v3569
          %v3619 = vadd.s32 %v3613, %v3570
          %v3620 = vadd.s32 %v3613, %v3571
          %v3621 = vadd.s32 %v3613, %v3572
          %v3622 = vadd.s32 %v3613, %v3573
          %v3623 = vadd.s32 %v3613, %v3574
          %v3624 = vadd.s32 %v3613, %v3575
          %v3625 = vadd.s32 %v3613, %v3576
          %v3626 = vadd.s32 %v3613, %v3577
          %v3627 = vadd.s32 %v3613, %v3578
          %v3628 = vadd.s32 %v3613, %v3579
          %v3629 = vadd.s32 %v3613, %v3580
          %v3630 = vadd.s32 %v3613, %v3581
          %v3631 = vadd.s32 %v3613, %v3582
          %v3632 = vadd.s32 %v3613, %v3583
          %v3633 = vadd.s32 %v3613, %v3584
          %v3634 = vadd.s32 %v3613, %v3585
          %v3635 = vadd.s32 %v3613, %v3586
          %v3636 = vadd.s32 %v3613, %v3587
          %v3637 = vadd.s32 %v3613, %v3588
          %v3638 = vadd.s32 %v3613, %v3589
          %v3639 = vadd.s32 %v3613, %v3590
          %v3640 = vadd.s32 %v3613, %v3591
          %v3641 = vadd.s32 %v3613, %v3592
          %v3642 = vadd.s32 %v3613, %v3593
          %v3643 = vadd.s32 %v3613, %v3594
          %v3644 = vadd.s32 %v3613, %v3595
          %v3645 = vadd.s32 %v3613, %v3596
          %v3646 = vadd.s32 %v3613, %v3597
          %v3647 = vadd.s32 %v3613, %v3598
          %v3648 = vadd.s32 %v3613, %v3599
          %v3649 = vadd.s32 %v3613, %v3600
          %v3650 = vadd.s32 %v3613, %v3601
          %v3651 = vadd.s32 %v3613, %v3602
          %v3652 = vadd.s32 %v3613, %v3603
          %v3653 = vadd.s32 %v3613, %v3604
          %v3654 = vadd.s32 %v3613, %v3605
          %v3655 = vadd.s32 %v3613, %v3606
          %v3656 = vadd.s32 %v3613, %v3607
          %v3657 = vadd.s32 %v3613, %v3608
          %v3658 = vadd.s32 %v3613, %v3609
          %v3659 = vadd.s32 %v3613, %v3610
          %v3660 = vadd.s32 %v3613, %v3611
          %v3661 = vadd.s32 %v3613, %v3612
          %vm3662 = vcmp.lt.s32.totalorder %v3614, 300
          %vm3663 = vcmp.lt.s32.totalorder %v3615, 300
          %vm3664 = vcmp.lt.s32.totalorder %v3616, 300
          %vm3665 = vcmp.lt.s32.totalorder %v3617, 300
          %vm3666 = vcmp.lt.s32.totalorder %v3618, 300
          %vm3667 = vcmp.lt.s32.totalorder %v3619, 300
          %vm3668 = vcmp.lt.s32.totalorder %v3620, 300
          %vm3669 = vcmp.lt.s32.totalorder %v3621, 300
          %vm3670 = vcmp.lt.s32.totalorder %v3622, 300
          %vm3671 = vcmp.lt.s32.totalorder %v3623, 300
          %vm3672 = vcmp.lt.s32.totalorder %v3624, 300
          %vm3673 = vcmp.lt.s32.totalorder %v3625, 300
          %vm3674 = vcmp.lt.s32.totalorder %v3626, 300
          %vm3675 = vcmp.lt.s32.totalorder %v3627, 300
          %vm3676 = vcmp.lt.s32.totalorder %v3628, 300
          %vm3677 = vcmp.lt.s32.totalorder %v3629, 300
          %vm3678 = vcmp.lt.s32.totalorder %v3630, 300
          %vm3679 = vcmp.lt.s32.totalorder %v3631, 300
          %vm3680 = vcmp.lt.s32.totalorder %v3632, 300
          %vm3681 = vcmp.lt.s32.totalorder %v3633, 300
          %vm3682 = vcmp.lt.s32.totalorder %v3634, 300
          %vm3683 = vcmp.lt.s32.totalorder %v3635, 300
          %vm3684 = vcmp.lt.s32.totalorder %v3636, 300
          %vm3685 = vcmp.lt.s32.totalorder %v3637, 300
          %vm3686 = vcmp.lt.s32.totalorder %v3638, 300
          %vm3687 = vcmp.lt.s32.totalorder %v3639, 300
          %vm3688 = vcmp.lt.s32.totalorder %v3640, 300
          %vm3689 = vcmp.lt.s32.totalorder %v3641, 300
          %vm3690 = vcmp.lt.s32.totalorder %v3642, 300
          %vm3691 = vcmp.lt.s32.totalorder %v3643, 300
          %vm3692 = vcmp.lt.s32.totalorder %v3644, 300
          %vm3693 = vcmp.lt.s32.totalorder %v3645, 300
          %vm3694 = vcmp.lt.s32.totalorder %v3646, 300
          %vm3695 = vcmp.lt.s32.totalorder %v3647, 300
          %vm3696 = vcmp.lt.s32.totalorder %v3648, 300
          %vm3697 = vcmp.lt.s32.totalorder %v3649, 300
          %vm3698 = vcmp.lt.s32.totalorder %v3650, 300
          %vm3699 = vcmp.lt.s32.totalorder %v3651, 300
          %vm3700 = vcmp.lt.s32.totalorder %v3652, 300
          %vm3701 = vcmp.lt.s32.totalorder %v3653, 300
          %vm3702 = vcmp.lt.s32.totalorder %v3654, 300
          %vm3703 = vcmp.lt.s32.totalorder %v3655, 300
          %vm3704 = vcmp.lt.s32.totalorder %v3656, 300
          %vm3705 = vcmp.lt.s32.totalorder %v3657, 300
          %vm3706 = vcmp.lt.s32.totalorder %v3658, 300
          %vm3707 = vcmp.lt.s32.totalorder %v3659, 300
          %vm3708 = vcmp.lt.s32.totalorder %v3660, 300
          %vm3709 = vcmp.lt.s32.totalorder %v3661, 300
          %v3710 = vsel %vm3662, 1, 0
          %v3711 = vsel %vm3663, 1, 0
          %v3712 = vsel %vm3664, 1, 0
          %v3713 = vsel %vm3665, 1, 0
          %v3714 = vsel %vm3666, 1, 0
          %v3715 = vsel %vm3667, 1, 0
          %v3716 = vsel %vm3668, 1, 0
          %v3717 = vsel %vm3669, 1, 0
          %v3718 = vsel %vm3670, 1, 0
          %v3719 = vsel %vm3671, 1, 0
          %v3720 = vsel %vm3672, 1, 0
          %v3721 = vsel %vm3673, 1, 0
          %v3722 = vsel %vm3674, 1, 0
          %v3723 = vsel %vm3675, 1, 0
          %v3724 = vsel %vm3676, 1, 0
          %v3725 = vsel %vm3677, 1, 0
          %v3726 = vsel %vm3678, 1, 0
          %v3727 = vsel %vm3679, 1, 0
          %v3728 = vsel %vm3680, 1, 0
          %v3729 = vsel %vm3681, 1, 0
          %v3730 = vsel %vm3682, 1, 0
          %v3731 = vsel %vm3683, 1, 0
          %v3732 = vsel %vm3684, 1, 0
          %v3733 = vsel %vm3685, 1, 0
          %v3734 = vsel %vm3686, 1, 0
          %v3735 = vsel %vm3687, 1, 0
          %v3736 = vsel %vm3688, 1, 0
          %v3737 = vsel %vm3689, 1, 0
          %v3738 = vsel %vm3690, 1, 0
          %v3739 = vsel %vm3691, 1, 0
          %v3740 = vsel %vm3692, 1, 0
          %v3741 = vsel %vm3693, 1, 0
          %v3742 = vsel %vm3694, 1, 0
          %v3743 = vsel %vm3695, 1, 0
          %v3744 = vsel %vm3696, 1, 0
          %v3745 = vsel %vm3697, 1, 0
          %v3746 = vsel %vm3698, 1, 0
          %v3747 = vsel %vm3699, 1, 0
          %v3748 = vsel %vm3700, 1, 0
          %v3749 = vsel %vm3701, 1, 0
          %v3750 = vsel %vm3702, 1, 0
          %v3751 = vsel %vm3703, 1, 0
          %v3752 = vsel %vm3704, 1, 0
          %v3753 = vsel %vm3705, 1, 0
          %v3754 = vsel %vm3706, 1, 0
          %v3755 = vsel %vm3707, 1, 0
          %v3756 = vsel %vm3708, 1, 0
          %v3757 = vsel %vm3709, 1, 0
          %vm3758 = vcmp.eq.s32.totalorder %v3710, 1
          %vm3759 = vcmp.eq.s32.totalorder %v3711, 1
          %vm3760 = vcmp.eq.s32.totalorder %v3712, 1
          %vm3761 = vcmp.eq.s32.totalorder %v3713, 1
          %vm3762 = vcmp.eq.s32.totalorder %v3714, 1
          %vm3763 = vcmp.eq.s32.totalorder %v3715, 1
          %vm3764 = vcmp.eq.s32.totalorder %v3716, 1
          %vm3765 = vcmp.eq.s32.totalorder %v3717, 1
          %vm3766 = vcmp.eq.s32.totalorder %v3718, 1
          %vm3767 = vcmp.eq.s32.totalorder %v3719, 1
          %vm3768 = vcmp.eq.s32.totalorder %v3720, 1
          %vm3769 = vcmp.eq.s32.totalorder %v3721, 1
          %vm3770 = vcmp.eq.s32.totalorder %v3722, 1
          %vm3771 = vcmp.eq.s32.totalorder %v3723, 1
          %vm3772 = vcmp.eq.s32.totalorder %v3724, 1
          %vm3773 = vcmp.eq.s32.totalorder %v3725, 1
          %vm3774 = vcmp.eq.s32.totalorder %v3726, 1
          %vm3775 = vcmp.eq.s32.totalorder %v3727, 1
          %vm3776 = vcmp.eq.s32.totalorder %v3728, 1
          %vm3777 = vcmp.eq.s32.totalorder %v3729, 1
          %vm3778 = vcmp.eq.s32.totalorder %v3730, 1
          %vm3779 = vcmp.eq.s32.totalorder %v3731, 1
          %vm3780 = vcmp.eq.s32.totalorder %v3732, 1
          %vm3781 = vcmp.eq.s32.totalorder %v3733, 1
          %vm3782 = vcmp.eq.s32.totalorder %v3734, 1
          %vm3783 = vcmp.eq.s32.totalorder %v3735, 1
          %vm3784 = vcmp.eq.s32.totalorder %v3736, 1
          %vm3785 = vcmp.eq.s32.totalorder %v3737, 1
          %vm3786 = vcmp.eq.s32.totalorder %v3738, 1
          %vm3787 = vcmp.eq.s32.totalorder %v3739, 1
          %vm3788 = vcmp.eq.s32.totalorder %v3740, 1
          %vm3789 = vcmp.eq.s32.totalorder %v3741, 1
          %vm3790 = vcmp.eq.s32.totalorder %v3742, 1
          %vm3791 = vcmp.eq.s32.totalorder %v3743, 1
          %vm3792 = vcmp.eq.s32.totalorder %v3744, 1
          %vm3793 = vcmp.eq.s32.totalorder %v3745, 1
          %vm3794 = vcmp.eq.s32.totalorder %v3746, 1
          %vm3795 = vcmp.eq.s32.totalorder %v3747, 1
          %vm3796 = vcmp.eq.s32.totalorder %v3748, 1
          %vm3797 = vcmp.eq.s32.totalorder %v3749, 1
          %vm3798 = vcmp.eq.s32.totalorder %v3750, 1
          %vm3799 = vcmp.eq.s32.totalorder %v3751, 1
          %vm3800 = vcmp.eq.s32.totalorder %v3752, 1
          %vm3801 = vcmp.eq.s32.totalorder %v3753, 1
          %vm3802 = vcmp.eq.s32.totalorder %v3754, 1
          %vm3803 = vcmp.eq.s32.totalorder %v3755, 1
          %vm3804 = vcmp.eq.s32.totalorder %v3756, 1
          %vm3805 = vcmp.eq.s32.totalorder %v3757, 1
          %v3806 = vsel %vm3758, %v3372, 0.0
          %v3807 = vsel %vm3759, %v3374, 0.0
          %v3808 = vsel %vm3760, %v3376, 0.0
          %v3809 = vsel %vm3761, %v3378, 0.0
          %v3810 = vsel %vm3762, %v3380, 0.0
          %v3811 = vsel %vm3763, %v3382, 0.0
          %v3812 = vsel %vm3764, %v3384, 0.0
          %v3813 = vsel %vm3765, %v3386, 0.0
          %v3814 = vsel %vm3766, %v3388, 0.0
          %v3815 = vsel %vm3767, %v3390, 0.0
          %v3816 = vsel %vm3768, %v3392, 0.0
          %v3817 = vsel %vm3769, %v3394, 0.0
          %v3818 = vsel %vm3770, %v3396, 0.0
          %v3819 = vsel %vm3771, %v3398, 0.0
          %v3820 = vsel %vm3772, %v3400, 0.0
          %v3821 = vsel %vm3773, %v3402, 0.0
          %v3822 = vsel %vm3774, %v3404, 0.0
          %v3823 = vsel %vm3775, %v3406, 0.0
          %v3824 = vsel %vm3776, %v3408, 0.0
          %v3825 = vsel %vm3777, %v3410, 0.0
          %v3826 = vsel %vm3778, %v3412, 0.0
          %v3827 = vsel %vm3779, %v3414, 0.0
          %v3828 = vsel %vm3780, %v3416, 0.0
          %v3829 = vsel %vm3781, %v3418, 0.0
          %v3830 = vsel %vm3782, %v3420, 0.0
          %v3831 = vsel %vm3783, %v3422, 0.0
          %v3832 = vsel %vm3784, %v3424, 0.0
          %v3833 = vsel %vm3785, %v3426, 0.0
          %v3834 = vsel %vm3786, %v3428, 0.0
          %v3835 = vsel %vm3787, %v3430, 0.0
          %v3836 = vsel %vm3788, %v3432, 0.0
          %v3837 = vsel %vm3789, %v3434, 0.0
          %v3838 = vsel %vm3790, %v3436, 0.0
          %v3839 = vsel %vm3791, %v3438, 0.0
          %v3840 = vsel %vm3792, %v3440, 0.0
          %v3841 = vsel %vm3793, %v3442, 0.0
          %v3842 = vsel %vm3794, %v3444, 0.0
          %v3843 = vsel %vm3795, %v3446, 0.0
          %v3844 = vsel %vm3796, %v3448, 0.0
          %v3845 = vsel %vm3797, %v3450, 0.0
          %v3846 = vsel %vm3798, %v3452, 0.0
          %v3847 = vsel %vm3799, %v3454, 0.0
          %v3848 = vsel %vm3800, %v3456, 0.0
          %v3849 = vsel %vm3801, %v3458, 0.0
          %v3850 = vsel %vm3802, %v3460, 0.0
          %v3851 = vsel %vm3803, %v3462, 0.0
          %v3852 = vsel %vm3804, %v3464, 0.0
          %v3853 = vsel %vm3805, %v3466, 0.0
          %v3854 = vld [vmem:[#allocation4] sm:$0x1]
          %v3855 = vadd.f32 %v3806, %v3807
          %v3856 = vadd.f32 %v3855, %v3808
          %v3857 = vadd.f32 %v3856, %v3809
          %v3858 = vadd.f32 %v3857, %v3810
          %v3859 = vadd.f32 %v3858, %v3811
          %v3860 = vadd.f32 %v3859, %v3812
          %v3861 = vadd.f32 %v3860, %v3813
          %v3862 = vadd.f32 %v3861, %v3814
          %v3863 = vadd.f32 %v3862, %v3815
          %v3864 = vadd.f32 %v3863, %v3816
          %v3865 = vadd.f32 %v3864, %v3817
          %v3866 = vadd.f32 %v3865, %v3818
          %v3867 = vadd.f32 %v3866, %v3819
          %v3868 = vadd.f32 %v3867, %v3820
          %v3869 = vadd.f32 %v3868, %v3821
          %v3870 = vadd.f32 %v3869, %v3822
          %v3871 = vadd.f32 %v3870, %v3823
          %v3872 = vadd.f32 %v3871, %v3824
          %v3873 = vadd.f32 %v3872, %v3825
          %v3874 = vadd.f32 %v3873, %v3826
          %v3875 = vadd.f32 %v3874, %v3827
          %v3876 = vadd.f32 %v3875, %v3828
          %v3877 = vadd.f32 %v3876, %v3829
          %v3878 = vadd.f32 %v3877, %v3830
          %v3879 = vadd.f32 %v3878, %v3831
          %v3880 = vadd.f32 %v3879, %v3832
          %v3881 = vadd.f32 %v3880, %v3833
          %v3882 = vadd.f32 %v3881, %v3834
          %v3883 = vadd.f32 %v3882, %v3835
          %v3884 = vadd.f32 %v3883, %v3836
          %v3885 = vadd.f32 %v3884, %v3837
          %v3886 = vadd.f32 %v3885, %v3838
          %v3887 = vadd.f32 %v3886, %v3839
          %v3888 = vadd.f32 %v3887, %v3840
          %v3889 = vadd.f32 %v3888, %v3841
          %v3890 = vadd.f32 %v3889, %v3842
          %v3891 = vadd.f32 %v3890, %v3843
          %v3892 = vadd.f32 %v3891, %v3844
          %v3893 = vadd.f32 %v3892, %v3845
          %v3894 = vadd.f32 %v3893, %v3846
          %v3895 = vadd.f32 %v3894, %v3847
          %v3896 = vadd.f32 %v3895, %v3848
          %v3897 = vadd.f32 %v3896, %v3849
          %v3898 = vadd.f32 %v3897, %v3850
          %v3899 = vadd.f32 %v3898, %v3851
          %v3900 = vadd.f32 %v3899, %v3852
          %v3901 = vadd.f32 %v3900, %v3853
          %v3902 = vrot.slane %v3901, 4
          %v3903 = vadd.f32 %v3901, %v3902
          %v3904 = vrot.slane %v3903, 2
          %v3905 = vadd.f32 %v3903, %v3904
          %v3906 = vrot.slane %v3905, 1
          %v3907 = vadd.f32 %v3905, %v3906
          %v3908 = vadd.f32 %v3854, %v3907
          %3909 = vst [vmem:[#allocation4] sm:$0x1] %v3908
        $region96: #{tpu_custom_call.1} parent=51 // pred_fallthru
          _
        // Predicated region
        $region97: #{tpu_custom_call.1} parent=51 // pred_check
          _
        $region98: #{tpu_custom_call.1} parent=51 // pred_check_branch
          %3911 = sbr.rel (%p488) target = $region100
        $region99: #{tpu_custom_call.1} parent=51 // pred_region
          %v3912 = vld [vmem:[#allocation4] sm:$0x1]
          %v3913 = vmul.f32 %v3912, 0.0033333334
          %v3914 = vxor.u32 %v3913, 2147483648
          %v3915 = vmul.f32 %v3914, 1.442695
          %v3916 = vpow.pop %v3915
          %v3917 = vadd.f32 %v3916, 1.0
          %v3918 = vrcp.pop %v3917
          %v3919 = vmul.f32 1.0, %v3918
          %v3920 = vld [vmem:[#allocation16] sm:$0xf]
          %v3921 = vld [vmem:[#allocation16 + $0x4] sm:$0xf]
          %v3922 = vld [vmem:[#allocation16 + $0x8] sm:$0xf]
          %v3923 = vld [vmem:[#allocation16 + $0xc] sm:$0xf]
          %v3924 = vld [vmem:[#allocation16 + $0x10] sm:$0xf]
          %v3925 = vld [vmem:[#allocation16 + $0x14] sm:$0xf]
          %v3926 = vld [vmem:[#allocation16 + $0x18] sm:$0xf]
          %v3927 = vld [vmem:[#allocation16 + $0x1c] sm:$0xf]
          %v3928 = vld [vmem:[#allocation16 + $0x20] sm:$0xf]
          %v3929 = vld [vmem:[#allocation16 + $0x24] sm:$0xf]
          %v3930 = vld [vmem:[#allocation16 + $0x28] sm:$0xf]
          %v3931 = vld [vmem:[#allocation16 + $0x2c] sm:$0xf]
          %v3932 = vld [vmem:[#allocation16 + $0x30] sm:$0xf]
          %v3933 = vld [vmem:[#allocation16 + $0x34] sm:$0xf]
          %v3934 = vld [vmem:[#allocation16 + $0x38] sm:$0xf]
          %v3935 = vld [vmem:[#allocation16 + $0x3c] sm:$0xf]
          %v3936 = vunpack.c.l.bf16 %v3920
          %v3937 = vunpack.c.l.bf16 %v3921
          %v3938 = vunpack.c.l.bf16 %v3922
          %v3939 = vunpack.c.l.bf16 %v3923
          %v3940 = vunpack.c.l.bf16 %v3924
          %v3941 = vunpack.c.l.bf16 %v3925
          %v3942 = vunpack.c.l.bf16 %v3926
          %v3943 = vunpack.c.l.bf16 %v3927
          %v3944 = vunpack.c.l.bf16 %v3928
          %v3945 = vunpack.c.l.bf16 %v3929
          %v3946 = vunpack.c.l.bf16 %v3930
          %v3947 = vunpack.c.l.bf16 %v3931
          %v3948 = vunpack.c.l.bf16 %v3932
          %v3949 = vunpack.c.l.bf16 %v3933
          %v3950 = vunpack.c.l.bf16 %v3934
          %v3951 = vunpack.c.l.bf16 %v3935
          %v3953 = vlaneseq
          %v3954 = vshrl.u32 %v3953, 7
          %v3955 = vsub.s32 0, %v3954
          %v3956 = vrot.slane %v3919, %v3955
          %v3958 = vmul.f32 %v3936, %v3956
          %v3959 = vmul.f32 %v3937, %v3956
          %v3960 = vmul.f32 %v3938, %v3956
          %v3961 = vmul.f32 %v3939, %v3956
          %v3962 = vmul.f32 %v3940, %v3956
          %v3963 = vmul.f32 %v3941, %v3956
          %v3964 = vmul.f32 %v3942, %v3956
          %v3965 = vmul.f32 %v3943, %v3956
          %v3966 = vmul.f32 %v3944, %v3956
          %v3967 = vmul.f32 %v3945, %v3956
          %v3968 = vmul.f32 %v3946, %v3956
          %v3969 = vmul.f32 %v3947, %v3956
          %v3970 = vmul.f32 %v3948, %v3956
          %v3971 = vmul.f32 %v3949, %v3956
          %v3972 = vmul.f32 %v3950, %v3956
          %v3973 = vmul.f32 %v3951, %v3956
          %3974 = vadd.xlane.f32.xlu0 %v3958
          %v3975 = vpop.xlane.xlu0 %3974
          %3976 = vadd.xlane.f32.xlu0 %v3959
          %v3977 = vpop.xlane.xlu0 %3976
          %3978 = vadd.xlane.f32.xlu0 %v3960
          %v3979 = vpop.xlane.xlu0 %3978
          %3980 = vadd.xlane.f32.xlu0 %v3961
          %v3981 = vpop.xlane.xlu0 %3980
          %3982 = vadd.xlane.f32.xlu0 %v3962
          %v3983 = vpop.xlane.xlu0 %3982
          %3984 = vadd.xlane.f32.xlu0 %v3963
          %v3985 = vpop.xlane.xlu0 %3984
          %3986 = vadd.xlane.f32.xlu0 %v3964
          %v3987 = vpop.xlane.xlu0 %3986
          %3988 = vadd.xlane.f32.xlu0 %v3965
          %v3989 = vpop.xlane.xlu0 %3988
          %3990 = vadd.xlane.f32.xlu0 %v3966
          %v3991 = vpop.xlane.xlu0 %3990
          %3992 = vadd.xlane.f32.xlu0 %v3967
          %v3993 = vpop.xlane.xlu0 %3992
          %3994 = vadd.xlane.f32.xlu0 %v3968
          %v3995 = vpop.xlane.xlu0 %3994
          %3996 = vadd.xlane.f32.xlu0 %v3969
          %v3997 = vpop.xlane.xlu0 %3996
          %3998 = vadd.xlane.f32.xlu0 %v3970
          %v3999 = vpop.xlane.xlu0 %3998
          %4000 = vadd.xlane.f32.xlu0 %v3971
          %v4001 = vpop.xlane.xlu0 %4000
          %4002 = vadd.xlane.f32.xlu0 %v3972
          %v4003 = vpop.xlane.xlu0 %4002
          %4004 = vadd.xlane.f32.xlu0 %v3973
          %v4005 = vpop.xlane.xlu0 %4004
          %v4006 = vlaneseq
          %v4007 = vshrl.u32 %v4006, 7
          %v4008 = vadd.s32 %v4007, 8
          %v4009 = vadd.s32 %v4007, 16
          %v4010 = vadd.s32 %v4007, 24
          %v4011 = vadd.s32 %v4007, 32
          %v4012 = vadd.s32 %v4007, 40
          %v4013 = vadd.s32 %v4007, 48
          %v4014 = vadd.s32 %v4007, 56
          %v4015 = vadd.s32 %v4007, 64
          %v4016 = vadd.s32 %v4007, 72
          %v4017 = vadd.s32 %v4007, 80
          %v4018 = vadd.s32 %v4007, 88
          %v4019 = vadd.s32 %v4007, 96
          %v4020 = vadd.s32 %v4007, 104
          %v4021 = vadd.s32 %v4007, 112
          %v4022 = vadd.s32 %v4007, 120
          %v4023 = vadd.s32 %v4007, 128
          %v4024 = vadd.s32 %v4007, 136
          %v4025 = vadd.s32 %v4007, 144
          %v4026 = vadd.s32 %v4007, 152
          %v4027 = vadd.s32 %v4007, 160
          %v4028 = vadd.s32 %v4007, 168
          %v4029 = vadd.s32 %v4007, 176
          %v4030 = vadd.s32 %v4007, 184
          %v4031 = vadd.s32 %v4007, 192
          %v4032 = vadd.s32 %v4007, 200
          %v4033 = vadd.s32 %v4007, 208
          %v4034 = vadd.s32 %v4007, 216
          %v4035 = vadd.s32 %v4007, 224
          %v4036 = vadd.s32 %v4007, 232
          %v4037 = vadd.s32 %v4007, 240
          %v4038 = vadd.s32 %v4007, 248
          %v4039 = vlaneseq
          %v4040 = vand.u32 %v4039, 127
          %vm4041 = vcmp.lt.s32.totalorder %v4007, 128
          %vm4042 = vcmp.lt.s32.totalorder %v4008, 128
          %vm4043 = vcmp.lt.s32.totalorder %v4009, 128
          %vm4044 = vcmp.lt.s32.totalorder %v4010, 128
          %vm4045 = vcmp.lt.s32.totalorder %v4011, 128
          %vm4046 = vcmp.lt.s32.totalorder %v4012, 128
          %vm4047 = vcmp.lt.s32.totalorder %v4013, 128
          %vm4048 = vcmp.lt.s32.totalorder %v4014, 128
          %vm4049 = vcmp.lt.s32.totalorder %v4015, 128
          %vm4050 = vcmp.lt.s32.totalorder %v4016, 128
          %vm4051 = vcmp.lt.s32.totalorder %v4017, 128
          %vm4052 = vcmp.lt.s32.totalorder %v4018, 128
          %vm4053 = vcmp.lt.s32.totalorder %v4019, 128
          %vm4054 = vcmp.lt.s32.totalorder %v4020, 128
          %vm4055 = vcmp.lt.s32.totalorder %v4021, 128
          %vm4056 = vcmp.lt.s32.totalorder %v4022, 128
          %vm4057 = vcmp.lt.s32.totalorder %v4023, 128
          %vm4058 = vcmp.lt.s32.totalorder %v4024, 128
          %vm4059 = vcmp.lt.s32.totalorder %v4025, 128
          %vm4060 = vcmp.lt.s32.totalorder %v4026, 128
          %vm4061 = vcmp.lt.s32.totalorder %v4027, 128
          %vm4062 = vcmp.lt.s32.totalorder %v4028, 128
          %vm4063 = vcmp.lt.s32.totalorder %v4029, 128
          %vm4064 = vcmp.lt.s32.totalorder %v4030, 128
          %vm4065 = vcmp.lt.s32.totalorder %v4031, 128
          %vm4066 = vcmp.lt.s32.totalorder %v4032, 128
          %vm4067 = vcmp.lt.s32.totalorder %v4033, 128
          %vm4068 = vcmp.lt.s32.totalorder %v4034, 128
          %vm4069 = vcmp.lt.s32.totalorder %v4035, 128
          %vm4070 = vcmp.lt.s32.totalorder %v4036, 128
          %vm4071 = vcmp.lt.s32.totalorder %v4037, 128
          %vm4072 = vcmp.lt.s32.totalorder %v4038, 128
          %v4073 = vsel %vm4041, 0, 1
          %v4074 = vsel %vm4042, 0, 1
          %v4075 = vsel %vm4043, 0, 1
          %v4076 = vsel %vm4044, 0, 1
          %v4077 = vsel %vm4045, 0, 1
          %v4078 = vsel %vm4046, 0, 1
          %v4079 = vsel %vm4047, 0, 1
          %v4080 = vsel %vm4048, 0, 1
          %v4081 = vsel %vm4049, 0, 1
          %v4082 = vsel %vm4050, 0, 1
          %v4083 = vsel %vm4051, 0, 1
          %v4084 = vsel %vm4052, 0, 1
          %v4085 = vsel %vm4053, 0, 1
          %v4086 = vsel %vm4054, 0, 1
          %v4087 = vsel %vm4055, 0, 1
          %v4088 = vsel %vm4056, 0, 1
          %v4089 = vsel %vm4057, 0, 1
          %v4090 = vsel %vm4058, 0, 1
          %v4091 = vsel %vm4059, 0, 1
          %v4092 = vsel %vm4060, 0, 1
          %v4093 = vsel %vm4061, 0, 1
          %v4094 = vsel %vm4062, 0, 1
          %v4095 = vsel %vm4063, 0, 1
          %v4096 = vsel %vm4064, 0, 1
          %v4097 = vsel %vm4065, 0, 1
          %v4098 = vsel %vm4066, 0, 1
          %v4099 = vsel %vm4067, 0, 1
          %v4100 = vsel %vm4068, 0, 1
          %v4101 = vsel %vm4069, 0, 1
          %v4102 = vsel %vm4070, 0, 1
          %v4103 = vsel %vm4071, 0, 1
          %v4104 = vsel %vm4072, 0, 1
          %vm4105 = vcmp.eq.s32.totalorder %v4040, %v4073
          %vm4106 = vcmp.eq.s32.totalorder %v4040, %v4074
          %vm4107 = vcmp.eq.s32.totalorder %v4040, %v4075
          %vm4108 = vcmp.eq.s32.totalorder %v4040, %v4076
          %vm4109 = vcmp.eq.s32.totalorder %v4040, %v4077
          %vm4110 = vcmp.eq.s32.totalorder %v4040, %v4078
          %vm4111 = vcmp.eq.s32.totalorder %v4040, %v4079
          %vm4112 = vcmp.eq.s32.totalorder %v4040, %v4080
          %vm4113 = vcmp.eq.s32.totalorder %v4040, %v4081
          %vm4114 = vcmp.eq.s32.totalorder %v4040, %v4082
          %vm4115 = vcmp.eq.s32.totalorder %v4040, %v4083
          %vm4116 = vcmp.eq.s32.totalorder %v4040, %v4084
          %vm4117 = vcmp.eq.s32.totalorder %v4040, %v4085
          %vm4118 = vcmp.eq.s32.totalorder %v4040, %v4086
          %vm4119 = vcmp.eq.s32.totalorder %v4040, %v4087
          %vm4120 = vcmp.eq.s32.totalorder %v4040, %v4088
          %vm4121 = vcmp.eq.s32.totalorder %v4040, %v4089
          %vm4122 = vcmp.eq.s32.totalorder %v4040, %v4090
          %vm4123 = vcmp.eq.s32.totalorder %v4040, %v4091
          %vm4124 = vcmp.eq.s32.totalorder %v4040, %v4092
          %vm4125 = vcmp.eq.s32.totalorder %v4040, %v4093
          %vm4126 = vcmp.eq.s32.totalorder %v4040, %v4094
          %vm4127 = vcmp.eq.s32.totalorder %v4040, %v4095
          %vm4128 = vcmp.eq.s32.totalorder %v4040, %v4096
          %vm4129 = vcmp.eq.s32.totalorder %v4040, %v4097
          %vm4130 = vcmp.eq.s32.totalorder %v4040, %v4098
          %vm4131 = vcmp.eq.s32.totalorder %v4040, %v4099
          %vm4132 = vcmp.eq.s32.totalorder %v4040, %v4100
          %vm4133 = vcmp.eq.s32.totalorder %v4040, %v4101
          %vm4134 = vcmp.eq.s32.totalorder %v4040, %v4102
          %vm4135 = vcmp.eq.s32.totalorder %v4040, %v4103
          %vm4136 = vcmp.eq.s32.totalorder %v4040, %v4104
          %4138 = vset.pattern.permute.xlu0 0
          %4139 = vperm.xlu0 %4138, %v3975
          %v4140 = vpop.permute.xlu0 %4139
          %4143 = vset.pattern.permute.xlu0 0
          %4144 = vperm.xlu0 %4143, %v3977
          %v4145 = vpop.permute.xlu0 %4144
          %4148 = vset.pattern.permute.xlu0 0
          %4149 = vperm.xlu0 %4148, %v3979
          %v4150 = vpop.permute.xlu0 %4149
          %4153 = vset.pattern.permute.xlu0 0
          %4154 = vperm.xlu0 %4153, %v3981
          %v4155 = vpop.permute.xlu0 %4154
          %4158 = vset.pattern.permute.xlu0 0
          %4159 = vperm.xlu0 %4158, %v3983
          %v4160 = vpop.permute.xlu0 %4159
          %4163 = vset.pattern.permute.xlu0 0
          %4164 = vperm.xlu0 %4163, %v3985
          %v4165 = vpop.permute.xlu0 %4164
          %4168 = vset.pattern.permute.xlu0 0
          %4169 = vperm.xlu0 %4168, %v3987
          %v4170 = vpop.permute.xlu0 %4169
          %4173 = vset.pattern.permute.xlu0 0
          %4174 = vperm.xlu0 %4173, %v3989
          %v4175 = vpop.permute.xlu0 %4174
          %4178 = vset.pattern.permute.xlu0 0
          %4179 = vperm.xlu0 %4178, %v3991
          %v4180 = vpop.permute.xlu0 %4179
          %4183 = vset.pattern.permute.xlu0 0
          %4184 = vperm.xlu0 %4183, %v3993
          %v4185 = vpop.permute.xlu0 %4184
          %4188 = vset.pattern.permute.xlu0 0
          %4189 = vperm.xlu0 %4188, %v3995
          %v4190 = vpop.permute.xlu0 %4189
          %4193 = vset.pattern.permute.xlu0 0
          %4194 = vperm.xlu0 %4193, %v3997
          %v4195 = vpop.permute.xlu0 %4194
          %4198 = vset.pattern.permute.xlu0 0
          %4199 = vperm.xlu0 %4198, %v3999
          %v4200 = vpop.permute.xlu0 %4199
          %4203 = vset.pattern.permute.xlu0 0
          %4204 = vperm.xlu0 %4203, %v4001
          %v4205 = vpop.permute.xlu0 %4204
          %4208 = vset.pattern.permute.xlu0 0
          %4209 = vperm.xlu0 %4208, %v4003
          %v4210 = vpop.permute.xlu0 %4209
          %4213 = vset.pattern.permute.xlu0 0
          %4214 = vperm.xlu0 %4213, %v4005
          %v4215 = vpop.permute.xlu0 %4214
          %v4217 = vsel %vm4105, %v4140, 0.0
          %v4218 = vsel %vm4106, %v4145, 0.0
          %v4219 = vsel %vm4107, %v4150, 0.0
          %v4220 = vsel %vm4108, %v4155, 0.0
          %v4221 = vsel %vm4109, %v4160, 0.0
          %v4222 = vsel %vm4110, %v4165, 0.0
          %v4223 = vsel %vm4111, %v4170, 0.0
          %v4224 = vsel %vm4112, %v4175, 0.0
          %v4225 = vsel %vm4113, %v4180, 0.0
          %v4226 = vsel %vm4114, %v4185, 0.0
          %v4227 = vsel %vm4115, %v4190, 0.0
          %v4228 = vsel %vm4116, %v4195, 0.0
          %v4229 = vsel %vm4117, %v4200, 0.0
          %v4230 = vsel %vm4118, %v4205, 0.0
          %v4231 = vsel %vm4119, %v4210, 0.0
          %v4232 = vsel %vm4120, %v4215, 0.0
          %v4233 = vsel %vm4121, %v4140, 0.0
          %v4234 = vsel %vm4122, %v4145, 0.0
          %v4235 = vsel %vm4123, %v4150, 0.0
          %v4236 = vsel %vm4124, %v4155, 0.0
          %v4237 = vsel %vm4125, %v4160, 0.0
          %v4238 = vsel %vm4126, %v4165, 0.0
          %v4239 = vsel %vm4127, %v4170, 0.0
          %v4240 = vsel %vm4128, %v4175, 0.0
          %v4241 = vsel %vm4129, %v4180, 0.0
          %v4242 = vsel %vm4130, %v4185, 0.0
          %v4243 = vsel %vm4131, %v4190, 0.0
          %v4244 = vsel %vm4132, %v4195, 0.0
          %v4245 = vsel %vm4133, %v4200, 0.0
          %v4246 = vsel %vm4134, %v4205, 0.0
          %v4247 = vsel %vm4135, %v4210, 0.0
          %v4248 = vsel %vm4136, %v4215, 0.0
          %v4249 = vld [vmem:[#allocation3] sm:$0xff]
          %v4250 = vld [vmem:[#allocation3 + $0x8] sm:$0xff]
          %v4251 = vld [vmem:[#allocation3 + $0x10] sm:$0xff]
          %v4252 = vld [vmem:[#allocation3 + $0x18] sm:$0xff]
          %v4253 = vld [vmem:[#allocation3 + $0x20] sm:$0xff]
          %v4254 = vld [vmem:[#allocation3 + $0x28] sm:$0xff]
          %v4255 = vld [vmem:[#allocation3 + $0x30] sm:$0xff]
          %v4256 = vld [vmem:[#allocation3 + $0x38] sm:$0xff]
          %v4257 = vld [vmem:[#allocation3 + $0x40] sm:$0xff]
          %v4258 = vld [vmem:[#allocation3 + $0x48] sm:$0xff]
          %v4259 = vld [vmem:[#allocation3 + $0x50] sm:$0xff]
          %v4260 = vld [vmem:[#allocation3 + $0x58] sm:$0xff]
          %v4261 = vld [vmem:[#allocation3 + $0x60] sm:$0xff]
          %v4262 = vld [vmem:[#allocation3 + $0x68] sm:$0xff]
          %v4263 = vld [vmem:[#allocation3 + $0x70] sm:$0xff]
          %v4264 = vld [vmem:[#allocation3 + $0x78] sm:$0xff]
          %v4265 = vld [vmem:[#allocation3 + $0x80] sm:$0xff]
          %v4266 = vld [vmem:[#allocation3 + $0x88] sm:$0xff]
          %v4267 = vld [vmem:[#allocation3 + $0x90] sm:$0xff]
          %v4268 = vld [vmem:[#allocation3 + $0x98] sm:$0xff]
          %v4269 = vld [vmem:[#allocation3 + $0xa0] sm:$0xff]
          %v4270 = vld [vmem:[#allocation3 + $0xa8] sm:$0xff]
          %v4271 = vld [vmem:[#allocation3 + $0xb0] sm:$0xff]
          %v4272 = vld [vmem:[#allocation3 + $0xb8] sm:$0xff]
          %v4273 = vld [vmem:[#allocation3 + $0xc0] sm:$0xff]
          %v4274 = vld [vmem:[#allocation3 + $0xc8] sm:$0xff]
          %v4275 = vld [vmem:[#allocation3 + $0xd0] sm:$0xff]
          %v4276 = vld [vmem:[#allocation3 + $0xd8] sm:$0xff]
          %v4277 = vld [vmem:[#allocation3 + $0xe0] sm:$0xff]
          %v4278 = vld [vmem:[#allocation3 + $0xe8] sm:$0xff]
          %v4279 = vld [vmem:[#allocation3 + $0xf0] sm:$0xff]
          %v4280 = vld [vmem:[#allocation3 + $0xf8] sm:$0xff]
          %v4281 = vld [vmem:[#allocation3 + $0x100] sm:$0xff]
          %v4282 = vld [vmem:[#allocation3 + $0x108] sm:$0xff]
          %v4283 = vld [vmem:[#allocation3 + $0x110] sm:$0xff]
          %v4284 = vld [vmem:[#allocation3 + $0x118] sm:$0xff]
          %v4285 = vld [vmem:[#allocation3 + $0x120] sm:$0xff]
          %v4286 = vld [vmem:[#allocation3 + $0x128] sm:$0xff]
          %v4287 = vld [vmem:[#allocation3 + $0x130] sm:$0xff]
          %v4288 = vld [vmem:[#allocation3 + $0x138] sm:$0xff]
          %v4289 = vld [vmem:[#allocation3 + $0x140] sm:$0xff]
          %v4290 = vld [vmem:[#allocation3 + $0x148] sm:$0xff]
          %v4291 = vld [vmem:[#allocation3 + $0x150] sm:$0xff]
          %v4292 = vld [vmem:[#allocation3 + $0x158] sm:$0xff]
          %v4293 = vld [vmem:[#allocation3 + $0x160] sm:$0xff]
          %v4294 = vld [vmem:[#allocation3 + $0x168] sm:$0xff]
          %v4295 = vld [vmem:[#allocation3 + $0x170] sm:$0xff]
          %v4296 = vld [vmem:[#allocation3 + $0x178] sm:$0xff]
          %v4297 = vld [vmem:[#allocation3 + $0x180] sm:$0xff]
          %v4298 = vld [vmem:[#allocation3 + $0x188] sm:$0xff]
          %v4299 = vld [vmem:[#allocation3 + $0x190] sm:$0xff]
          %v4300 = vld [vmem:[#allocation3 + $0x198] sm:$0xff]
          %v4301 = vld [vmem:[#allocation3 + $0x1a0] sm:$0xff]
          %v4302 = vld [vmem:[#allocation3 + $0x1a8] sm:$0xff]
          %v4303 = vld [vmem:[#allocation3 + $0x1b0] sm:$0xff]
          %v4304 = vld [vmem:[#allocation3 + $0x1b8] sm:$0xff]
          %v4305 = vld [vmem:[#allocation3 + $0x1c0] sm:$0xff]
          %v4306 = vld [vmem:[#allocation3 + $0x1c8] sm:$0xff]
          %v4307 = vld [vmem:[#allocation3 + $0x1d0] sm:$0xff]
          %v4308 = vld [vmem:[#allocation3 + $0x1d8] sm:$0xff]
          %v4309 = vld [vmem:[#allocation3 + $0x1e0] sm:$0xff]
          %v4310 = vld [vmem:[#allocation3 + $0x1e8] sm:$0xff]
          %v4311 = vld [vmem:[#allocation3 + $0x1f0] sm:$0xff]
          %v4312 = vld [vmem:[#allocation3 + $0x1f8] sm:$0xff]
          %v4313 = vld [vmem:[#allocation3 + $0x200] sm:$0xff]
          %v4314 = vld [vmem:[#allocation3 + $0x208] sm:$0xff]
          %v4315 = vld [vmem:[#allocation3 + $0x210] sm:$0xff]
          %v4316 = vld [vmem:[#allocation3 + $0x218] sm:$0xff]
          %v4317 = vld [vmem:[#allocation3 + $0x220] sm:$0xff]
          %v4318 = vld [vmem:[#allocation3 + $0x228] sm:$0xff]
          %v4319 = vld [vmem:[#allocation3 + $0x230] sm:$0xff]
          %v4320 = vld [vmem:[#allocation3 + $0x238] sm:$0xff]
          %v4321 = vld [vmem:[#allocation3 + $0x240] sm:$0xff]
          %v4322 = vld [vmem:[#allocation3 + $0x248] sm:$0xff]
          %v4323 = vld [vmem:[#allocation3 + $0x250] sm:$0xff]
          %v4324 = vld [vmem:[#allocation3 + $0x258] sm:$0xff]
          %v4325 = vld [vmem:[#allocation3 + $0x260] sm:$0xff]
          %v4326 = vld [vmem:[#allocation3 + $0x268] sm:$0xff]
          %v4327 = vld [vmem:[#allocation3 + $0x270] sm:$0xff]
          %v4328 = vld [vmem:[#allocation3 + $0x278] sm:$0xff]
          %v4329 = vld [vmem:[#allocation3 + $0x280] sm:$0xff]
          %v4330 = vld [vmem:[#allocation3 + $0x288] sm:$0xff]
          %v4331 = vld [vmem:[#allocation3 + $0x290] sm:$0xff]
          %v4332 = vld [vmem:[#allocation3 + $0x298] sm:$0xff]
          %v4333 = vld [vmem:[#allocation3 + $0x2a0] sm:$0xff]
          %v4334 = vld [vmem:[#allocation3 + $0x2a8] sm:$0xff]
          %v4335 = vld [vmem:[#allocation3 + $0x2b0] sm:$0xff]
          %v4336 = vld [vmem:[#allocation3 + $0x2b8] sm:$0xff]
          %v4337 = vld [vmem:[#allocation3 + $0x2c0] sm:$0xff]
          %v4338 = vld [vmem:[#allocation3 + $0x2c8] sm:$0xff]
          %v4339 = vld [vmem:[#allocation3 + $0x2d0] sm:$0xff]
          %v4340 = vld [vmem:[#allocation3 + $0x2d8] sm:$0xff]
          %v4341 = vld [vmem:[#allocation3 + $0x2e0] sm:$0xff]
          %v4342 = vld [vmem:[#allocation3 + $0x2e8] sm:$0xff]
          %v4343 = vld [vmem:[#allocation3 + $0x2f0] sm:$0xff]
          %v4344 = vld [vmem:[#allocation3 + $0x2f8] sm:$0xff]
          %4345 = vmatprep.subr.mxu0 0.0
          %4346 = vmatpush1.msra.mxu0 %v4217
          %4347 = vmatprep.subr.mxu0 0.0
          %4348 = vmatpush1.msra.mxu0 %v4218
          %4349 = vmatprep.subr.mxu0 0.0
          %4350 = vmatpush1.msra.mxu0 %v4219
          %4351 = vmatprep.subr.mxu0 0.0
          %4352 = vmatpush1.msra.mxu0 %v4220
          %4353 = vmatprep.subr.mxu0 0.0
          %4354 = vmatpush1.msra.mxu0 %v4221
          %4355 = vmatprep.subr.mxu0 0.0
          %4356 = vmatpush1.msra.mxu0 %v4222
          %4357 = vmatprep.subr.mxu0 0.0
          %4358 = vmatpush1.msra.mxu0 %v4223
          %4359 = vmatprep.subr.mxu0 0.0
          %4360 = vmatpush1.msra.mxu0 %v4224
          %4361 = vmatprep.subr.mxu0 0.0
          %4362 = vmatpush1.msra.mxu0 %v4225
          %4363 = vmatprep.subr.mxu0 0.0
          %4364 = vmatpush1.msra.mxu0 %v4226
          %4365 = vmatprep.subr.mxu0 0.0
          %4366 = vmatpush1.msra.mxu0 %v4227
          %4367 = vmatprep.subr.mxu0 0.0
          %4368 = vmatpush1.msra.mxu0 %v4228
          %4369 = vmatprep.subr.mxu0 0.0
          %4370 = vmatpush1.msra.mxu0 %v4229
          %4371 = vmatprep.subr.mxu0 0.0
          %4372 = vmatpush1.msra.mxu0 %v4230
          %4373 = vmatprep.subr.mxu0 0.0
          %4374 = vmatpush1.msra.mxu0 %v4231
          %4375 = vmatprep.subr.mxu0 0.0
          %4376 = vmatpush1.msra.mxu0 %v4232
          %4377 = vmatprep.subr.mxu0 0.0
          %4378 = vmatpush1.msra.mxu0 %v4233
          %4379 = vmatprep.subr.mxu0 0.0
          %4380 = vmatpush1.msra.mxu0 %v4234
          %4381 = vmatprep.subr.mxu0 0.0
          %4382 = vmatpush1.msra.mxu0 %v4235
          %4383 = vmatprep.subr.mxu0 0.0
          %4384 = vmatpush1.msra.mxu0 %v4236
          %4385 = vmatprep.subr.mxu0 0.0
          %4386 = vmatpush1.msra.mxu0 %v4237
          %4387 = vmatprep.subr.mxu0 0.0
          %4388 = vmatpush1.msra.mxu0 %v4238
          %4389 = vmatprep.subr.mxu0 0.0
          %4390 = vmatpush1.msra.mxu0 %v4239
          %4391 = vmatprep.subr.mxu0 0.0
          %4392 = vmatpush1.msra.mxu0 %v4240
          %4393 = vmatprep.subr.mxu0 0.0
          %4394 = vmatpush1.msra.mxu0 %v4241
          %4395 = vmatprep.subr.mxu0 0.0
          %4396 = vmatpush1.msra.mxu0 %v4242
          %4397 = vmatprep.subr.mxu0 0.0
          %4398 = vmatpush1.msra.mxu0 %v4243
          %4399 = vmatprep.subr.mxu0 0.0
          %4400 = vmatpush1.msra.mxu0 %v4244
          %4401 = vmatprep.subr.mxu0 0.0
          %4402 = vmatpush1.msra.mxu0 %v4245
          %4403 = vmatprep.subr.mxu0 0.0
          %4404 = vmatpush1.msra.mxu0 %v4246
          %4405 = vmatprep.subr.mxu0 0.0
          %4406 = vmatpush1.msra.mxu0 %v4247
          %4407 = vmatprep.subr.mxu0 0.0
          %4408 = vmatpush1.msra.mxu0 %v4248
          %4409 = vmatprep.mubr.f32.mxu0 %v4250
          %4410 = vmatmul.mubr.f32.gmra.mrb[0].mxu0 %v4249
          %v4411 = vpop.f32.mrb[0].mxu0
          %v4412 = vadd.f32 0.0, %v4411
          %v4413 = vpop.f32.mrb[0].mxu0
          %4414 = vmatprep.mubr.f32.mxu0 %v4252
          %4415 = vmatmul.mubr.f32.gmra.mrb[0].mxu0 %v4251
          %v4416 = vpop.f32.mrb[0].mxu0
          %v4417 = vadd.f32 0.0, %v4416
          %v4418 = vpop.f32.mrb[0].mxu0
          %4419 = vmatprep.mubr.f32.mxu0 %v4254
          %4420 = vmatmul.mubr.f32.gmra.mrb[0].mxu0 %v4253
          %v4421 = vpop.f32.mrb[0].mxu0
          %v4422 = vadd.f32 0.0, %v4421
          %v4423 = vpop.f32.mrb[0].mxu0
          %4424 = vmatprep.mubr.f32.mxu0 %v4256
          %4425 = vmatmul.mubr.f32.gmra.mrb[0].mxu0 %v4255
          %v4426 = vpop.f32.mrb[0].mxu0
          %v4427 = vadd.f32 0.0, %v4426
          %v4428 = vpop.f32.mrb[0].mxu0
          %4429 = vmatprep.mubr.f32.mxu0 %v4258
          %4430 = vmatmul.mubr.f32.gmra.mrb[0].mxu0 %v4257
          %v4431 = vpop.f32.mrb[0].mxu0
          %v4432 = vadd.f32 0.0, %v4431
          %v4433 = vpop.f32.mrb[0].mxu0
          %4434 = vmatprep.mubr.f32.mxu0 %v4260
          %4435 = vmatmul.mubr.f32.gmra.mrb[0].mxu0 %v4259
          %v4436 = vpop.f32.mrb[0].mxu0
          %v4437 = vadd.f32 0.0, %v4436
          %v4438 = vpop.f32.mrb[0].mxu0
          %4439 = vmatprep.mubr.f32.mxu0 %v4262
          %4440 = vmatmul.mubr.f32.gmra.mrb[0].mxu0 %v4261
          %v4441 = vpop.f32.mrb[0].mxu0
          %v4442 = vadd.f32 0.0, %v4441
          %v4443 = vpop.f32.mrb[0].mxu0
          %4444 = vmatprep.mubr.f32.mxu0 %v4264
          %4445 = vmatmul.mubr.f32.gmra.mrb[0].mxu0 %v4263
          %v4446 = vpop.f32.mrb[0].mxu0
          %v4447 = vadd.f32 0.0, %v4446
          %v4448 = vpop.f32.mrb[0].mxu0
          %4449 = vmatprep.mubr.f32.mxu0 %v4266
          %4450 = vmatmul.mubr.f32.gmra.mrb[0].mxu0 %v4265
          %v4451 = vpop.f32.mrb[0].mxu0
          %v4452 = vadd.f32 0.0, %v4451
          %v4453 = vpop.f32.mrb[0].mxu0
          %4454 = vmatprep.mubr.f32.mxu0 %v4268
          %4455 = vmatmul.mubr.f32.gmra.mrb[0].mxu0 %v4267
          %v4456 = vpop.f32.mrb[0].mxu0
          %v4457 = vadd.f32 0.0, %v4456
          %v4458 = vpop.f32.mrb[0].mxu0
          %4459 = vmatprep.mubr.f32.mxu0 %v4270
          %4460 = vmatmul.mubr.f32.gmra.mrb[0].mxu0 %v4269
          %v4461 = vpop.f32.mrb[0].mxu0
          %v4462 = vadd.f32 0.0, %v4461
          %v4463 = vpop.f32.mrb[0].mxu0
          %4464 = vmatprep.mubr.f32.mxu0 %v4272
          %4465 = vmatmul.mubr.f32.gmra.mrb[0].mxu0 %v4271
          %v4466 = vpop.f32.mrb[0].mxu0
          %v4467 = vadd.f32 0.0, %v4466
          %v4468 = vpop.f32.mrb[0].mxu0
          %4469 = vmatprep.mubr.f32.mxu0 %v4274
          %4470 = vmatmul.mubr.f32.gmra.mrb[0].mxu0 %v4273
          %v4471 = vpop.f32.mrb[0].mxu0
          %v4472 = vadd.f32 0.0, %v4471
          %v4473 = vpop.f32.mrb[0].mxu0
          %4474 = vmatprep.mubr.f32.mxu0 %v4276
          %4475 = vmatmul.mubr.f32.gmra.mrb[0].mxu0 %v4275
          %v4476 = vpop.f32.mrb[0].mxu0
          %v4477 = vadd.f32 0.0, %v4476
          %v4478 = vpop.f32.mrb[0].mxu0
          %4479 = vmatprep.mubr.f32.mxu0 %v4278
          %4480 = vmatmul.mubr.f32.gmra.mrb[0].mxu0 %v4277
          %v4481 = vpop.f32.mrb[0].mxu0
          %v4482 = vadd.f32 0.0, %v4481
          %v4483 = vpop.f32.mrb[0].mxu0
          %4484 = vmatprep.mubr.f32.mxu0 %v4280
          %4485 = vmatmul.mubr.f32.gmra.mrb[0].mxu0 %v4279
          %v4486 = vpop.f32.mrb[0].mxu0
          %v4487 = vadd.f32 0.0, %v4486
          %v4488 = vpop.f32.mrb[0].mxu0
          %4489 = vmatprep.mubr.f32.mxu0 %v4282
          %4490 = vmatmul.mubr.f32.gmra.mrb[0].mxu0 %v4281
          %v4491 = vpop.f32.mrb[0].mxu0
          %v4492 = vadd.f32 0.0, %v4491
          %v4493 = vpop.f32.mrb[0].mxu0
          %4494 = vmatprep.mubr.f32.mxu0 %v4284
          %4495 = vmatmul.mubr.f32.gmra.mrb[0].mxu0 %v4283
          %v4496 = vpop.f32.mrb[0].mxu0
          %v4497 = vadd.f32 0.0, %v4496
          %v4498 = vpop.f32.mrb[0].mxu0
          %4499 = vmatprep.mubr.f32.mxu0 %v4286
          %4500 = vmatmul.mubr.f32.gmra.mrb[0].mxu0 %v4285
          %v4501 = vpop.f32.mrb[0].mxu0
          %v4502 = vadd.f32 0.0, %v4501
          %v4503 = vpop.f32.mrb[0].mxu0
          %4504 = vmatprep.mubr.f32.mxu0 %v4288
          %4505 = vmatmul.mubr.f32.gmra.mrb[0].mxu0 %v4287
          %v4506 = vpop.f32.mrb[0].mxu0
          %v4507 = vadd.f32 0.0, %v4506
          %v4508 = vpop.f32.mrb[0].mxu0
          %4509 = vmatprep.mubr.f32.mxu0 %v4290
          %4510 = vmatmul.mubr.f32.gmra.mrb[0].mxu0 %v4289
          %v4511 = vpop.f32.mrb[0].mxu0
          %v4512 = vadd.f32 0.0, %v4511
          %v4513 = vpop.f32.mrb[0].mxu0
          %4514 = vmatprep.mubr.f32.mxu0 %v4292
          %4515 = vmatmul.mubr.f32.gmra.mrb[0].mxu0 %v4291
          %v4516 = vpop.f32.mrb[0].mxu0
          %v4517 = vadd.f32 0.0, %v4516
          %v4518 = vpop.f32.mrb[0].mxu0
          %4519 = vmatprep.mubr.f32.mxu0 %v4294
          %4520 = vmatmul.mubr.f32.gmra.mrb[0].mxu0 %v4293
          %v4521 = vpop.f32.mrb[0].mxu0
          %v4522 = vadd.f32 0.0, %v4521
          %v4523 = vpop.f32.mrb[0].mxu0
          %4524 = vmatprep.mubr.f32.mxu0 %v4296
          %4525 = vmatmul.mubr.f32.gmra.mrb[0].mxu0 %v4295
          %v4526 = vpop.f32.mrb[0].mxu0
          %v4527 = vadd.f32 0.0, %v4526
          %v4528 = vpop.f32.mrb[0].mxu0
          %4529 = vmatprep.mubr.f32.mxu0 %v4298
          %4530 = vmatmul.mubr.f32.gmra.mrb[0].mxu0 %v4297
          %v4531 = vpop.f32.mrb[0].mxu0
          %v4532 = vadd.f32 0.0, %v4531
          %v4533 = vpop.f32.mrb[0].mxu0
          %4534 = vmatprep.mubr.f32.mxu0 %v4300
          %4535 = vmatmul.mubr.f32.gmra.mrb[0].mxu0 %v4299
          %v4536 = vpop.f32.mrb[0].mxu0
          %v4537 = vadd.f32 0.0, %v4536
          %v4538 = vpop.f32.mrb[0].mxu0
          %4539 = vmatprep.mubr.f32.mxu0 %v4302
          %4540 = vmatmul.mubr.f32.gmra.mrb[0].mxu0 %v4301
          %v4541 = vpop.f32.mrb[0].mxu0
          %v4542 = vadd.f32 0.0, %v4541
          %v4543 = vpop.f32.mrb[0].mxu0
          %4544 = vmatprep.mubr.f32.mxu0 %v4304
          %4545 = vmatmul.mubr.f32.gmra.mrb[0].mxu0 %v4303
          %v4546 = vpop.f32.mrb[0].mxu0
          %v4547 = vadd.f32 0.0, %v4546
          %v4548 = vpop.f32.mrb[0].mxu0
          %4549 = vmatprep.mubr.f32.mxu0 %v4306
          %4550 = vmatmul.mubr.f32.gmra.mrb[0].mxu0 %v4305
          %v4551 = vpop.f32.mrb[0].mxu0
          %v4552 = vadd.f32 0.0, %v4551
          %v4553 = vpop.f32.mrb[0].mxu0
          %4554 = vmatprep.mubr.f32.mxu0 %v4308
          %4555 = vmatmul.mubr.f32.gmra.mrb[0].mxu0 %v4307
          %v4556 = vpop.f32.mrb[0].mxu0
          %v4557 = vadd.f32 0.0, %v4556
          %v4558 = vpop.f32.mrb[0].mxu0
          %4559 = vmatprep.mubr.f32.mxu0 %v4310
          %4560 = vmatmul.mubr.f32.gmra.mrb[0].mxu0 %v4309
          %v4561 = vpop.f32.mrb[0].mxu0
          %v4562 = vadd.f32 0.0, %v4561
          %v4563 = vpop.f32.mrb[0].mxu0
          %4564 = vmatprep.mubr.f32.mxu0 %v4312
          %4565 = vmatmul.mubr.f32.gmra.mrb[0].mxu0 %v4311
          %v4566 = vpop.f32.mrb[0].mxu0
          %v4567 = vadd.f32 0.0, %v4566
          %v4568 = vpop.f32.mrb[0].mxu0
          %4569 = vmatprep.mubr.f32.mxu0 %v4314
          %4570 = vmatmul.mubr.f32.gmra.mrb[0].mxu0 %v4313
          %v4571 = vpop.f32.mrb[0].mxu0
          %v4572 = vadd.f32 0.0, %v4571
          %v4573 = vpop.f32.mrb[0].mxu0
          %4574 = vmatprep.mubr.f32.mxu0 %v4316
          %4575 = vmatmul.mubr.f32.gmra.mrb[0].mxu0 %v4315
          %v4576 = vpop.f32.mrb[0].mxu0
          %v4577 = vadd.f32 0.0, %v4576
          %v4578 = vpop.f32.mrb[0].mxu0
          %4579 = vmatprep.mubr.f32.mxu0 %v4318
          %4580 = vmatmul.mubr.f32.gmra.mrb[0].mxu0 %v4317
          %v4581 = vpop.f32.mrb[0].mxu0
          %v4582 = vadd.f32 0.0, %v4581
          %v4583 = vpop.f32.mrb[0].mxu0
          %4584 = vmatprep.mubr.f32.mxu0 %v4320
          %4585 = vmatmul.mubr.f32.gmra.mrb[0].mxu0 %v4319
          %v4586 = vpop.f32.mrb[0].mxu0
          %v4587 = vadd.f32 0.0, %v4586
          %v4588 = vpop.f32.mrb[0].mxu0
          %4589 = vmatprep.mubr.f32.mxu0 %v4322
          %4590 = vmatmul.mubr.f32.gmra.mrb[0].mxu0 %v4321
          %v4591 = vpop.f32.mrb[0].mxu0
          %v4592 = vadd.f32 0.0, %v4591
          %v4593 = vpop.f32.mrb[0].mxu0
          %4594 = vmatprep.mubr.f32.mxu0 %v4324
          %4595 = vmatmul.mubr.f32.gmra.mrb[0].mxu0 %v4323
          %v4596 = vpop.f32.mrb[0].mxu0
          %v4597 = vadd.f32 0.0, %v4596
          %v4598 = vpop.f32.mrb[0].mxu0
          %4599 = vmatprep.mubr.f32.mxu0 %v4326
          %4600 = vmatmul.mubr.f32.gmra.mrb[0].mxu0 %v4325
          %v4601 = vpop.f32.mrb[0].mxu0
          %v4602 = vadd.f32 0.0, %v4601
          %v4603 = vpop.f32.mrb[0].mxu0
          %4604 = vmatprep.mubr.f32.mxu0 %v4328
          %4605 = vmatmul.mubr.f32.gmra.mrb[0].mxu0 %v4327
          %v4606 = vpop.f32.mrb[0].mxu0
          %v4607 = vadd.f32 0.0, %v4606
          %v4608 = vpop.f32.mrb[0].mxu0
          %4609 = vmatprep.mubr.f32.mxu0 %v4330
          %4610 = vmatmul.mubr.f32.gmra.mrb[0].mxu0 %v4329
          %v4611 = vpop.f32.mrb[0].mxu0
          %v4612 = vadd.f32 0.0, %v4611
          %v4613 = vpop.f32.mrb[0].mxu0
          %4614 = vmatprep.mubr.f32.mxu0 %v4332
          %4615 = vmatmul.mubr.f32.gmra.mrb[0].mxu0 %v4331
          %v4616 = vpop.f32.mrb[0].mxu0
          %v4617 = vadd.f32 0.0, %v4616
          %v4618 = vpop.f32.mrb[0].mxu0
          %4619 = vmatprep.mubr.f32.mxu0 %v4334
          %4620 = vmatmul.mubr.f32.gmra.mrb[0].mxu0 %v4333
          %v4621 = vpop.f32.mrb[0].mxu0
          %v4622 = vadd.f32 0.0, %v4621
          %v4623 = vpop.f32.mrb[0].mxu0
          %4624 = vmatprep.mubr.f32.mxu0 %v4336
          %4625 = vmatmul.mubr.f32.gmra.mrb[0].mxu0 %v4335
          %v4626 = vpop.f32.mrb[0].mxu0
          %v4627 = vadd.f32 0.0, %v4626
          %v4628 = vpop.f32.mrb[0].mxu0
          %4629 = vmatprep.mubr.f32.mxu0 %v4338
          %4630 = vmatmul.mubr.f32.gmra.mrb[0].mxu0 %v4337
          %v4631 = vpop.f32.mrb[0].mxu0
          %v4632 = vadd.f32 0.0, %v4631
          %v4633 = vpop.f32.mrb[0].mxu0
          %4634 = vmatprep.mubr.f32.mxu0 %v4340
          %4635 = vmatmul.mubr.f32.gmra.mrb[0].mxu0 %v4339
          %v4636 = vpop.f32.mrb[0].mxu0
          %v4637 = vadd.f32 0.0, %v4636
          %v4638 = vpop.f32.mrb[0].mxu0
          %4639 = vmatprep.mubr.f32.mxu0 %v4342
          %4640 = vmatmul.mubr.f32.gmra.mrb[0].mxu0 %v4341
          %v4641 = vpop.f32.mrb[0].mxu0
          %v4642 = vadd.f32 0.0, %v4641
          %v4643 = vpop.f32.mrb[0].mxu0
          %4644 = vmatprep.mubr.f32.mxu0 %v4344
          %4645 = vmatmul.mubr.f32.gmra.mrb[0].mxu0 %v4343
          %v4646 = vpop.f32.mrb[0].mxu0
          %v4647 = vadd.f32 0.0, %v4646
          %v4648 = vpop.f32.mrb[0].mxu0
          %4649 = vdwg.mxu0
          %4650 = vxpose.xlu0.b32.start [1/16] %v4412, 128
          %4651 = vxpose.xlu0.b32.cont [2/16] %v4417, 128
          %4652 = vxpose.xlu0.b32.cont [3/16] %v4422, 128
          %4653 = vxpose.xlu0.b32.cont [4/16] %v4427, 128
          %4654 = vxpose.xlu0.b32.cont [5/16] %v4432, 128
          %4655 = vxpose.xlu0.b32.cont [6/16] %v4437, 128
          %4656 = vxpose.xlu0.b32.cont [7/16] %v4442, 128
          %4657 = vxpose.xlu0.b32.cont [8/16] %v4447, 128
          %4658 = vxpose.xlu0.b32.cont [9/16] %v4452, 128
          %4659 = vxpose.xlu0.b32.cont [10/16] %v4457, 128
          %4660 = vxpose.xlu0.b32.cont [11/16] %v4462, 128
          %4661 = vxpose.xlu0.b32.cont [12/16] %v4467, 128
          %4662 = vxpose.xlu0.b32.cont [13/16] %v4472, 128
          %4663 = vxpose.xlu0.b32.cont [14/16] %v4477, 128
          %4664 = vxpose.xlu0.b32.cont [15/16] %v4482, 128
          %4665 = vxpose.xlu0.b32.end [16/16] %v4487, 128
          %v4666 = vpop.trf.xlu0
          %v4667 = vpop.trf.xlu0
          %v4668 = vpop.trf.xlu0
          %v4669 = vpop.trf.xlu0
          %v4670 = vpop.trf.xlu0
          %v4671 = vpop.trf.xlu0
          %v4672 = vpop.trf.xlu0
          %v4673 = vpop.trf.xlu0
          %v4674 = vpop.trf.xlu0
          %v4675 = vpop.trf.xlu0
          %v4676 = vpop.trf.xlu0
          %v4677 = vpop.trf.xlu0
          %v4678 = vpop.trf.xlu0
          %v4679 = vpop.trf.xlu0
          %v4680 = vpop.trf.xlu0
          %v4681 = vpop.trf.xlu0
          %4682 = vxpose.xlu0.b32.start [1/16] %v4492, 128
          %4683 = vxpose.xlu0.b32.cont [2/16] %v4497, 128
          %4684 = vxpose.xlu0.b32.cont [3/16] %v4502, 128
          %4685 = vxpose.xlu0.b32.cont [4/16] %v4507, 128
          %4686 = vxpose.xlu0.b32.cont [5/16] %v4512, 128
          %4687 = vxpose.xlu0.b32.cont [6/16] %v4517, 128
          %4688 = vxpose.xlu0.b32.cont [7/16] %v4522, 128
          %4689 = vxpose.xlu0.b32.cont [8/16] %v4527, 128
          %4690 = vxpose.xlu0.b32.cont [9/16] %v4532, 128
          %4691 = vxpose.xlu0.b32.cont [10/16] %v4537, 128
          %4692 = vxpose.xlu0.b32.cont [11/16] %v4542, 128
          %4693 = vxpose.xlu0.b32.cont [12/16] %v4547, 128
          %4694 = vxpose.xlu0.b32.cont [13/16] %v4552, 128
          %4695 = vxpose.xlu0.b32.cont [14/16] %v4557, 128
          %4696 = vxpose.xlu0.b32.cont [15/16] %v4562, 128
          %4697 = vxpose.xlu0.b32.end [16/16] %v4567, 128
          %v4698 = vpop.trf.xlu0
          %v4699 = vpop.trf.xlu0
          %v4700 = vpop.trf.xlu0
          %v4701 = vpop.trf.xlu0
          %v4702 = vpop.trf.xlu0
          %v4703 = vpop.trf.xlu0
          %v4704 = vpop.trf.xlu0
          %v4705 = vpop.trf.xlu0
          %v4706 = vpop.trf.xlu0
          %v4707 = vpop.trf.xlu0
          %v4708 = vpop.trf.xlu0
          %v4709 = vpop.trf.xlu0
          %v4710 = vpop.trf.xlu0
          %v4711 = vpop.trf.xlu0
          %v4712 = vpop.trf.xlu0
          %v4713 = vpop.trf.xlu0
          %4714 = vxpose.xlu0.b32.start [1/16] %v4572, 128
          %4715 = vxpose.xlu0.b32.cont [2/16] %v4577, 128
          %4716 = vxpose.xlu0.b32.cont [3/16] %v4582, 128
          %4717 = vxpose.xlu0.b32.cont [4/16] %v4587, 128
          %4718 = vxpose.xlu0.b32.cont [5/16] %v4592, 128
          %4719 = vxpose.xlu0.b32.cont [6/16] %v4597, 128
          %4720 = vxpose.xlu0.b32.cont [7/16] %v4602, 128
          %4721 = vxpose.xlu0.b32.cont [8/16] %v4607, 128
          %4722 = vxpose.xlu0.b32.cont [9/16] %v4612, 128
          %4723 = vxpose.xlu0.b32.cont [10/16] %v4617, 128
          %4724 = vxpose.xlu0.b32.cont [11/16] %v4622, 128
          %4725 = vxpose.xlu0.b32.cont [12/16] %v4627, 128
          %4726 = vxpose.xlu0.b32.cont [13/16] %v4632, 128
          %4727 = vxpose.xlu0.b32.cont [14/16] %v4637, 128
          %4728 = vxpose.xlu0.b32.cont [15/16] %v4642, 128
          %4729 = vxpose.xlu0.b32.end [16/16] %v4647, 128
          %v4730 = vpop.trf.xlu0
          %v4731 = vpop.trf.xlu0
          %v4732 = vpop.trf.xlu0
          %v4733 = vpop.trf.xlu0
          %v4734 = vpop.trf.xlu0
          %v4735 = vpop.trf.xlu0
          %v4736 = vpop.trf.xlu0
          %v4737 = vpop.trf.xlu0
          %v4738 = vpop.trf.xlu0
          %v4739 = vpop.trf.xlu0
          %v4740 = vpop.trf.xlu0
          %v4741 = vpop.trf.xlu0
          %v4742 = vpop.trf.xlu0
          %v4743 = vpop.trf.xlu0
          %v4744 = vpop.trf.xlu0
          %v4745 = vpop.trf.xlu0
          %s4746 = sld [smem:[#allocation6]]
          %v4747 = vstv %s4746
          %v4748 = vadd.f32 %v4666, %v4747
          %v4749 = vadd.f32 %v4698, %v4747
          %v4750 = vadd.f32 %v4730, %v4747
          %v4754 = vcombine.low %v4748, %v4749
          %v4756 = vunpack.c.l.s4 1983009808
          %v4757 = vunpack.c.0.s8 %v4756
          %v4758 = vlaneseq
          %v4759 = vshrl.u32 %v4758, 7
          %v4760 = vsub.s32 %v4757, %v4759
          %v4761 = vrot.slane %v4754, %v4760
          %v4763 = vunpack.c.l.s4 1983009808
          %v4764 = vunpack.c.0.s8 %v4763
          %v4765 = vlaneseq
          %v4766 = vshrl.u32 %v4765, 7
          %v4767 = vsub.s32 %v4764, %v4766
          %v4768 = vrot.slane %v4750, %v4767
          %v4769 = vcombine.low %v4761, %v4768
          %4771 = vst [vmem:[%s480] sm:$0x3f] %v4769
        $region100: #{tpu_custom_call.1} parent=51 // pred_fallthru
          _
        %s4772 = sand.u32 %s250, 1
        %s4773 = scalar_lea.sflag [#allocation9], %s4772
        %s4774 = sand.u32 %s250, 1
        %s4775 = smul.addr %s4774, 6
        %s4776 = scalar_lea.vmem [#allocation18], %s4775
        // Predicated region
        $region101: #{tpu_custom_call.1} parent=51 // pred_check
          %p4777 = pneg %p260
        $region102: #{tpu_custom_call.1} parent=51 // pred_check_branch
          %4779 = sbr.rel (%p4777) target = $region104
        $region103: #{tpu_custom_call.1} parent=51 // pred_region
          %s4781 = ssub.s32 96, 96
          %4782 = vsyncadd %s4773, %s4781
          %s4783 = smul.addr %s37, 3
          %s4784 = smul.addr %s4783, 32
          %s4785 = scalar_lea.hbm %s8, %s4784
          %s4787 = sshll.u32 %s4776, 4
          %s4788 = int_to_ptr.vmem [resolvable:$true] %s4787
          %4790 = dma.vmem_to_hbm [thread:$0]  %s4788, 96, %s4785, %s4773
        $region104: #{tpu_custom_call.1} parent=51 // pred_fallthru
          _
      $region52: #{tpu_custom_call.1} parent=5 // pred_fallthru
        _
      %p4791 = scmp.le.s32.totalorder 2, %s27
      // Predicated region
      $region105: #{tpu_custom_call.1} parent=5 // pred_check
        %p4792 = pneg %p4791
      $region106: #{tpu_custom_call.1} parent=5 // pred_check_branch
        %4794 = sbr.rel (%p4792) target = $region108
      $region107: #{tpu_custom_call.1} parent=5 // pred_region
        %s4795 = ssub.s32 %s27, 2
        // Predicated region
        $region109: #{tpu_custom_call.1} parent=107 // pred_check
          %p4796 = pneg %p266
        $region110: #{tpu_custom_call.1} parent=107 // pred_check_branch
          %4798 = sbr.rel (%p4796) target = $region112
        $region111: #{tpu_custom_call.1} parent=107 // pred_region
          %s4799 = sand.u32 %s251, 1
          %s4800 = scalar_lea.sflag [#allocation9], %s4799
          %s4801 = sand.u32 %s251, 1
          %s4802 = smul.addr %s4801, 6
          %s4803 = scalar_lea.vmem [#allocation18], %s4802
          %4804 = dma.done %s4800, 96
        $region112: #{tpu_custom_call.1} parent=107 // pred_fallthru
          _
      $region108: #{tpu_custom_call.1} parent=5 // pred_fallthru
        _
    $region6: #{tpu_custom_call.1} parent=1 // loop_footer
      %s31 = sadd.s32 1, %s27
    $region7: #{tpu_custom_call.1} parent=1 // loop_footer_branch
      %26 = sbr.rel target = $region3
    $region8: #{tpu_custom_call.1} parent=1 // loop_exit
      _
    %4805 = vsyncpa [#allocation8], 1
    %s4806 = scalar_lea.sflag [#allocation8], 1
    %4807 = vsyncpa %s4806, 1
    %4808 = vsyncpa [#allocation11], 1
    %s4809 = scalar_lea.sflag [#allocation11], 1
    %4810 = vsyncpa %s4809, 1
    %4811 = vsyncpa [#allocation14], 1
    %4812 = vsyncpa [#allocation17], 1
    %4813 = vsyncpa [#allocation9], 1
    %s4814 = scalar_lea.sflag [#allocation9], 1
    %4815 = vsyncpa %s4814, 1

</llo_original>
